<compile_context>
chip_gen: v7x
topology: tpu7x:2x2x1
jax: 0.10.0
libtpu: 0.0.40
codegen_flags: <defaults>
</compile_context>

<pallas_src>
import jax
import jax.numpy as jnp
from jax import lax
from jax.experimental import pallas as pl
from jax.experimental.pallas import tpu as pltpu


# ----------------------------- shared GRU math --------------------------------


def _gru_step(x, h, wih, whh, bih, bhh):
    """PyTorch GRU(Cell) equations. wih:(Din,3H) whh:(H,3H) biases:(1,3H)."""
    hdim = h.shape[1]
    gi = jnp.dot(x, wih, preferred_element_type=jnp.float32) + bih
    gh = jnp.dot(h, whh, preferred_element_type=jnp.float32) + bhh
    r = jax.nn.sigmoid(gi[:, :hdim] + gh[:, :hdim])
    z = jax.nn.sigmoid(gi[:, hdim:2 * hdim] + gh[:, hdim:2 * hdim])
    n = jnp.tanh(gi[:, 2 * hdim:] + r * gh[:, 2 * hdim:])
    return (1.0 - z) * n + z * h


# ----------------------------- Pallas kernels --------------------------------


def encoder_kernel(x_ref, xlast_ref, len_ref,
                   wih_f_ref, whh_f_ref, bih_f_ref, bhh_f_ref,
                   wih_b_ref, whh_b_ref, bih_b_ref, bhh_b_ref,
                   out_ref):
    """Single invocation. x_ref:(T,B,Dp)  xlast_ref:(B,Dp)  out_ref:(B,2*Hp)."""
    T, B, _ = x_ref.shape
    Hp = whh_f_ref.shape[0]

    lengths = len_ref[...]                        # (B, 1) int32
    wihf = wih_f_ref[...]
    whhf = whh_f_ref[...]
    bihf = bih_f_ref[...]
    bhhf = bhh_f_ref[...]

    # Forward direction: update hidden only while t < length (packed-sequence semantics).
    def fwd_body(t, h):
        h_new = _gru_step(x_ref[t], h, wihf, whhf, bihf, bhhf)
        return jnp.where(t < lengths, h_new, h)

    h0 = jnp.zeros((B, Hp), jnp.float32)
    h_fwd = lax.fori_loop(0, T, fwd_body, h0, unroll=True)

    # Backward direction: the output at position length-1 is a single backward step from a
    # zero hidden state (the reverse RNN has only seen that one timestep there); x_last was
    # gathered once in the wrapper instead of masking T steps in-kernel.
    h_bwd = _gru_step(xlast_ref[...], jnp.zeros((B, Hp), jnp.float32),
                      wih_b_ref[...], whh_b_ref[...], bih_b_ref[...], bhh_b_ref[...])

    out_ref[:, :Hp] = h_fwd                       # lane-aligned direct sub-writes
    out_ref[:, Hp:] = h_bwd


def decoder_rnn_kernel(emb_ref, h0_ref,
                       wih_ref, whh_ref, bih_ref, bhh_ref,
                       hid_ref):
    """Single invocation, teacher forcing. emb_ref:(Ts,B,E)  hid_ref:(Ts,B,Dhp)."""
    Ts = emb_ref.shape[0]
    wih = wih_ref[...]
    whh = whh_ref[...]
    bih = bih_ref[...]
    bhh = bhh_ref[...]

    def body(t, h):
        h_new = _gru_step(emb_ref[t], h, wih, whh, bih, bhh)
        hid_ref[t] = h_new
        return h_new

    lax.fori_loop(0, Ts, body, h0_ref[...], unroll=True)


def projection_kernel(h_ref, w_ref, b_ref, o_ref):
    """One batched, lane-dense vocab projection: (Ts*B, Dhp) x (Dhp, Vp) + (1, Vp)."""
    o_ref[...] = (jnp.dot(h_ref[...], w_ref[...], preferred_element_type=jnp.float32)
                  + b_ref[...])


# ------------------------------ wrappers --------------------------------------


def _full_spec(shape):
    n = len(shape)
    return pl.BlockSpec(shape, lambda i, _n=n: (0,) * _n)


def run_encoder(x_tbd, x_last, lengths_b1, pp):
    T, B, Dp = x_tbd.shape
    Hp = pp["whh_f"].shape[0]
    grid_spec = pltpu.PrefetchScalarGridSpec(
        num_scalar_prefetch=0,
        grid=(1,),
        in_specs=[
            _full_spec((T, B, Dp)),
            _full_spec((B, Dp)),
            _full_spec((B, 1)),
            _full_spec((Dp, 3 * Hp)), _full_spec((Hp, 3 * Hp)),
            _full_spec((1, 3 * Hp)), _full_spec((1, 3 * Hp)),
            _full_spec((Dp, 3 * Hp)), _full_spec((Hp, 3 * Hp)),
            _full_spec((1, 3 * Hp)), _full_spec((1, 3 * Hp)),
        ],
        out_specs=_full_spec((B, 2 * Hp)),
    )
    return pl.pallas_call(
        encoder_kernel,
        out_shape=jax.ShapeDtypeStruct((B, 2 * Hp), jnp.float32),
        grid_spec=grid_spec,
        compiler_params=pltpu.CompilerParams(dimension_semantics=("arbitrary",)),
    )(x_tbd, x_last, lengths_b1,
      pp["wih_f"], pp["whh_f"], pp["bih_f"], pp["bhh_f"],
      pp["wih_b"], pp["whh_b"], pp["bih_b"], pp["bhh_b"])


def run_decoder_rnn(gold_emb_tbe, h0, pp):
    Ts, B, E = gold_emb_tbe.shape
    Dhp = h0.shape[1]
    grid_spec = pltpu.PrefetchScalarGridSpec(
        num_scalar_prefetch=0,
        grid=(1,),
        in_specs=[
            _full_spec((Ts, B, E)),
            _full_spec((B, Dhp)),
            _full_spec((E, 3 * Dhp)), _full_spec((Dhp, 3 * Dhp)),
            _full_spec((1, 3 * Dhp)), _full_spec((1, 3 * Dhp)),
        ],
        out_specs=_full_spec((Ts, B, Dhp)),
    )
    return pl.pallas_call(
        decoder_rnn_kernel,
        out_shape=jax.ShapeDtypeStruct((Ts, B, Dhp), jnp.float32),
        grid_spec=grid_spec,
        compiler_params=pltpu.CompilerParams(dimension_semantics=("arbitrary",)),
    )(gold_emb_tbe, h0, pp["wih_d"], pp["whh_d"], pp["bih_d"], pp["bhh_d"])


def run_projection(h_flat, wout_p, bout_p):
    M, Dhp = h_flat.shape
    Vp = wout_p.shape[1]
    grid_spec = pltpu.PrefetchScalarGridSpec(
        num_scalar_prefetch=0,
        grid=(1,),
        in_specs=[_full_spec((M, Dhp)), _full_spec((Dhp, Vp)), _full_spec((1, Vp))],
        out_specs=_full_spec((M, Vp)),
    )
    # TODO(synk): for real vocab sizes, tile wout over V ('parallel' grid) and set
    # vmem_limit_bytes explicitly (v7x has only 64 MiB VMEM).
    return pl.pallas_call(
        projection_kernel,
        out_shape=jax.ShapeDtypeStruct((M, Vp), jnp.float32),
        grid_spec=grid_spec,
        compiler_params=pltpu.CompilerParams(dimension_semantics=("arbitrary",)),
    )(h_flat, wout_p, bout_p)


def encoder_decoder_forward(params, pparams, pos, rh, lengths, gold_tokens):
    """Full EncoderDecoder.forward(input_data, gold_output=...) semantics (teacher forcing)."""
    B, T = pos.shape
    H = params["whh_f"].shape[0]
    V = params["wout"].shape[1]
    Din = params["wih_f"].shape[0]
    Din_p = pparams["wih_f"].shape[0]
    Hp = pparams["whh_f"].shape[0]
    Dhp = pparams["whh_d"].shape[0]

    # concat_input: decoder.embedding(pos) || rh.unsqueeze(-1), zero-padded to Din_p
    pos_emb = jnp.take(params["emb"], pos, axis=0)                   # (B, T, E)
    x = jnp.concatenate([pos_emb, rh[..., None]], axis=2).astype(jnp.float32)   # (B, T, Din)
    x = jnp.pad(x, ((0, 0), (0, 0), (0, Din_p - Din)))               # (B, T, Din_p)
    x_tbd = jnp.transpose(x, (1, 0, 2))                              # time-major (T, B, Din_p)

    # gather the last valid timestep once (for the single backward-direction GRU step)
    last_idx = jnp.clip(lengths.astype(jnp.int32), 1, T) - 1
    x_last = x[jnp.arange(B), last_idx]                              # (B, Din_p)

    enc = run_encoder(x_tbd, x_last, lengths.reshape(B, 1).astype(jnp.int32), pparams)

    # repack real hidden halves contiguously and zero-pad to the padded decoder hidden width
    encoded = jnp.concatenate([enc[:, :H], enc[:, Hp:Hp + H]], axis=1)   # (B, 2H)
    h0 = jnp.pad(encoded, ((0, 0), (0, Dhp - 2 * H)))                    # (B, Dhp)

    # teacher_enforcing over max(tree_sequence_length) - 1 steps
    steps = gold_tokens.shape[1] - 1
    gold_emb = jnp.take(params["emb"], gold_tokens[:, :steps], axis=0)   # (B, Ts, E)
    gold_emb_tbe = jnp.transpose(gold_emb, (1, 0, 2)).astype(jnp.float32)

    hid = run_decoder_rnn(gold_emb_tbe, h0, pparams)                     # (Ts, B, Dhp)
    logits_pad = run_projection(hid.reshape(steps * B, Dhp),
                                pparams["wout"], pparams["bout"])        # (Ts*B, Vp)
    logits = logits_pad[:, :V].reshape(steps, B, V)
    # torch.stack(output_logits_lst, dim=2) -> [B, V, Tsteps]
    return jnp.transpose(logits, (1, 2, 0))


# ------------------------------ reference (plain JAX) -------------------------


def reference_forward(params, pos, rh, lengths, gold_tokens):
    B, T = pos.shape
    H = params["whh_f"].shape[0]
    pos_emb = jnp.take(params["emb"], pos, axis=0)
    x = jnp.concatenate([pos_emb, rh[..., None]], axis=2).astype(jnp.float32)  # (B,T,Din)

    h_f = jnp.zeros((B, H), jnp.float32)
    for t in range(T):
        h_new = _gru_step(x[:, t], h_f, params["wih_f"], params["whh_f"],
                          params["bih_f"], params["bhh_f"])
        h_f = jnp.where((t < lengths)[:, None], h_new, h_f)
    x_last = x[jnp.arange(B), lengths - 1]
    h_b = _gru_step(x_last, jnp.zeros((B, H), jnp.float32),
                    params["wih_b"], params["whh_b"], params["bih_b"], params["bhh_b"])
    encoded = jnp.concatenate([h_f, h_b], axis=1)

    steps = gold_tokens.shape[1] - 1
    hidden = encoded
    logits = []
    for t in range(steps):
        e_t = jnp.take(params["emb"], gold_tokens[:, t], axis=0)
        hidden = _gru_step(e_t, hidden, params["wih_d"], params["whh_d"],
                           params["bih_d"], params["bhh_d"])
        logits.append(hidden @ params["wout"] + params["bout"])
    return jnp.stack(logits, axis=2)


# ------------------------------ params & padding -------------------------------


def init_params(key, *, E, H, V, Din):
    Dh = 2 * H
    ks = jax.random.split(key, 16)
    u = lambda k, shape, s: jax.random.uniform(k, shape, jnp.float32, -s, s)
    se, sd = 1.0 / jnp.sqrt(H), 1.0 / jnp.sqrt(Dh)
    return {
        "emb":   jax.random.normal(ks[0], (V, E), jnp.float32),
        # encoder bidirectional GRU (stored transposed: x @ W)
        "wih_f": u(ks[1], (Din, 3 * H), se), "whh_f": u(ks[2], (H, 3 * H), se),
        "bih_f": u(ks[3], (1, 3 * H), se),   "bhh_f": u(ks[4], (1, 3 * H), se),
        "wih_b": u(ks[5], (Din, 3 * H), se), "whh_b": u(ks[6], (H, 3 * H), se),
        "bih_b": u(ks[7], (1, 3 * H), se),   "bhh_b": u(ks[8], (1, 3 * H), se),
        # decoder GRUCell (hidden = 2H) + output Linear
        "wih_d": u(ks[9], (E, 3 * Dh), sd),  "whh_d": u(ks[10], (Dh, 3 * Dh), sd),
        "bih_d": u(ks[11], (1, 3 * Dh), sd), "bhh_d": u(ks[12], (1, 3 * Dh), sd),
        "wout":  u(ks[13], (Dh, V), sd),     "bout": u(ks[14], (1, V), sd),
    }


def _pad_gate_cols(w, h, hp):
    """(rows, 3*h) -> (rows, 3*hp): zero-pad each [r|z|n] gate block to lane width hp."""
    rows = w.shape[0]
    w3 = w.reshape(rows, 3, h)
    return jnp.pad(w3, ((0, 0), (0, 0), (0, hp - h))).reshape(rows, 3 * hp)


def pad_params_for_tpu(p, *, H, Hp, Dh, Dhp, Din, Din_p, V, Vp):
    """Zero-pad weights so gate boundaries / matmul N dims / output stores are lane-aligned.
    Padded hidden entries stay exactly 0 through the GRU recurrence, so numerics are unchanged."""
    q = {}
    for d in ("f", "b"):
        wih = _pad_gate_cols(p[f"wih_{d}"], H, Hp)
        q[f"wih_{d}"] = jnp.pad(wih, ((0, Din_p - Din), (0, 0)))        # (Din_p, 3Hp)
        whh = _pad_gate_cols(p[f"whh_{d}"], H, Hp)
        q[f"whh_{d}"] = jnp.pad(whh, ((0, Hp - H), (0, 0)))             # (Hp, 3Hp)
        q[f"bih_{d}"] = _pad_gate_cols(p[f"bih_{d}"], H, Hp)            # (1, 3Hp)
        q[f"bhh_{d}"] = _pad_gate_cols(p[f"bhh_{d}"], H, Hp)
    q["wih_d"] = _pad_gate_cols(p["wih_d"], Dh, Dhp)                    # (E, 3Dhp)
    q["whh_d"] = jnp.pad(_pad_gate_cols(p["whh_d"], Dh, Dhp), ((0, Dhp - Dh), (0, 0)))
    q["bih_d"] = _pad_gate_cols(p["bih_d"], Dh, Dhp)
    q["bhh_d"] = _pad_gate_cols(p["bhh_d"], Dh, Dhp)
    q["wout"] = jnp.pad(p["wout"], ((0, Dhp - Dh), (0, Vp - V)))        # (Dhp, Vp)
    q["bout"] = jnp.pad(p["bout"], ((0, 0), (0, Vp - V)))               # (1, Vp)
    return q


# --------------------------------- main ---------------------------------------


if __name__ == "__main__":
    B, T, H, E, V = 2, 8, 16, 8, 12
    Din = E + 1                      # pos embedding + rh scalar
    Dh = 2 * H                       # decoder hidden
    Tgold = 6

    # lane/sublane-aligned padded widths for the TPU kernels
    Hp, Dhp, Vp, Din_p = 128, 128, 128, 16

    key = jax.random.PRNGKey(0)
    kp, k1, k2, k3 = jax.random.split(key, 4)
    params = init_params(kp, E=E, H=H, V=V, Din=Din)
    pparams = pad_params_for_tpu(params, H=H, Hp=Hp, Dh=Dh, Dhp=Dhp,
                                 Din=Din, Din_p=Din_p, V=V, Vp=Vp)

    pos = jax.random.randint(k1, (B, T), 0, V, dtype=jnp.int32)
    rh = jax.random.uniform(k2, (B, T), jnp.float32)
    lengths = jnp.array([T, 5], dtype=jnp.int32)
    gold_tokens = jax.random.randint(k3, (B, Tgold), 0, V, dtype=jnp.int32)

    out = encoder_decoder_forward(params, pparams, pos, rh, lengths, gold_tokens)
    out = jax.block_until_ready(out)

    ref = reference_forward(params, pos, rh, lengths, gold_tokens)
    assert out.shape == (B, V, Tgold - 1), out.shape
    assert bool(jnp.allclose(out, ref, rtol=1e-4, atol=1e-4)), "mismatch vs reference"

    print("KERNEL_OK")
</pallas_src>

<mosaic_0001>
module attributes {stable_mosaic.version = 11 : i64} {
  func.func @encoder_kernel(%arg0: i32, %arg1: memref<8x2x16xf32, #tpu.memory_space<vmem>>, %arg2: memref<2x16xf32, #tpu.memory_space<vmem>>, %arg3: memref<2x1xi32, #tpu.memory_space<vmem>>, %arg4: memref<16x384xf32, #tpu.memory_space<vmem>>, %arg5: memref<128x384xf32, #tpu.memory_space<vmem>>, %arg6: memref<1x384xf32, #tpu.memory_space<vmem>>, %arg7: memref<1x384xf32, #tpu.memory_space<vmem>>, %arg8: memref<16x384xf32, #tpu.memory_space<vmem>>, %arg9: memref<128x384xf32, #tpu.memory_space<vmem>>, %arg10: memref<1x384xf32, #tpu.memory_space<vmem>>, %arg11: memref<1x384xf32, #tpu.memory_space<vmem>>, %arg12: memref<2x256xf32, #tpu.memory_space<vmem>>) attributes {dimension_semantics = [#tpu.dimension_semantics<arbitrary>], iteration_bounds = array<i64: 1>, scalar_prefetch = 0 : i64, scratch_operands = 0 : i64, tpu.core_type = #tpu.core_type<tc>, window_params = [{pipeline_mode = #tpu.pipeline_mode<synchronous>, transform_indices = @transform_0, window_bounds = array<i64: 8, 2, 16>}, {pipeline_mode = #tpu.pipeline_mode<synchronous>, transform_indices = @transform_1, window_bounds = array<i64: 2, 16>}, {pipeline_mode = #tpu.pipeline_mode<synchronous>, transform_indices = @transform_2, window_bounds = array<i64: 2, 1>}, {pipeline_mode = #tpu.pipeline_mode<synchronous>, transform_indices = @transform_3, window_bounds = array<i64: 16, 384>}, {pipeline_mode = #tpu.pipeline_mode<synchronous>, transform_indices = @transform_4, window_bounds = array<i64: 128, 384>}, {pipeline_mode = #tpu.pipeline_mode<synchronous>, transform_indices = @transform_5, window_bounds = array<i64: 1, 384>}, {pipeline_mode = #tpu.pipeline_mode<synchronous>, transform_indices = @transform_6, window_bounds = array<i64: 1, 384>}, {pipeline_mode = #tpu.pipeline_mode<synchronous>, transform_indices = @transform_7, window_bounds = array<i64: 16, 384>}, {pipeline_mode = #tpu.pipeline_mode<synchronous>, transform_indices = @transform_8, window_bounds = array<i64: 128, 384>}, {pipeline_mode = #tpu.pipeline_mode<synchronous>, transform_indices = @transform_9, window_bounds = array<i64: 1, 384>}, {pipeline_mode = #tpu.pipeline_mode<synchronous>, transform_indices = @transform_10, window_bounds = array<i64: 1, 384>}, {pipeline_mode = #tpu.pipeline_mode<synchronous>, transform_indices = @transform_11, window_bounds = array<i64: 2, 256>}]} {
    %c0 = arith.constant 0 : index
    %c0_0 = arith.constant 0 : index
    %0 = vector.load %arg3[%c0, %c0_0] : memref<2x1xi32, #tpu.memory_space<vmem>>, vector<2x1xi32>
    %c0_1 = arith.constant 0 : index
    %c0_2 = arith.constant 0 : index
    %1 = vector.load %arg4[%c0_1, %c0_2] : memref<16x384xf32, #tpu.memory_space<vmem>>, vector<16x384xf32>
    %c0_3 = arith.constant 0 : index
    %c0_4 = arith.constant 0 : index
    %2 = vector.load %arg5[%c0_3, %c0_4] : memref<128x384xf32, #tpu.memory_space<vmem>>, vector<128x384xf32>
    %c0_5 = arith.constant 0 : index
    %c0_6 = arith.constant 0 : index
    %3 = vector.load %arg6[%c0_5, %c0_6] : memref<1x384xf32, #tpu.memory_space<vmem>>, vector<1x384xf32>
    %c0_7 = arith.constant 0 : index
    %c0_8 = arith.constant 0 : index
    %4 = vector.load %arg7[%c0_7, %c0_8] : memref<1x384xf32, #tpu.memory_space<vmem>>, vector<1x384xf32>
    %cst = arith.constant 0.000000e+00 : f32
    %5 = vector.broadcast %cst : f32 to vector<2x128xf32>
    %c0_i32 = arith.constant 0 : i32
    %6 = arith.index_cast %c0_i32 : i32 to index
    %c0_9 = arith.constant 0 : index
    %c0_10 = arith.constant 0 : index
    %7 = vector.load %arg1[%6, %c0_9, %c0_10] : memref<8x2x16xf32, #tpu.memory_space<vmem>>, vector<1x2x16xf32>
    %8 = vector.shape_cast %7 : vector<1x2x16xf32> to vector<2x16xf32>
    %cst_11 = arith.constant dense<0.000000e+00> : vector<2x384xf32>
    %9 = tpu.matmul %8, %1, %cst_11 {dimension_numbers = #tpu.dot_dimension_numbers<[1], [0], [0], [1], [0, 0, 1, 1], [], []>} : vector<2x16xf32>, vector<16x384xf32>, vector<2x384xf32> -> vector<2x384xf32>
    %10 = vector.broadcast %3 : vector<1x384xf32> to vector<2x384xf32>
    %11 = arith.addf %9, %10 : vector<2x384xf32>
    %cst_12 = arith.constant dense<0.000000e+00> : vector<2x384xf32>
    %12 = tpu.matmul %5, %2, %cst_12 {dimension_numbers = #tpu.dot_dimension_numbers<[1], [0], [0], [1], [0, 0, 1, 1], [], []>} : vector<2x128xf32>, vector<128x384xf32>, vector<2x384xf32> -> vector<2x384xf32>
    %13 = vector.broadcast %4 : vector<1x384xf32> to vector<2x384xf32>
    %14 = arith.addf %12, %13 : vector<2x384xf32>
    %15 = vector.extract_strided_slice %11 {offsets = [0, 0], sizes = [2, 128], strides = [1, 1]} : vector<2x384xf32> to vector<2x128xf32>
    %16 = vector.extract_strided_slice %14 {offsets = [0, 0], sizes = [2, 128], strides = [1, 1]} : vector<2x384xf32> to vector<2x128xf32>
    %17 = arith.addf %15, %16 : vector<2x128xf32>
    %18 = arith.negf %17 : vector<2x128xf32>
    %19 = math.exp %18 : vector<2x128xf32>
    %cst_13 = arith.constant 1.000000e+00 : f32
    %20 = vector.broadcast %cst_13 : f32 to vector<2x128xf32>
    %21 = arith.addf %20, %19 : vector<2x128xf32>
    %22 = arith.divf %20, %21 : vector<2x128xf32>
    %23 = vector.extract_strided_slice %11 {offsets = [0, 128], sizes = [2, 128], strides = [1, 1]} : vector<2x384xf32> to vector<2x128xf32>
    %24 = vector.extract_strided_slice %14 {offsets = [0, 128], sizes = [2, 128], strides = [1, 1]} : vector<2x384xf32> to vector<2x128xf32>
    %25 = arith.addf %23, %24 : vector<2x128xf32>
    %26 = arith.negf %25 : vector<2x128xf32>
    %27 = math.exp %26 : vector<2x128xf32>
    %cst_14 = arith.constant 1.000000e+00 : f32
    %28 = vector.broadcast %cst_14 : f32 to vector<2x128xf32>
    %29 = arith.addf %28, %27 : vector<2x128xf32>
    %30 = arith.divf %28, %29 : vector<2x128xf32>
    %31 = vector.extract_strided_slice %11 {offsets = [0, 256], sizes = [2, 128], strides = [1, 1]} : vector<2x384xf32> to vector<2x128xf32>
    %32 = vector.extract_strided_slice %14 {offsets = [0, 256], sizes = [2, 128], strides = [1, 1]} : vector<2x384xf32> to vector<2x128xf32>
    %33 = arith.mulf %22, %32 : vector<2x128xf32>
    %34 = arith.addf %31, %33 : vector<2x128xf32>
    %35 = math.tanh %34 : vector<2x128xf32>
    %cst_15 = arith.constant 1.000000e+00 : f32
    %36 = vector.broadcast %cst_15 : f32 to vector<2x128xf32>
    %37 = arith.subf %36, %30 : vector<2x128xf32>
    %38 = arith.mulf %37, %35 : vector<2x128xf32>
    %39 = arith.mulf %30, %5 : vector<2x128xf32>
    %40 = arith.addf %38, %39 : vector<2x128xf32>
    %41 = vector.broadcast %c0_i32 : i32 to vector<2x1xi32>
    %42 = arith.cmpi slt, %41, %0 : vector<2x1xi32>
    %43 = vector.shape_cast %42 : vector<2x1xi1> to vector<2x1xi1>
    %44 = vector.broadcast %43 : vector<2x1xi1> to vector<2x128xi1>
    %45 = arith.select %44, %40, %5 : vector<2x128xi1>, vector<2x128xf32>
    %c1_i32 = arith.constant 1 : i32
    %46 = arith.index_cast %c1_i32 : i32 to index
    %c0_16 = arith.constant 0 : index
    %c0_17 = arith.constant 0 : index
    %47 = vector.load %arg1[%46, %c0_16, %c0_17] : memref<8x2x16xf32, #tpu.memory_space<vmem>>, vector<1x2x16xf32>
    %48 = vector.shape_cast %47 : vector<1x2x16xf32> to vector<2x16xf32>
    %cst_18 = arith.constant dense<0.000000e+00> : vector<2x384xf32>
    %49 = tpu.matmul %48, %1, %cst_18 {dimension_numbers = #tpu.dot_dimension_numbers<[1], [0], [0], [1], [0, 0, 1, 1], [], []>} : vector<2x16xf32>, vector<16x384xf32>, vector<2x384xf32> -> vector<2x384xf32>
    %50 = vector.broadcast %3 : vector<1x384xf32> to vector<2x384xf32>
    %51 = arith.addf %49, %50 : vector<2x384xf32>
    %cst_19 = arith.constant dense<0.000000e+00> : vector<2x384xf32>
    %52 = tpu.matmul %45, %2, %cst_19 {dimension_numbers = #tpu.dot_dimension_numbers<[1], [0], [0], [1], [0, 0, 1, 1], [], []>} : vector<2x128xf32>, vector<128x384xf32>, vector<2x384xf32> -> vector<2x384xf32>
    %53 = vector.broadcast %4 : vector<1x384xf32> to vector<2x384xf32>
    %54 = arith.addf %52, %53 : vector<2x384xf32>
    %55 = vector.extract_strided_slice %51 {offsets = [0, 0], sizes = [2, 128], strides = [1, 1]} : vector<2x384xf32> to vector<2x128xf32>
    %56 = vector.extract_strided_slice %54 {offsets = [0, 0], sizes = [2, 128], strides = [1, 1]} : vector<2x384xf32> to vector<2x128xf32>
    %57 = arith.addf %55, %56 : vector<2x128xf32>
    %58 = arith.negf %57 : vector<2x128xf32>
    %59 = math.exp %58 : vector<2x128xf32>
    %cst_20 = arith.constant 1.000000e+00 : f32
    %60 = vector.broadcast %cst_20 : f32 to vector<2x128xf32>
    %61 = arith.addf %60, %59 : vector<2x128xf32>
    %62 = arith.divf %60, %61 : vector<2x128xf32>
    %63 = vector.extract_strided_slice %51 {offsets = [0, 128], sizes = [2, 128], strides = [1, 1]} : vector<2x384xf32> to vector<2x128xf32>
    %64 = vector.extract_strided_slice %54 {offsets = [0, 128], sizes = [2, 128], strides = [1, 1]} : vector<2x384xf32> to vector<2x128xf32>
    %65 = arith.addf %63, %64 : vector<2x128xf32>
    %66 = arith.negf %65 : vector<2x128xf32>
    %67 = math.exp %66 : vector<2x128xf32>
    %cst_21 = arith.constant 1.000000e+00 : f32
    %68 = vector.broadcast %cst_21 : f32 to vector<2x128xf32>
    %69 = arith.addf %68, %67 : vector<2x128xf32>
    %70 = arith.divf %68, %69 : vector<2x128xf32>
    %71 = vector.extract_strided_slice %51 {offsets = [0, 256], sizes = [2, 128], strides = [1, 1]} : vector<2x384xf32> to vector<2x128xf32>
    %72 = vector.extract_strided_slice %54 {offsets = [0, 256], sizes = [2, 128], strides = [1, 1]} : vector<2x384xf32> to vector<2x128xf32>
    %73 = arith.mulf %62, %72 : vector<2x128xf32>
    %74 = arith.addf %71, %73 : vector<2x128xf32>
    %75 = math.tanh %74 : vector<2x128xf32>
    %cst_22 = arith.constant 1.000000e+00 : f32
    %76 = vector.broadcast %cst_22 : f32 to vector<2x128xf32>
    %77 = arith.subf %76, %70 : vector<2x128xf32>
    %78 = arith.mulf %77, %75 : vector<2x128xf32>
    %79 = arith.mulf %70, %45 : vector<2x128xf32>
    %80 = arith.addf %78, %79 : vector<2x128xf32>
    %81 = vector.broadcast %c1_i32 : i32 to vector<2x1xi32>
    %82 = arith.cmpi slt, %81, %0 : vector<2x1xi32>
    %83 = vector.shape_cast %82 : vector<2x1xi1> to vector<2x1xi1>
    %84 = vector.broadcast %83 : vector<2x1xi1> to vector<2x128xi1>
    %85 = arith.select %84, %80, %45 : vector<2x128xi1>, vector<2x128xf32>
    %c2_i32 = arith.constant 2 : i32
    %86 = arith.index_cast %c2_i32 : i32 to index
    %c0_23 = arith.constant 0 : index
    %c0_24 = arith.constant 0 : index
    %87 = vector.load %arg1[%86, %c0_23, %c0_24] : memref<8x2x16xf32, #tpu.memory_space<vmem>>, vector<1x2x16xf32>
    %88 = vector.shape_cast %87 : vector<1x2x16xf32> to vector<2x16xf32>
    %cst_25 = arith.constant dense<0.000000e+00> : vector<2x384xf32>
    %89 = tpu.matmul %88, %1, %cst_25 {dimension_numbers = #tpu.dot_dimension_numbers<[1], [0], [0], [1], [0, 0, 1, 1], [], []>} : vector<2x16xf32>, vector<16x384xf32>, vector<2x384xf32> -> vector<2x384xf32>
    %90 = vector.broadcast %3 : vector<1x384xf32> to vector<2x384xf32>
    %91 = arith.addf %89, %90 : vector<2x384xf32>
    %cst_26 = arith.constant dense<0.000000e+00> : vector<2x384xf32>
    %92 = tpu.matmul %85, %2, %cst_26 {dimension_numbers = #tpu.dot_dimension_numbers<[1], [0], [0], [1], [0, 0, 1, 1], [], []>} : vector<2x128xf32>, vector<128x384xf32>, vector<2x384xf32> -> vector<2x384xf32>
    %93 = vector.broadcast %4 : vector<1x384xf32> to vector<2x384xf32>
    %94 = arith.addf %92, %93 : vector<2x384xf32>
    %95 = vector.extract_strided_slice %91 {offsets = [0, 0], sizes = [2, 128], strides = [1, 1]} : vector<2x384xf32> to vector<2x128xf32>
    %96 = vector.extract_strided_slice %94 {offsets = [0, 0], sizes = [2, 128], strides = [1, 1]} : vector<2x384xf32> to vector<2x128xf32>
    %97 = arith.addf %95, %96 : vector<2x128xf32>
    %98 = arith.negf %97 : vector<2x128xf32>
    %99 = math.exp %98 : vector<2x128xf32>
    %cst_27 = arith.constant 1.000000e+00 : f32
    %100 = vector.broadcast %cst_27 : f32 to vector<2x128xf32>
    %101 = arith.addf %100, %99 : vector<2x128xf32>
    %102 = arith.divf %100, %101 : vector<2x128xf32>
    %103 = vector.extract_strided_slice %91 {offsets = [0, 128], sizes = [2, 128], strides = [1, 1]} : vector<2x384xf32> to vector<2x128xf32>
    %104 = vector.extract_strided_slice %94 {offsets = [0, 128], sizes = [2, 128], strides = [1, 1]} : vector<2x384xf32> to vector<2x128xf32>
    %105 = arith.addf %103, %104 : vector<2x128xf32>
    %106 = arith.negf %105 : vector<2x128xf32>
    %107 = math.exp %106 : vector<2x128xf32>
    %cst_28 = arith.constant 1.000000e+00 : f32
    %108 = vector.broadcast %cst_28 : f32 to vector<2x128xf32>
    %109 = arith.addf %108, %107 : vector<2x128xf32>
    %110 = arith.divf %108, %109 : vector<2x128xf32>
    %111 = vector.extract_strided_slice %91 {offsets = [0, 256], sizes = [2, 128], strides = [1, 1]} : vector<2x384xf32> to vector<2x128xf32>
    %112 = vector.extract_strided_slice %94 {offsets = [0, 256], sizes = [2, 128], strides = [1, 1]} : vector<2x384xf32> to vector<2x128xf32>
    %113 = arith.mulf %102, %112 : vector<2x128xf32>
    %114 = arith.addf %111, %113 : vector<2x128xf32>
    %115 = math.tanh %114 : vector<2x128xf32>
    %cst_29 = arith.constant 1.000000e+00 : f32
    %116 = vector.broadcast %cst_29 : f32 to vector<2x128xf32>
    %117 = arith.subf %116, %110 : vector<2x128xf32>
    %118 = arith.mulf %117, %115 : vector<2x128xf32>
    %119 = arith.mulf %110, %85 : vector<2x128xf32>
    %120 = arith.addf %118, %119 : vector<2x128xf32>
    %121 = vector.broadcast %c2_i32 : i32 to vector<2x1xi32>
    %122 = arith.cmpi slt, %121, %0 : vector<2x1xi32>
    %123 = vector.shape_cast %122 : vector<2x1xi1> to vector<2x1xi1>
    %124 = vector.broadcast %123 : vector<2x1xi1> to vector<2x128xi1>
    %125 = arith.select %124, %120, %85 : vector<2x128xi1>, vector<2x128xf32>
    %c3_i32 = arith.constant 3 : i32
    %126 = arith.index_cast %c3_i32 : i32 to index
    %c0_30 = arith.constant 0 : index
    %c0_31 = arith.constant 0 : index
    %127 = vector.load %arg1[%126, %c0_30, %c0_31] : memref<8x2x16xf32, #tpu.memory_space<vmem>>, vector<1x2x16xf32>
    %128 = vector.shape_cast %127 : vector<1x2x16xf32> to vector<2x16xf32>
    %cst_32 = arith.constant dense<0.000000e+00> : vector<2x384xf32>
    %129 = tpu.matmul %128, %1, %cst_32 {dimension_numbers = #tpu.dot_dimension_numbers<[1], [0], [0], [1], [0, 0, 1, 1], [], []>} : vector<2x16xf32>, vector<16x384xf32>, vector<2x384xf32> -> vector<2x384xf32>
    %130 = vector.broadcast %3 : vector<1x384xf32> to vector<2x384xf32>
    %131 = arith.addf %129, %130 : vector<2x384xf32>
    %cst_33 = arith.constant dense<0.000000e+00> : vector<2x384xf32>
    %132 = tpu.matmul %125, %2, %cst_33 {dimension_numbers = #tpu.dot_dimension_numbers<[1], [0], [0], [1], [0, 0, 1, 1], [], []>} : vector<2x128xf32>, vector<128x384xf32>, vector<2x384xf32> -> vector<2x384xf32>
    %133 = vector.broadcast %4 : vector<1x384xf32> to vector<2x384xf32>
    %134 = arith.addf %132, %133 : vector<2x384xf32>
    %135 = vector.extract_strided_slice %131 {offsets = [0, 0], sizes = [2, 128], strides = [1, 1]} : vector<2x384xf32> to vector<2x128xf32>
    %136 = vector.extract_strided_slice %134 {offsets = [0, 0], sizes = [2, 128], strides = [1, 1]} : vector<2x384xf32> to vector<2x128xf32>
    %137 = arith.addf %135, %136 : vector<2x128xf32>
    %138 = arith.negf %137 : vector<2x128xf32>
    %139 = math.exp %138 : vector<2x128xf32>
    %cst_34 = arith.constant 1.000000e+00 : f32
    %140 = vector.broadcast %cst_34 : f32 to vector<2x128xf32>
    %141 = arith.addf %140, %139 : vector<2x128xf32>
    %142 = arith.divf %140, %141 : vector<2x128xf32>
    %143 = vector.extract_strided_slice %131 {offsets = [0, 128], sizes = [2, 128], strides = [1, 1]} : vector<2x384xf32> to vector<2x128xf32>
    %144 = vector.extract_strided_slice %134 {offsets = [0, 128], sizes = [2, 128], strides = [1, 1]} : vector<2x384xf32> to vector<2x128xf32>
    %145 = arith.addf %143, %144 : vector<2x128xf32>
    %146 = arith.negf %145 : vector<2x128xf32>
    %147 = math.exp %146 : vector<2x128xf32>
    %cst_35 = arith.constant 1.000000e+00 : f32
    %148 = vector.broadcast %cst_35 : f32 to vector<2x128xf32>
    %149 = arith.addf %148, %147 : vector<2x128xf32>
    %150 = arith.divf %148, %149 : vector<2x128xf32>
    %151 = vector.extract_strided_slice %131 {offsets = [0, 256], sizes = [2, 128], strides = [1, 1]} : vector<2x384xf32> to vector<2x128xf32>
    %152 = vector.extract_strided_slice %134 {offsets = [0, 256], sizes = [2, 128], strides = [1, 1]} : vector<2x384xf32> to vector<2x128xf32>
    %153 = arith.mulf %142, %152 : vector<2x128xf32>
    %154 = arith.addf %151, %153 : vector<2x128xf32>
    %155 = math.tanh %154 : vector<2x128xf32>
    %cst_36 = arith.constant 1.000000e+00 : f32
    %156 = vector.broadcast %cst_36 : f32 to vector<2x128xf32>
    %157 = arith.subf %156, %150 : vector<2x128xf32>
    %158 = arith.mulf %157, %155 : vector<2x128xf32>
    %159 = arith.mulf %150, %125 : vector<2x128xf32>
    %160 = arith.addf %158, %159 : vector<2x128xf32>
    %161 = vector.broadcast %c3_i32 : i32 to vector<2x1xi32>
    %162 = arith.cmpi slt, %161, %0 : vector<2x1xi32>
    %163 = vector.shape_cast %162 : vector<2x1xi1> to vector<2x1xi1>
    %164 = vector.broadcast %163 : vector<2x1xi1> to vector<2x128xi1>
    %165 = arith.select %164, %160, %125 : vector<2x128xi1>, vector<2x128xf32>
    %c4_i32 = arith.constant 4 : i32
    %166 = arith.index_cast %c4_i32 : i32 to index
    %c0_37 = arith.constant 0 : index
    %c0_38 = arith.constant 0 : index
    %167 = vector.load %arg1[%166, %c0_37, %c0_38] : memref<8x2x16xf32, #tpu.memory_space<vmem>>, vector<1x2x16xf32>
    %168 = vector.shape_cast %167 : vector<1x2x16xf32> to vector<2x16xf32>
    %cst_39 = arith.constant dense<0.000000e+00> : vector<2x384xf32>
    %169 = tpu.matmul %168, %1, %cst_39 {dimension_numbers = #tpu.dot_dimension_numbers<[1], [0], [0], [1], [0, 0, 1, 1], [], []>} : vector<2x16xf32>, vector<16x384xf32>, vector<2x384xf32> -> vector<2x384xf32>
    %170 = vector.broadcast %3 : vector<1x384xf32> to vector<2x384xf32>
    %171 = arith.addf %169, %170 : vector<2x384xf32>
    %cst_40 = arith.constant dense<0.000000e+00> : vector<2x384xf32>
    %172 = tpu.matmul %165, %2, %cst_40 {dimension_numbers = #tpu.dot_dimension_numbers<[1], [0], [0], [1], [0, 0, 1, 1], [], []>} : vector<2x128xf32>, vector<128x384xf32>, vector<2x384xf32> -> vector<2x384xf32>
    %173 = vector.broadcast %4 : vector<1x384xf32> to vector<2x384xf32>
    %174 = arith.addf %172, %173 : vector<2x384xf32>
    %175 = vector.extract_strided_slice %171 {offsets = [0, 0], sizes = [2, 128], strides = [1, 1]} : vector<2x384xf32> to vector<2x128xf32>
    %176 = vector.extract_strided_slice %174 {offsets = [0, 0], sizes = [2, 128], strides = [1, 1]} : vector<2x384xf32> to vector<2x128xf32>
    %177 = arith.addf %175, %176 : vector<2x128xf32>
    %178 = arith.negf %177 : vector<2x128xf32>
    %179 = math.exp %178 : vector<2x128xf32>
    %cst_41 = arith.constant 1.000000e+00 : f32
    %180 = vector.broadcast %cst_41 : f32 to vector<2x128xf32>
    %181 = arith.addf %180, %179 : vector<2x128xf32>
    %182 = arith.divf %180, %181 : vector<2x128xf32>
    %183 = vector.extract_strided_slice %171 {offsets = [0, 128], sizes = [2, 128], strides = [1, 1]} : vector<2x384xf32> to vector<2x128xf32>
    %184 = vector.extract_strided_slice %174 {offsets = [0, 128], sizes = [2, 128], strides = [1, 1]} : vector<2x384xf32> to vector<2x128xf32>
    %185 = arith.addf %183, %184 : vector<2x128xf32>
    %186 = arith.negf %185 : vector<2x128xf32>
    %187 = math.exp %186 : vector<2x128xf32>
    %cst_42 = arith.constant 1.000000e+00 : f32
    %188 = vector.broadcast %cst_42 : f32 to vector<2x128xf32>
    %189 = arith.addf %188, %187 : vector<2x128xf32>
    %190 = arith.divf %188, %189 : vector<2x128xf32>
    %191 = vector.extract_strided_slice %171 {offsets = [0, 256], sizes = [2, 128], strides = [1, 1]} : vector<2x384xf32> to vector<2x128xf32>
    %192 = vector.extract_strided_slice %174 {offsets = [0, 256], sizes = [2, 128], strides = [1, 1]} : vector<2x384xf32> to vector<2x128xf32>
    %193 = arith.mulf %182, %192 : vector<2x128xf32>
    %194 = arith.addf %191, %193 : vector<2x128xf32>
    %195 = math.tanh %194 : vector<2x128xf32>
    %cst_43 = arith.constant 1.000000e+00 : f32
    %196 = vector.broadcast %cst_43 : f32 to vector<2x128xf32>
    %197 = arith.subf %196, %190 : vector<2x128xf32>
    %198 = arith.mulf %197, %195 : vector<2x128xf32>
    %199 = arith.mulf %190, %165 : vector<2x128xf32>
    %200 = arith.addf %198, %199 : vector<2x128xf32>
    %201 = vector.broadcast %c4_i32 : i32 to vector<2x1xi32>
    %202 = arith.cmpi slt, %201, %0 : vector<2x1xi32>
    %203 = vector.shape_cast %202 : vector<2x1xi1> to vector<2x1xi1>
    %204 = vector.broadcast %203 : vector<2x1xi1> to vector<2x128xi1>
    %205 = arith.select %204, %200, %165 : vector<2x128xi1>, vector<2x128xf32>
    %c5_i32 = arith.constant 5 : i32
    %206 = arith.index_cast %c5_i32 : i32 to index
    %c0_44 = arith.constant 0 : index
    %c0_45 = arith.constant 0 : index
    %207 = vector.load %arg1[%206, %c0_44, %c0_45] : memref<8x2x16xf32, #tpu.memory_space<vmem>>, vector<1x2x16xf32>
    %208 = vector.shape_cast %207 : vector<1x2x16xf32> to vector<2x16xf32>
    %cst_46 = arith.constant dense<0.000000e+00> : vector<2x384xf32>
    %209 = tpu.matmul %208, %1, %cst_46 {dimension_numbers = #tpu.dot_dimension_numbers<[1], [0], [0], [1], [0, 0, 1, 1], [], []>} : vector<2x16xf32>, vector<16x384xf32>, vector<2x384xf32> -> vector<2x384xf32>
    %210 = vector.broadcast %3 : vector<1x384xf32> to vector<2x384xf32>
    %211 = arith.addf %209, %210 : vector<2x384xf32>
    %cst_47 = arith.constant dense<0.000000e+00> : vector<2x384xf32>
    %212 = tpu.matmul %205, %2, %cst_47 {dimension_numbers = #tpu.dot_dimension_numbers<[1], [0], [0], [1], [0, 0, 1, 1], [], []>} : vector<2x128xf32>, vector<128x384xf32>, vector<2x384xf32> -> vector<2x384xf32>
    %213 = vector.broadcast %4 : vector<1x384xf32> to vector<2x384xf32>
    %214 = arith.addf %212, %213 : vector<2x384xf32>
    %215 = vector.extract_strided_slice %211 {offsets = [0, 0], sizes = [2, 128], strides = [1, 1]} : vector<2x384xf32> to vector<2x128xf32>
    %216 = vector.extract_strided_slice %214 {offsets = [0, 0], sizes = [2, 128], strides = [1, 1]} : vector<2x384xf32> to vector<2x128xf32>
    %217 = arith.addf %215, %216 : vector<2x128xf32>
    %218 = arith.negf %217 : vector<2x128xf32>
    %219 = math.exp %218 : vector<2x128xf32>
    %cst_48 = arith.constant 1.000000e+00 : f32
    %220 = vector.broadcast %cst_48 : f32 to vector<2x128xf32>
    %221 = arith.addf %220, %219 : vector<2x128xf32>
    %222 = arith.divf %220, %221 : vector<2x128xf32>
    %223 = vector.extract_strided_slice %211 {offsets = [0, 128], sizes = [2, 128], strides = [1, 1]} : vector<2x384xf32> to vector<2x128xf32>
    %224 = vector.extract_strided_slice %214 {offsets = [0, 128], sizes = [2, 128], strides = [1, 1]} : vector<2x384xf32> to vector<2x128xf32>
    %225 = arith.addf %223, %224 : vector<2x128xf32>
    %226 = arith.negf %225 : vector<2x128xf32>
    %227 = math.exp %226 : vector<2x128xf32>
    %cst_49 = arith.constant 1.000000e+00 : f32
    %228 = vector.broadcast %cst_49 : f32 to vector<2x128xf32>
    %229 = arith.addf %228, %227 : vector<2x128xf32>
    %230 = arith.divf %228, %229 : vector<2x128xf32>
    %231 = vector.extract_strided_slice %211 {offsets = [0, 256], sizes = [2, 128], strides = [1, 1]} : vector<2x384xf32> to vector<2x128xf32>
    %232 = vector.extract_strided_slice %214 {offsets = [0, 256], sizes = [2, 128], strides = [1, 1]} : vector<2x384xf32> to vector<2x128xf32>
    %233 = arith.mulf %222, %232 : vector<2x128xf32>
    %234 = arith.addf %231, %233 : vector<2x128xf32>
    %235 = math.tanh %234 : vector<2x128xf32>
    %cst_50 = arith.constant 1.000000e+00 : f32
    %236 = vector.broadcast %cst_50 : f32 to vector<2x128xf32>
    %237 = arith.subf %236, %230 : vector<2x128xf32>
    %238 = arith.mulf %237, %235 : vector<2x128xf32>
    %239 = arith.mulf %230, %205 : vector<2x128xf32>
    %240 = arith.addf %238, %239 : vector<2x128xf32>
    %241 = vector.broadcast %c5_i32 : i32 to vector<2x1xi32>
    %242 = arith.cmpi slt, %241, %0 : vector<2x1xi32>
    %243 = vector.shape_cast %242 : vector<2x1xi1> to vector<2x1xi1>
    %244 = vector.broadcast %243 : vector<2x1xi1> to vector<2x128xi1>
    %245 = arith.select %244, %240, %205 : vector<2x128xi1>, vector<2x128xf32>
    %c6_i32 = arith.constant 6 : i32
    %246 = arith.index_cast %c6_i32 : i32 to index
    %c0_51 = arith.constant 0 : index
    %c0_52 = arith.constant 0 : index
    %247 = vector.load %arg1[%246, %c0_51, %c0_52] : memref<8x2x16xf32, #tpu.memory_space<vmem>>, vector<1x2x16xf32>
    %248 = vector.shape_cast %247 : vector<1x2x16xf32> to vector<2x16xf32>
    %cst_53 = arith.constant dense<0.000000e+00> : vector<2x384xf32>
    %249 = tpu.matmul %248, %1, %cst_53 {dimension_numbers = #tpu.dot_dimension_numbers<[1], [0], [0], [1], [0, 0, 1, 1], [], []>} : vector<2x16xf32>, vector<16x384xf32>, vector<2x384xf32> -> vector<2x384xf32>
    %250 = vector.broadcast %3 : vector<1x384xf32> to vector<2x384xf32>
    %251 = arith.addf %249, %250 : vector<2x384xf32>
    %cst_54 = arith.constant dense<0.000000e+00> : vector<2x384xf32>
    %252 = tpu.matmul %245, %2, %cst_54 {dimension_numbers = #tpu.dot_dimension_numbers<[1], [0], [0], [1], [0, 0, 1, 1], [], []>} : vector<2x128xf32>, vector<128x384xf32>, vector<2x384xf32> -> vector<2x384xf32>
    %253 = vector.broadcast %4 : vector<1x384xf32> to vector<2x384xf32>
    %254 = arith.addf %252, %253 : vector<2x384xf32>
    %255 = vector.extract_strided_slice %251 {offsets = [0, 0], sizes = [2, 128], strides = [1, 1]} : vector<2x384xf32> to vector<2x128xf32>
    %256 = vector.extract_strided_slice %254 {offsets = [0, 0], sizes = [2, 128], strides = [1, 1]} : vector<2x384xf32> to vector<2x128xf32>
    %257 = arith.addf %255, %256 : vector<2x128xf32>
    %258 = arith.negf %257 : vector<2x128xf32>
    %259 = math.exp %258 : vector<2x128xf32>
    %cst_55 = arith.constant 1.000000e+00 : f32
    %260 = vector.broadcast %cst_55 : f32 to vector<2x128xf32>
    %261 = arith.addf %260, %259 : vector<2x128xf32>
    %262 = arith.divf %260, %261 : vector<2x128xf32>
    %263 = vector.extract_strided_slice %251 {offsets = [0, 128], sizes = [2, 128], strides = [1, 1]} : vector<2x384xf32> to vector<2x128xf32>
    %264 = vector.extract_strided_slice %254 {offsets = [0, 128], sizes = [2, 128], strides = [1, 1]} : vector<2x384xf32> to vector<2x128xf32>
    %265 = arith.addf %263, %264 : vector<2x128xf32>
    %266 = arith.negf %265 : vector<2x128xf32>
    %267 = math.exp %266 : vector<2x128xf32>
    %cst_56 = arith.constant 1.000000e+00 : f32
    %268 = vector.broadcast %cst_56 : f32 to vector<2x128xf32>
    %269 = arith.addf %268, %267 : vector<2x128xf32>
    %270 = arith.divf %268, %269 : vector<2x128xf32>
    %271 = vector.extract_strided_slice %251 {offsets = [0, 256], sizes = [2, 128], strides = [1, 1]} : vector<2x384xf32> to vector<2x128xf32>
    %272 = vector.extract_strided_slice %254 {offsets = [0, 256], sizes = [2, 128], strides = [1, 1]} : vector<2x384xf32> to vector<2x128xf32>
    %273 = arith.mulf %262, %272 : vector<2x128xf32>
    %274 = arith.addf %271, %273 : vector<2x128xf32>
    %275 = math.tanh %274 : vector<2x128xf32>
    %cst_57 = arith.constant 1.000000e+00 : f32
    %276 = vector.broadcast %cst_57 : f32 to vector<2x128xf32>
    %277 = arith.subf %276, %270 : vector<2x128xf32>
    %278 = arith.mulf %277, %275 : vector<2x128xf32>
    %279 = arith.mulf %270, %245 : vector<2x128xf32>
    %280 = arith.addf %278, %279 : vector<2x128xf32>
    %281 = vector.broadcast %c6_i32 : i32 to vector<2x1xi32>
    %282 = arith.cmpi slt, %281, %0 : vector<2x1xi32>
    %283 = vector.shape_cast %282 : vector<2x1xi1> to vector<2x1xi1>
    %284 = vector.broadcast %283 : vector<2x1xi1> to vector<2x128xi1>
    %285 = arith.select %284, %280, %245 : vector<2x128xi1>, vector<2x128xf32>
    %c7_i32 = arith.constant 7 : i32
    %286 = arith.index_cast %c7_i32 : i32 to index
    %c0_58 = arith.constant 0 : index
    %c0_59 = arith.constant 0 : index
    %287 = vector.load %arg1[%286, %c0_58, %c0_59] : memref<8x2x16xf32, #tpu.memory_space<vmem>>, vector<1x2x16xf32>
    %288 = vector.shape_cast %287 : vector<1x2x16xf32> to vector<2x16xf32>
    %cst_60 = arith.constant dense<0.000000e+00> : vector<2x384xf32>
    %289 = tpu.matmul %288, %1, %cst_60 {dimension_numbers = #tpu.dot_dimension_numbers<[1], [0], [0], [1], [0, 0, 1, 1], [], []>} : vector<2x16xf32>, vector<16x384xf32>, vector<2x384xf32> -> vector<2x384xf32>
    %290 = vector.broadcast %3 : vector<1x384xf32> to vector<2x384xf32>
    %291 = arith.addf %289, %290 : vector<2x384xf32>
    %cst_61 = arith.constant dense<0.000000e+00> : vector<2x384xf32>
    %292 = tpu.matmul %285, %2, %cst_61 {dimension_numbers = #tpu.dot_dimension_numbers<[1], [0], [0], [1], [0, 0, 1, 1], [], []>} : vector<2x128xf32>, vector<128x384xf32>, vector<2x384xf32> -> vector<2x384xf32>
    %293 = vector.broadcast %4 : vector<1x384xf32> to vector<2x384xf32>
    %294 = arith.addf %292, %293 : vector<2x384xf32>
    %295 = vector.extract_strided_slice %291 {offsets = [0, 0], sizes = [2, 128], strides = [1, 1]} : vector<2x384xf32> to vector<2x128xf32>
    %296 = vector.extract_strided_slice %294 {offsets = [0, 0], sizes = [2, 128], strides = [1, 1]} : vector<2x384xf32> to vector<2x128xf32>
    %297 = arith.addf %295, %296 : vector<2x128xf32>
    %298 = arith.negf %297 : vector<2x128xf32>
    %299 = math.exp %298 : vector<2x128xf32>
    %cst_62 = arith.constant 1.000000e+00 : f32
    %300 = vector.broadcast %cst_62 : f32 to vector<2x128xf32>
    %301 = arith.addf %300, %299 : vector<2x128xf32>
    %302 = arith.divf %300, %301 : vector<2x128xf32>
    %303 = vector.extract_strided_slice %291 {offsets = [0, 128], sizes = [2, 128], strides = [1, 1]} : vector<2x384xf32> to vector<2x128xf32>
    %304 = vector.extract_strided_slice %294 {offsets = [0, 128], sizes = [2, 128], strides = [1, 1]} : vector<2x384xf32> to vector<2x128xf32>
    %305 = arith.addf %303, %304 : vector<2x128xf32>
    %306 = arith.negf %305 : vector<2x128xf32>
    %307 = math.exp %306 : vector<2x128xf32>
    %cst_63 = arith.constant 1.000000e+00 : f32
    %308 = vector.broadcast %cst_63 : f32 to vector<2x128xf32>
    %309 = arith.addf %308, %307 : vector<2x128xf32>
    %310 = arith.divf %308, %309 : vector<2x128xf32>
    %311 = vector.extract_strided_slice %291 {offsets = [0, 256], sizes = [2, 128], strides = [1, 1]} : vector<2x384xf32> to vector<2x128xf32>
    %312 = vector.extract_strided_slice %294 {offsets = [0, 256], sizes = [2, 128], strides = [1, 1]} : vector<2x384xf32> to vector<2x128xf32>
    %313 = arith.mulf %302, %312 : vector<2x128xf32>
    %314 = arith.addf %311, %313 : vector<2x128xf32>
    %315 = math.tanh %314 : vector<2x128xf32>
    %cst_64 = arith.constant 1.000000e+00 : f32
    %316 = vector.broadcast %cst_64 : f32 to vector<2x128xf32>
    %317 = arith.subf %316, %310 : vector<2x128xf32>
    %318 = arith.mulf %317, %315 : vector<2x128xf32>
    %319 = arith.mulf %310, %285 : vector<2x128xf32>
    %320 = arith.addf %318, %319 : vector<2x128xf32>
    %321 = vector.broadcast %c7_i32 : i32 to vector<2x1xi32>
    %322 = arith.cmpi slt, %321, %0 : vector<2x1xi32>
    %323 = vector.shape_cast %322 : vector<2x1xi1> to vector<2x1xi1>
    %324 = vector.broadcast %323 : vector<2x1xi1> to vector<2x128xi1>
    %325 = arith.select %324, %320, %285 : vector<2x128xi1>, vector<2x128xf32>
    %c8_i32 = arith.constant 8 : i32
    %c0_65 = arith.constant 0 : index
    %c0_66 = arith.constant 0 : index
    %326 = vector.load %arg2[%c0_65, %c0_66] : memref<2x16xf32, #tpu.memory_space<vmem>>, vector<2x16xf32>
    %cst_67 = arith.constant 0.000000e+00 : f32
    %327 = vector.broadcast %cst_67 : f32 to vector<2x128xf32>
    %c0_68 = arith.constant 0 : index
    %c0_69 = arith.constant 0 : index
    %328 = vector.load %arg8[%c0_68, %c0_69] : memref<16x384xf32, #tpu.memory_space<vmem>>, vector<16x384xf32>
    %c0_70 = arith.constant 0 : index
    %c0_71 = arith.constant 0 : index
    %329 = vector.load %arg9[%c0_70, %c0_71] : memref<128x384xf32, #tpu.memory_space<vmem>>, vector<128x384xf32>
    %c0_72 = arith.constant 0 : index
    %c0_73 = arith.constant 0 : index
    %330 = vector.load %arg10[%c0_72, %c0_73] : memref<1x384xf32, #tpu.memory_space<vmem>>, vector<1x384xf32>
    %c0_74 = arith.constant 0 : index
    %c0_75 = arith.constant 0 : index
    %331 = vector.load %arg11[%c0_74, %c0_75] : memref<1x384xf32, #tpu.memory_space<vmem>>, vector<1x384xf32>
    %cst_76 = arith.constant dense<0.000000e+00> : vector<2x384xf32>
    %332 = tpu.matmul %326, %328, %cst_76 {dimension_numbers = #tpu.dot_dimension_numbers<[1], [0], [0], [1], [0, 0, 1, 1], [], []>} : vector<2x16xf32>, vector<16x384xf32>, vector<2x384xf32> -> vector<2x384xf32>
    %333 = vector.broadcast %330 : vector<1x384xf32> to vector<2x384xf32>
    %334 = arith.addf %332, %333 : vector<2x384xf32>
    %cst_77 = arith.constant dense<0.000000e+00> : vector<2x384xf32>
    %335 = tpu.matmul %327, %329, %cst_77 {dimension_numbers = #tpu.dot_dimension_numbers<[1], [0], [0], [1], [0, 0, 1, 1], [], []>} : vector<2x128xf32>, vector<128x384xf32>, vector<2x384xf32> -> vector<2x384xf32>
    %336 = vector.broadcast %331 : vector<1x384xf32> to vector<2x384xf32>
    %337 = arith.addf %335, %336 : vector<2x384xf32>
    %338 = vector.extract_strided_slice %334 {offsets = [0, 0], sizes = [2, 128], strides = [1, 1]} : vector<2x384xf32> to vector<2x128xf32>
    %339 = vector.extract_strided_slice %337 {offsets = [0, 0], sizes = [2, 128], strides = [1, 1]} : vector<2x384xf32> to vector<2x128xf32>
    %340 = arith.addf %338, %339 : vector<2x128xf32>
    %341 = arith.negf %340 : vector<2x128xf32>
    %342 = math.exp %341 : vector<2x128xf32>
    %cst_78 = arith.constant 1.000000e+00 : f32
    %343 = vector.broadcast %cst_78 : f32 to vector<2x128xf32>
    %344 = arith.addf %343, %342 : vector<2x128xf32>
    %345 = arith.divf %343, %344 : vector<2x128xf32>
    %346 = vector.extract_strided_slice %334 {offsets = [0, 128], sizes = [2, 128], strides = [1, 1]} : vector<2x384xf32> to vector<2x128xf32>
    %347 = vector.extract_strided_slice %337 {offsets = [0, 128], sizes = [2, 128], strides = [1, 1]} : vector<2x384xf32> to vector<2x128xf32>
    %348 = arith.addf %346, %347 : vector<2x128xf32>
    %349 = arith.negf %348 : vector<2x128xf32>
    %350 = math.exp %349 : vector<2x128xf32>
    %cst_79 = arith.constant 1.000000e+00 : f32
    %351 = vector.broadcast %cst_79 : f32 to vector<2x128xf32>
    %352 = arith.addf %351, %350 : vector<2x128xf32>
    %353 = arith.divf %351, %352 : vector<2x128xf32>
    %354 = vector.extract_strided_slice %334 {offsets = [0, 256], sizes = [2, 128], strides = [1, 1]} : vector<2x384xf32> to vector<2x128xf32>
    %355 = vector.extract_strided_slice %337 {offsets = [0, 256], sizes = [2, 128], strides = [1, 1]} : vector<2x384xf32> to vector<2x128xf32>
    %356 = arith.mulf %345, %355 : vector<2x128xf32>
    %357 = arith.addf %354, %356 : vector<2x128xf32>
    %358 = math.tanh %357 : vector<2x128xf32>
    %cst_80 = arith.constant 1.000000e+00 : f32
    %359 = vector.broadcast %cst_80 : f32 to vector<2x128xf32>
    %360 = arith.subf %359, %353 : vector<2x128xf32>
    %361 = arith.mulf %360, %358 : vector<2x128xf32>
    %362 = arith.mulf %353, %327 : vector<2x128xf32>
    %363 = arith.addf %361, %362 : vector<2x128xf32>
    %c0_81 = arith.constant 0 : index
    %c0_82 = arith.constant 0 : index
    %364 = vector.load %arg12[%c0_81, %c0_82] : memref<2x256xf32, #tpu.memory_space<vmem>>, vector<2x128xf32>
    tpu.vector_store %arg12[%c0_81, %c0_82], %325 {strides = array<i32>} : memref<2x256xf32, #tpu.memory_space<vmem>>, vector<2x128xf32>,
    %c0_83 = arith.constant 0 : index
    %c128 = arith.constant 128 : index
    %365 = vector.load %arg12[%c0_83, %c128] : memref<2x256xf32, #tpu.memory_space<vmem>>, vector<2x128xf32>
    tpu.vector_store %arg12[%c0_83, %c128], %363 {strides = array<i32>} : memref<2x256xf32, #tpu.memory_space<vmem>>, vector<2x128xf32>,
    return
  }
  func.func @transform_0(%arg0: i32) -> (i32, i32, i32) {
    %c0_i32 = arith.constant 0 : i32
    %c0_i32_0 = arith.constant 0 : i32
    %c0_i32_1 = arith.constant 0 : i32
    %c0_i32_2 = arith.constant 0 : i32
    return %c0_i32, %c0_i32_0, %c0_i32_1 : i32, i32, i32
  }
  func.func @transform_1(%arg0: i32) -> (i32, i32) {
    %c0_i32 = arith.constant 0 : i32
    %c0_i32_0 = arith.constant 0 : i32
    %c0_i32_1 = arith.constant 0 : i32
    return %c0_i32, %c0_i32_0 : i32, i32
  }
  func.func @transform_2(%arg0: i32) -> (i32, i32) {
    %c0_i32 = arith.constant 0 : i32
    %c0_i32_0 = arith.constant 0 : i32
    %c0_i32_1 = arith.constant 0 : i32
    return %c0_i32, %c0_i32_0 : i32, i32
  }
  func.func @transform_3(%arg0: i32) -> (i32, i32) {
    %c0_i32 = arith.constant 0 : i32
    %c0_i32_0 = arith.constant 0 : i32
    %c0_i32_1 = arith.constant 0 : i32
    return %c0_i32, %c0_i32_0 : i32, i32
  }
  func.func @transform_4(%arg0: i32) -> (i32, i32) {
    %c0_i32 = arith.constant 0 : i32
    %c0_i32_0 = arith.constant 0 : i32
    %c0_i32_1 = arith.constant 0 : i32
    return %c0_i32, %c0_i32_0 : i32, i32
  }
  func.func @transform_5(%arg0: i32) -> (i32, i32) {
    %c0_i32 = arith.constant 0 : i32
    %c0_i32_0 = arith.constant 0 : i32
    %c0_i32_1 = arith.constant 0 : i32
    return %c0_i32, %c0_i32_0 : i32, i32
  }
  func.func @transform_6(%arg0: i32) -> (i32, i32) {
    %c0_i32 = arith.constant 0 : i32
    %c0_i32_0 = arith.constant 0 : i32
    %c0_i32_1 = arith.constant 0 : i32
    return %c0_i32, %c0_i32_0 : i32, i32
  }
  func.func @transform_7(%arg0: i32) -> (i32, i32) {
    %c0_i32 = arith.constant 0 : i32
    %c0_i32_0 = arith.constant 0 : i32
    %c0_i32_1 = arith.constant 0 : i32
    return %c0_i32, %c0_i32_0 : i32, i32
  }
  func.func @transform_8(%arg0: i32) -> (i32, i32) {
    %c0_i32 = arith.constant 0 : i32
    %c0_i32_0 = arith.constant 0 : i32
    %c0_i32_1 = arith.constant 0 : i32
    return %c0_i32, %c0_i32_0 : i32, i32
  }
  func.func @transform_9(%arg0: i32) -> (i32, i32) {
    %c0_i32 = arith.constant 0 : i32
    %c0_i32_0 = arith.constant 0 : i32
    %c0_i32_1 = arith.constant 0 : i32
    return %c0_i32, %c0_i32_0 : i32, i32
  }
  func.func @transform_10(%arg0: i32) -> (i32, i32) {
    %c0_i32 = arith.constant 0 : i32
    %c0_i32_0 = arith.constant 0 : i32
    %c0_i32_1 = arith.constant 0 : i32
    return %c0_i32, %c0_i32_0 : i32, i32
  }
  func.func @transform_11(%arg0: i32) -> (i32, i32) {
    %c0_i32 = arith.constant 0 : i32
    %c0_i32_0 = arith.constant 0 : i32
    %c0_i32_1 = arith.constant 0 : i32
    return %c0_i32, %c0_i32_0 : i32, i32
  }
}

</mosaic_0001>

<llo_original>
// kernel: tpu_custom_call.1
$region0: #{tpu_custom_call.1}
  #allocation0 [shape = 'u32[]', space=smem, size = 0x4, offset = 0x4, fixed_abs, tag = 'smem constant byte address 0x4 - core index']
  #allocation1 [shape = 'u32[144,128]{1,0:T(1,128)}', space=vmem, size = 0x12000, scoped, tag = 'internal scratch']
  %s0 = inlined_call_operand.hbm [shape: f32[8,2,16], index: 0, kind: input, shape index: {}]
  %s1 = inlined_call_operand.hbm [shape: f32[2,16], index: 1, kind: input, shape index: {}]
  %s2 = inlined_call_operand.vmem [shape: s32[2,1], index: 2, kind: input, shape index: {}]
  %s3 = inlined_call_operand.hbm [shape: f32[16,384], index: 3, kind: input, shape index: {}]
  %s4 = inlined_call_operand.hbm [shape: f32[128,384], index: 4, kind: input, shape index: {}]
  %s5 = inlined_call_operand.vmem [shape: f32[1,384], index: 5, kind: input, shape index: {}]
  %s6 = inlined_call_operand.vmem [shape: f32[1,384], index: 6, kind: input, shape index: {}]
  %s7 = inlined_call_operand.hbm [shape: f32[16,384], index: 7, kind: input, shape index: {}]
  %s8 = inlined_call_operand.hbm [shape: f32[128,384], index: 8, kind: input, shape index: {}]
  %s9 = inlined_call_operand.vmem [shape: f32[1,384], index: 9, kind: input, shape index: {}]
  %s10 = inlined_call_operand.vmem [shape: f32[1,384], index: 10, kind: input, shape index: {}]
  %s11 = inlined_call_operand.hbm [shape: f32[2,256], index: 11, kind: output, shape index: {}]
  %s12 = sld [smem:[#allocation0]]
  $region78: #{tpu_custom_call.1} parent=0
    _
  %s14 = ssub.s32 1, %s12
  %s15 = scalar_select 0, %s14, %s12
  $region1: #{tpu_custom_call.1} parent=0
    #allocation2 [shape = 'u8[8192]{0}', space=vmem, size = 0x2000, scoped, tag = 'input window, operand 0, single buffered']
    #allocation3 [shape = 's32[1]{0}', space=sflag, size = 0x4, scoped, tag = 'scoped memory for tpu_custom_call.1']
    #allocation4 [shape = 's32[1]{0}', space=sflag, size = 0x4, scoped, tag = 'scoped memory for tpu_custom_call.1']
    #allocation5 [shape = 'u8[1024]{0}', space=vmem, size = 0x400, scoped, tag = 'input window, operand 1, single buffered']
    #allocation6 [shape = 's32[1]{0}', space=sflag, size = 0x4, scoped, tag = 'scoped memory for tpu_custom_call.1']
    #allocation7 [shape = 'u8[24576]{0}', space=vmem, size = 0x6000, scoped, tag = 'input window, operand 3, single buffered']
    #allocation8 [shape = 'u8[196608]{0}', space=vmem, size = 0x30000, scoped, tag = 'input window, operand 4, single buffered']
    #allocation9 [shape = 's32[1]{0}', space=sflag, size = 0x4, scoped, tag = 'scoped memory for tpu_custom_call.1']
    #allocation10 [shape = 'u8[24576]{0}', space=vmem, size = 0x6000, scoped, tag = 'input window, operand 7, single buffered']
    #allocation11 [shape = 'u8[196608]{0}', space=vmem, size = 0x30000, scoped, tag = 'input window, operand 8, single buffered']
    #allocation12 [shape = 's32[1]{0}', space=sflag, size = 0x4, scoped, tag = 'scoped memory for tpu_custom_call.1']
    #allocation13 [shape = 'u8[2048]{0}', space=vmem, size = 0x800, scoped, tag = 'output window, operand 0, single buffered']
    %16 = vsyncpa [#allocation3], 0
    %17 = vsyncpa [#allocation6], 0
    %18 = vsyncpa [#allocation9], 0
    %19 = vsyncpa [#allocation12], 0
    %20 = vsyncpa [#allocation4], 0
    // Predicated region
    $region2: #{tpu_custom_call.1} parent=1 // pred_check
      _
    $region3: #{tpu_custom_call.1} parent=1 // pred_check_branch
      %22 = sbr.rel (0) target = $region5
    $region4: #{tpu_custom_call.1} parent=1 // pred_region
      %s24 = ssub.s32 256, 256
      %25 = vsyncadd [#allocation3], %s24
      %s26 = sshll.u32 [#allocation2], 4
      %s27 = int_to_ptr.vmem [resolvable:$true] %s26
      %32 = dma.hbm_to_vmem [thread:$0]  %s0, 256, %s27, [#allocation3], 32, 32, 2
    $region5: #{tpu_custom_call.1} parent=1 // pred_fallthru
      _
    // Predicated region
    $region6: #{tpu_custom_call.1} parent=1 // pred_check
      _
    $region7: #{tpu_custom_call.1} parent=1 // pred_check_branch
      %34 = sbr.rel (0) target = $region9
    $region8: #{tpu_custom_call.1} parent=1 // pred_region
      %s36 = ssub.s32 32, 32
      %37 = vsyncadd [#allocation6], %s36
      %s39 = sshll.u32 [#allocation5], 4
      %s40 = int_to_ptr.vmem [resolvable:$true] %s39
      %42 = dma.hbm_to_vmem [thread:$0]  %s1, 32, %s40, [#allocation6]
    $region9: #{tpu_custom_call.1} parent=1 // pred_fallthru
      _
    // Predicated region
    $region10: #{tpu_custom_call.1} parent=1 // pred_check
      _
    $region11: #{tpu_custom_call.1} parent=1 // pred_check_branch
      %44 = sbr.rel (0) target = $region13
    $region12: #{tpu_custom_call.1} parent=1 // pred_region
      _
    $region13: #{tpu_custom_call.1} parent=1 // pred_fallthru
      _
    // Predicated region
    $region14: #{tpu_custom_call.1} parent=1 // pred_check
      _
    $region15: #{tpu_custom_call.1} parent=1 // pred_check_branch
      %46 = sbr.rel (0) target = $region17
    $region16: #{tpu_custom_call.1} parent=1 // pred_region
      %s48 = ssub.s32 768, 768
      %49 = vsyncadd [#allocation6], %s48
      %s50 = sshll.u32 [#allocation7], 4
      %s51 = int_to_ptr.vmem [resolvable:$true] %s50
      %56 = dma.hbm_to_vmem [thread:$0]  %s3, 768, %s51, [#allocation6], 384, 384, 24
    $region17: #{tpu_custom_call.1} parent=1 // pred_fallthru
      _
    // Predicated region
    $region18: #{tpu_custom_call.1} parent=1 // pred_check
      _
    $region19: #{tpu_custom_call.1} parent=1 // pred_check_branch
      %58 = sbr.rel (0) target = $region21
    $region20: #{tpu_custom_call.1} parent=1 // pred_region
      %s60 = ssub.s32 6144, 6144
      %61 = vsyncadd [#allocation9], %s60
      %s62 = sshll.u32 [#allocation8], 4
      %s63 = int_to_ptr.vmem [resolvable:$true] %s62
      %68 = dma.hbm_to_vmem [thread:$0]  %s4, 6144, %s63, [#allocation9], 384, 384, 24
    $region21: #{tpu_custom_call.1} parent=1 // pred_fallthru
      _
    // Predicated region
    $region22: #{tpu_custom_call.1} parent=1 // pred_check
      _
    $region23: #{tpu_custom_call.1} parent=1 // pred_check_branch
      %70 = sbr.rel (0) target = $region25
    $region24: #{tpu_custom_call.1} parent=1 // pred_region
      _
    $region25: #{tpu_custom_call.1} parent=1 // pred_fallthru
      _
    // Predicated region
    $region26: #{tpu_custom_call.1} parent=1 // pred_check
      _
    $region27: #{tpu_custom_call.1} parent=1 // pred_check_branch
      %72 = sbr.rel (0) target = $region29
    $region28: #{tpu_custom_call.1} parent=1 // pred_region
      _
    $region29: #{tpu_custom_call.1} parent=1 // pred_fallthru
      _
    // Predicated region
    $region30: #{tpu_custom_call.1} parent=1 // pred_check
      _
    $region31: #{tpu_custom_call.1} parent=1 // pred_check_branch
      %74 = sbr.rel (0) target = $region33
    $region32: #{tpu_custom_call.1} parent=1 // pred_region
      %s76 = ssub.s32 768, 768
      %77 = vsyncadd [#allocation9], %s76
      %s78 = sshll.u32 [#allocation10], 4
      %s79 = int_to_ptr.vmem [resolvable:$true] %s78
      %84 = dma.hbm_to_vmem [thread:$0]  %s7, 768, %s79, [#allocation9], 384, 384, 24
    $region33: #{tpu_custom_call.1} parent=1 // pred_fallthru
      _
    // Predicated region
    $region34: #{tpu_custom_call.1} parent=1 // pred_check
      _
    $region35: #{tpu_custom_call.1} parent=1 // pred_check_branch
      %86 = sbr.rel (0) target = $region37
    $region36: #{tpu_custom_call.1} parent=1 // pred_region
      %s88 = ssub.s32 6144, 6144
      %89 = vsyncadd [#allocation12], %s88
      %s90 = sshll.u32 [#allocation11], 4
      %s91 = int_to_ptr.vmem [resolvable:$true] %s90
      %96 = dma.hbm_to_vmem [thread:$0]  %s8, 6144, %s91, [#allocation12], 384, 384, 24
    $region37: #{tpu_custom_call.1} parent=1 // pred_fallthru
      _
    // Predicated region
    $region38: #{tpu_custom_call.1} parent=1 // pred_check
      _
    $region39: #{tpu_custom_call.1} parent=1 // pred_check_branch
      %98 = sbr.rel (0) target = $region41
    $region40: #{tpu_custom_call.1} parent=1 // pred_region
      _
    $region41: #{tpu_custom_call.1} parent=1 // pred_fallthru
      _
    // Predicated region
    $region42: #{tpu_custom_call.1} parent=1 // pred_check
      _
    $region43: #{tpu_custom_call.1} parent=1 // pred_check_branch
      %100 = sbr.rel (0) target = $region45
    $region44: #{tpu_custom_call.1} parent=1 // pred_region
      _
    $region45: #{tpu_custom_call.1} parent=1 // pred_fallthru
      _
    // Predicated region
    $region46: #{tpu_custom_call.1} parent=1 // pred_check
      _
    $region47: #{tpu_custom_call.1} parent=1 // pred_check_branch
      %102 = sbr.rel (0) target = $region49
    $region48: #{tpu_custom_call.1} parent=1 // pred_region
      %103 = dma.done [#allocation3], 256
    $region49: #{tpu_custom_call.1} parent=1 // pred_fallthru
      _
    // Predicated region
    $region50: #{tpu_custom_call.1} parent=1 // pred_check
      _
    $region51: #{tpu_custom_call.1} parent=1 // pred_check_branch
      %105 = sbr.rel (0) target = $region53
    $region52: #{tpu_custom_call.1} parent=1 // pred_region
      %106 = dma.done [#allocation6], 32
    $region53: #{tpu_custom_call.1} parent=1 // pred_fallthru
      _
    // Predicated region
    $region54: #{tpu_custom_call.1} parent=1 // pred_check
      _
    $region55: #{tpu_custom_call.1} parent=1 // pred_check_branch
      %108 = sbr.rel (0) target = $region57
    $region56: #{tpu_custom_call.1} parent=1 // pred_region
      %109 = dma.done [#allocation6], 768
    $region57: #{tpu_custom_call.1} parent=1 // pred_fallthru
      _
    // Predicated region
    $region58: #{tpu_custom_call.1} parent=1 // pred_check
      _
    $region59: #{tpu_custom_call.1} parent=1 // pred_check_branch
      %111 = sbr.rel (0) target = $region61
    $region60: #{tpu_custom_call.1} parent=1 // pred_region
      %112 = dma.done [#allocation9], 6144
    $region61: #{tpu_custom_call.1} parent=1 // pred_fallthru
      _
    // Predicated region
    $region62: #{tpu_custom_call.1} parent=1 // pred_check
      _
    $region63: #{tpu_custom_call.1} parent=1 // pred_check_branch
      %114 = sbr.rel (0) target = $region65
    $region64: #{tpu_custom_call.1} parent=1 // pred_region
      %115 = dma.done [#allocation9], 768
    $region65: #{tpu_custom_call.1} parent=1 // pred_fallthru
      _
    // Predicated region
    $region66: #{tpu_custom_call.1} parent=1 // pred_check
      _
    $region67: #{tpu_custom_call.1} parent=1 // pred_check_branch
      %117 = sbr.rel (0) target = $region69
    $region68: #{tpu_custom_call.1} parent=1 // pred_region
      %118 = dma.done [#allocation12], 6144
    $region69: #{tpu_custom_call.1} parent=1 // pred_fallthru
      _
    %v119 = vld [vmem:[%s2] sm:$0x3]
    %v120 = vld [vmem:[#allocation7] sm:$0xff]
    %v121 = vld [vmem:[#allocation7 + $0x8] sm:$0xff]
    %v122 = vld [vmem:[#allocation7 + $0x10] sm:$0xff]
    %v123 = vld [vmem:[#allocation7 + $0x18] sm:$0xff]
    %v124 = vld [vmem:[#allocation7 + $0x20] sm:$0xff]
    %v125 = vld [vmem:[#allocation7 + $0x28] sm:$0xff]
    %v126 = vld [vmem:[#allocation8] sm:$0xff]
    %v127 = vld [vmem:[#allocation8 + $0x8] sm:$0xff]
    %v128 = vld [vmem:[#allocation8 + $0x10] sm:$0xff]
    %v129 = vld [vmem:[#allocation8 + $0x18] sm:$0xff]
    %v130 = vld [vmem:[#allocation8 + $0x20] sm:$0xff]
    %v131 = vld [vmem:[#allocation8 + $0x28] sm:$0xff]
    %v132 = vld [vmem:[#allocation8 + $0x30] sm:$0xff]
    %v133 = vld [vmem:[#allocation8 + $0x38] sm:$0xff]
    %v134 = vld [vmem:[#allocation8 + $0x40] sm:$0xff]
    %v135 = vld [vmem:[#allocation8 + $0x48] sm:$0xff]
    %v136 = vld [vmem:[#allocation8 + $0x50] sm:$0xff]
    %v137 = vld [vmem:[#allocation8 + $0x58] sm:$0xff]
    %v138 = vld [vmem:[#allocation8 + $0x60] sm:$0xff]
    %v139 = vld [vmem:[#allocation8 + $0x68] sm:$0xff]
    %v140 = vld [vmem:[#allocation8 + $0x70] sm:$0xff]
    %v141 = vld [vmem:[#allocation8 + $0x78] sm:$0xff]
    %v142 = vld [vmem:[#allocation8 + $0x80] sm:$0xff]
    %v143 = vld [vmem:[#allocation8 + $0x88] sm:$0xff]
    %v144 = vld [vmem:[#allocation8 + $0x90] sm:$0xff]
    %v145 = vld [vmem:[#allocation8 + $0x98] sm:$0xff]
    %v146 = vld [vmem:[#allocation8 + $0xa0] sm:$0xff]
    %v147 = vld [vmem:[#allocation8 + $0xa8] sm:$0xff]
    %v148 = vld [vmem:[#allocation8 + $0xb0] sm:$0xff]
    %v149 = vld [vmem:[#allocation8 + $0xb8] sm:$0xff]
    %v150 = vld [vmem:[#allocation8 + $0xc0] sm:$0xff]
    %v151 = vld [vmem:[#allocation8 + $0xc8] sm:$0xff]
    %v152 = vld [vmem:[#allocation8 + $0xd0] sm:$0xff]
    %v153 = vld [vmem:[#allocation8 + $0xd8] sm:$0xff]
    %v154 = vld [vmem:[#allocation8 + $0xe0] sm:$0xff]
    %v155 = vld [vmem:[#allocation8 + $0xe8] sm:$0xff]
    %v156 = vld [vmem:[#allocation8 + $0xf0] sm:$0xff]
    %v157 = vld [vmem:[#allocation8 + $0xf8] sm:$0xff]
    %v158 = vld [vmem:[#allocation8 + $0x100] sm:$0xff]
    %v159 = vld [vmem:[#allocation8 + $0x108] sm:$0xff]
    %v160 = vld [vmem:[#allocation8 + $0x110] sm:$0xff]
    %v161 = vld [vmem:[#allocation8 + $0x118] sm:$0xff]
    %v162 = vld [vmem:[#allocation8 + $0x120] sm:$0xff]
    %v163 = vld [vmem:[#allocation8 + $0x128] sm:$0xff]
    %v164 = vld [vmem:[#allocation8 + $0x130] sm:$0xff]
    %v165 = vld [vmem:[#allocation8 + $0x138] sm:$0xff]
    %v166 = vld [vmem:[#allocation8 + $0x140] sm:$0xff]
    %v167 = vld [vmem:[#allocation8 + $0x148] sm:$0xff]
    %v168 = vld [vmem:[#allocation8 + $0x150] sm:$0xff]
    %v169 = vld [vmem:[#allocation8 + $0x158] sm:$0xff]
    %v170 = vld [vmem:[#allocation8 + $0x160] sm:$0xff]
    %v171 = vld [vmem:[#allocation8 + $0x168] sm:$0xff]
    %v172 = vld [vmem:[#allocation8 + $0x170] sm:$0xff]
    %v173 = vld [vmem:[#allocation8 + $0x178] sm:$0xff]
    %v174 = vld [vmem:[%s5] sm:$0x7]
    %v175 = vld [vmem:[%s6] sm:$0x7]
    %v176 = vld [vmem:[#allocation2] sm:$0x3]
    %v178 = vlaneseq
    %v179 = vshrl.u32 %v178, 7
    %v180 = vsub.s32 0, %v179
    %v181 = vrot.slane %v174, %v180
    %v182 = vlaneseq
    %v183 = vshrl.u32 %v182, 7
    %v184 = vsub.s32 1, %v183
    %v185 = vrot.slane %v174, %v184
    %v186 = vlaneseq
    %v187 = vshrl.u32 %v186, 7
    %v188 = vsub.s32 2, %v187
    %v189 = vrot.slane %v174, %v188
    %vm193 = vcmask 130048
    %v195 = vsel %vm193, %v176, 0
    %197 = vmatprep.subr.mxu0 %v121
    %198 = vmatpush1.msra.mxu0 %v120
    %199 = vmatprep.subr.mxu0 %v124
    %200 = vmatpush1.msra.mxu0 %v123
    %201 = vmatprep.subr.mxu0 0.0
    %202 = vmatpush1.msra.mxu0 0.0
    %203 = vmatprep.subr.mxu0 0.0
    %204 = vmatpush1.msra.mxu0 0.0
    %205 = vmatprep.subr.mxu0 0.0
    %206 = vmatpush1.msra.mxu0 0.0
    %207 = vmatprep.subr.mxu0 0.0
    %208 = vmatpush1.msra.mxu0 0.0
    %209 = vmatprep.subr.mxu0 0.0
    %210 = vmatpush1.msra.mxu0 0.0
    %211 = vmatprep.subr.mxu0 0.0
    %212 = vmatpush1.msra.mxu0 0.0
    %213 = vmatprep.subr.mxu0 0.0
    %214 = vmatpush1.msra.mxu0 0.0
    %215 = vmatprep.subr.mxu0 0.0
    %216 = vmatpush1.msra.mxu0 0.0
    %217 = vmatprep.subr.mxu0 0.0
    %218 = vmatpush1.msra.mxu0 0.0
    %219 = vmatprep.subr.mxu0 0.0
    %220 = vmatpush1.msra.mxu0 0.0
    %221 = vmatprep.subr.mxu0 0.0
    %222 = vmatpush1.msra.mxu0 0.0
    %223 = vmatprep.subr.mxu0 0.0
    %224 = vmatpush1.msra.mxu0 0.0
    %225 = vmatprep.subr.mxu0 0.0
    %226 = vmatpush1.msra.mxu0 0.0
    %227 = vmatprep.subr.mxu0 0.0
    %228 = vmatpush1.msra.mxu0 0.0
    %229 = vmatprep.subr.mxu0 0.0
    %230 = vmatpush1.msra.mxu0 0.0
    %231 = vmatprep.subr.mxu0 0.0
    %232 = vmatpush1.msra.mxu0 0.0
    %233 = vmatprep.subr.mxu0 0.0
    %234 = vmatpush1.msra.mxu0 0.0
    %235 = vmatprep.subr.mxu0 0.0
    %236 = vmatpush1.msra.mxu0 0.0
    %237 = vmatprep.subr.mxu0 0.0
    %238 = vmatpush1.msra.mxu0 0.0
    %239 = vmatprep.subr.mxu0 0.0
    %240 = vmatpush1.msra.mxu0 0.0
    %241 = vmatprep.subr.mxu0 0.0
    %242 = vmatpush1.msra.mxu0 0.0
    %243 = vmatprep.subr.mxu0 0.0
    %244 = vmatpush1.msra.mxu0 0.0
    %245 = vmatprep.subr.mxu0 0.0
    %246 = vmatpush1.msra.mxu0 0.0
    %247 = vmatprep.subr.mxu0 0.0
    %248 = vmatpush1.msra.mxu0 0.0
    %249 = vmatprep.subr.mxu0 0.0
    %250 = vmatpush1.msra.mxu0 0.0
    %251 = vmatprep.subr.mxu0 0.0
    %252 = vmatpush1.msra.mxu0 0.0
    %253 = vmatprep.subr.mxu0 0.0
    %254 = vmatpush1.msra.mxu0 0.0
    %255 = vmatprep.subr.mxu0 0.0
    %256 = vmatpush1.msra.mxu0 0.0
    %257 = vmatprep.subr.mxu0 0.0
    %258 = vmatpush1.msra.mxu0 0.0
    %259 = vmatprep.subr.mxu0 0.0
    %260 = vmatpush1.msra.mxu0 0.0
    %261 = vmatprep.mubr.f32.mxu0 0.0
    %262 = vmatmul.mubr.f32.gmra.mrb[0].mxu0 %v195
    %v263 = vpop.f32.mrb[0].mxu0
    %v264 = vadd.f32 %v181, %v263
    %v265 = vpop.f32.mrb[0].mxu0
    %v266 = vadd.f32 %v185, %v265
    %267 = vdwg.mxu0
    %268 = vmatprep.subr.mxu0 0.0
    %269 = vmatpush1.msra.mxu0 %v122
    %270 = vmatprep.subr.mxu0 0.0
    %271 = vmatpush1.msra.mxu0 %v125
    %272 = vmatprep.subr.mxu0 0.0
    %273 = vmatpush1.msra.mxu0 0.0
    %274 = vmatprep.subr.mxu0 0.0
    %275 = vmatpush1.msra.mxu0 0.0
    %276 = vmatprep.subr.mxu0 0.0
    %277 = vmatpush1.msra.mxu0 0.0
    %278 = vmatprep.subr.mxu0 0.0
    %279 = vmatpush1.msra.mxu0 0.0
    %280 = vmatprep.subr.mxu0 0.0
    %281 = vmatpush1.msra.mxu0 0.0
    %282 = vmatprep.subr.mxu0 0.0
    %283 = vmatpush1.msra.mxu0 0.0
    %284 = vmatprep.subr.mxu0 0.0
    %285 = vmatpush1.msra.mxu0 0.0
    %286 = vmatprep.subr.mxu0 0.0
    %287 = vmatpush1.msra.mxu0 0.0
    %288 = vmatprep.subr.mxu0 0.0
    %289 = vmatpush1.msra.mxu0 0.0
    %290 = vmatprep.subr.mxu0 0.0
    %291 = vmatpush1.msra.mxu0 0.0
    %292 = vmatprep.subr.mxu0 0.0
    %293 = vmatpush1.msra.mxu0 0.0
    %294 = vmatprep.subr.mxu0 0.0
    %295 = vmatpush1.msra.mxu0 0.0
    %296 = vmatprep.subr.mxu0 0.0
    %297 = vmatpush1.msra.mxu0 0.0
    %298 = vmatprep.subr.mxu0 0.0
    %299 = vmatpush1.msra.mxu0 0.0
    %300 = vmatprep.subr.mxu0 0.0
    %301 = vmatpush1.msra.mxu0 0.0
    %302 = vmatprep.subr.mxu0 0.0
    %303 = vmatpush1.msra.mxu0 0.0
    %304 = vmatprep.subr.mxu0 0.0
    %305 = vmatpush1.msra.mxu0 0.0
    %306 = vmatprep.subr.mxu0 0.0
    %307 = vmatpush1.msra.mxu0 0.0
    %308 = vmatprep.subr.mxu0 0.0
    %309 = vmatpush1.msra.mxu0 0.0
    %310 = vmatprep.subr.mxu0 0.0
    %311 = vmatpush1.msra.mxu0 0.0
    %312 = vmatprep.subr.mxu0 0.0
    %313 = vmatpush1.msra.mxu0 0.0
    %314 = vmatprep.subr.mxu0 0.0
    %315 = vmatpush1.msra.mxu0 0.0
    %316 = vmatprep.subr.mxu0 0.0
    %317 = vmatpush1.msra.mxu0 0.0
    %318 = vmatprep.subr.mxu0 0.0
    %319 = vmatpush1.msra.mxu0 0.0
    %320 = vmatprep.subr.mxu0 0.0
    %321 = vmatpush1.msra.mxu0 0.0
    %322 = vmatprep.subr.mxu0 0.0
    %323 = vmatpush1.msra.mxu0 0.0
    %324 = vmatprep.subr.mxu0 0.0
    %325 = vmatpush1.msra.mxu0 0.0
    %326 = vmatprep.subr.mxu0 0.0
    %327 = vmatpush1.msra.mxu0 0.0
    %328 = vmatprep.subr.mxu0 0.0
    %329 = vmatpush1.msra.mxu0 0.0
    %330 = vmatprep.subr.mxu0 0.0
    %331 = vmatpush1.msra.mxu0 0.0
    %332 = vmatprep.mubr.f32.mxu0 0.0
    %333 = vmatmul.mubr.f32.gmra.mrb[0].mxu0 %v195
    %v334 = vpop.f32.mrb[0].mxu0
    %v335 = vadd.f32 %v189, %v334
    %v336 = vpop.f32.mrb[0].mxu0
    %337 = vdwg.mxu0
    %v339 = vlaneseq
    %v340 = vshrl.u32 %v339, 7
    %v341 = vsub.s32 0, %v340
    %v342 = vrot.slane %v175, %v341
    %v343 = vlaneseq
    %v344 = vshrl.u32 %v343, 7
    %v345 = vsub.s32 1, %v344
    %v346 = vrot.slane %v175, %v345
    %v347 = vlaneseq
    %v348 = vshrl.u32 %v347, 7
    %v349 = vsub.s32 2, %v348
    %v350 = vrot.slane %v175, %v349
    %354 = vmatprep.subr.mxu0 %v127
    %355 = vmatpush1.msra.mxu0 %v126
    %356 = vmatprep.subr.mxu0 %v130
    %357 = vmatpush1.msra.mxu0 %v129
    %358 = vmatprep.subr.mxu0 %v133
    %359 = vmatpush1.msra.mxu0 %v132
    %360 = vmatprep.subr.mxu0 %v136
    %361 = vmatpush1.msra.mxu0 %v135
    %362 = vmatprep.subr.mxu0 %v139
    %363 = vmatpush1.msra.mxu0 %v138
    %364 = vmatprep.subr.mxu0 %v142
    %365 = vmatpush1.msra.mxu0 %v141
    %366 = vmatprep.subr.mxu0 %v145
    %367 = vmatpush1.msra.mxu0 %v144
    %368 = vmatprep.subr.mxu0 %v148
    %369 = vmatpush1.msra.mxu0 %v147
    %370 = vmatprep.subr.mxu0 %v151
    %371 = vmatpush1.msra.mxu0 %v150
    %372 = vmatprep.subr.mxu0 %v154
    %373 = vmatpush1.msra.mxu0 %v153
    %374 = vmatprep.subr.mxu0 %v157
    %375 = vmatpush1.msra.mxu0 %v156
    %376 = vmatprep.subr.mxu0 %v160
    %377 = vmatpush1.msra.mxu0 %v159
    %378 = vmatprep.subr.mxu0 %v163
    %379 = vmatpush1.msra.mxu0 %v162
    %380 = vmatprep.subr.mxu0 %v166
    %381 = vmatpush1.msra.mxu0 %v165
    %382 = vmatprep.subr.mxu0 %v169
    %383 = vmatpush1.msra.mxu0 %v168
    %384 = vmatprep.subr.mxu0 %v172
    %385 = vmatpush1.msra.mxu0 %v171
    %386 = vmatprep.subr.mxu0 0.0
    %387 = vmatpush1.msra.mxu0 0.0
    %388 = vmatprep.subr.mxu0 0.0
    %389 = vmatpush1.msra.mxu0 0.0
    %390 = vmatprep.subr.mxu0 0.0
    %391 = vmatpush1.msra.mxu0 0.0
    %392 = vmatprep.subr.mxu0 0.0
    %393 = vmatpush1.msra.mxu0 0.0
    %394 = vmatprep.subr.mxu0 0.0
    %395 = vmatpush1.msra.mxu0 0.0
    %396 = vmatprep.subr.mxu0 0.0
    %397 = vmatpush1.msra.mxu0 0.0
    %398 = vmatprep.subr.mxu0 0.0
    %399 = vmatpush1.msra.mxu0 0.0
    %400 = vmatprep.subr.mxu0 0.0
    %401 = vmatpush1.msra.mxu0 0.0
    %402 = vmatprep.subr.mxu0 0.0
    %403 = vmatpush1.msra.mxu0 0.0
    %404 = vmatprep.subr.mxu0 0.0
    %405 = vmatpush1.msra.mxu0 0.0
    %406 = vmatprep.subr.mxu0 0.0
    %407 = vmatpush1.msra.mxu0 0.0
    %408 = vmatprep.subr.mxu0 0.0
    %409 = vmatpush1.msra.mxu0 0.0
    %410 = vmatprep.subr.mxu0 0.0
    %411 = vmatpush1.msra.mxu0 0.0
    %412 = vmatprep.subr.mxu0 0.0
    %413 = vmatpush1.msra.mxu0 0.0
    %414 = vmatprep.subr.mxu0 0.0
    %415 = vmatpush1.msra.mxu0 0.0
    %416 = vmatprep.subr.mxu0 0.0
    %417 = vmatpush1.msra.mxu0 0.0
    %418 = vmatprep.mubr.f32.mxu0 0.0
    %419 = vmatmul.mubr.f32.gmra.mrb[0].mxu0 0.0
    %v420 = vpop.f32.mrb[0].mxu0
    %v421 = vadd.f32 %v342, %v420
    %v422 = vpop.f32.mrb[0].mxu0
    %v423 = vadd.f32 %v346, %v422
    %424 = vdwg.mxu0
    %425 = vmatprep.subr.mxu0 0.0
    %426 = vmatpush1.msra.mxu0 %v128
    %427 = vmatprep.subr.mxu0 0.0
    %428 = vmatpush1.msra.mxu0 %v131
    %429 = vmatprep.subr.mxu0 0.0
    %430 = vmatpush1.msra.mxu0 %v134
    %431 = vmatprep.subr.mxu0 0.0
    %432 = vmatpush1.msra.mxu0 %v137
    %433 = vmatprep.subr.mxu0 0.0
    %434 = vmatpush1.msra.mxu0 %v140
    %435 = vmatprep.subr.mxu0 0.0
    %436 = vmatpush1.msra.mxu0 %v143
    %437 = vmatprep.subr.mxu0 0.0
    %438 = vmatpush1.msra.mxu0 %v146
    %439 = vmatprep.subr.mxu0 0.0
    %440 = vmatpush1.msra.mxu0 %v149
    %441 = vmatprep.subr.mxu0 0.0
    %442 = vmatpush1.msra.mxu0 %v152
    %443 = vmatprep.subr.mxu0 0.0
    %444 = vmatpush1.msra.mxu0 %v155
    %445 = vmatprep.subr.mxu0 0.0
    %446 = vmatpush1.msra.mxu0 %v158
    %447 = vmatprep.subr.mxu0 0.0
    %448 = vmatpush1.msra.mxu0 %v161
    %449 = vmatprep.subr.mxu0 0.0
    %450 = vmatpush1.msra.mxu0 %v164
    %451 = vmatprep.subr.mxu0 0.0
    %452 = vmatpush1.msra.mxu0 %v167
    %453 = vmatprep.subr.mxu0 0.0
    %454 = vmatpush1.msra.mxu0 %v170
    %455 = vmatprep.subr.mxu0 0.0
    %456 = vmatpush1.msra.mxu0 %v173
    %457 = vmatprep.subr.mxu0 0.0
    %458 = vmatpush1.msra.mxu0 0.0
    %459 = vmatprep.subr.mxu0 0.0
    %460 = vmatpush1.msra.mxu0 0.0
    %461 = vmatprep.subr.mxu0 0.0
    %462 = vmatpush1.msra.mxu0 0.0
    %463 = vmatprep.subr.mxu0 0.0
    %464 = vmatpush1.msra.mxu0 0.0
    %465 = vmatprep.subr.mxu0 0.0
    %466 = vmatpush1.msra.mxu0 0.0
    %467 = vmatprep.subr.mxu0 0.0
    %468 = vmatpush1.msra.mxu0 0.0
    %469 = vmatprep.subr.mxu0 0.0
    %470 = vmatpush1.msra.mxu0 0.0
    %471 = vmatprep.subr.mxu0 0.0
    %472 = vmatpush1.msra.mxu0 0.0
    %473 = vmatprep.subr.mxu0 0.0
    %474 = vmatpush1.msra.mxu0 0.0
    %475 = vmatprep.subr.mxu0 0.0
    %476 = vmatpush1.msra.mxu0 0.0
    %477 = vmatprep.subr.mxu0 0.0
    %478 = vmatpush1.msra.mxu0 0.0
    %479 = vmatprep.subr.mxu0 0.0
    %480 = vmatpush1.msra.mxu0 0.0
    %481 = vmatprep.subr.mxu0 0.0
    %482 = vmatpush1.msra.mxu0 0.0
    %483 = vmatprep.subr.mxu0 0.0
    %484 = vmatpush1.msra.mxu0 0.0
    %485 = vmatprep.subr.mxu0 0.0
    %486 = vmatpush1.msra.mxu0 0.0
    %487 = vmatprep.subr.mxu0 0.0
    %488 = vmatpush1.msra.mxu0 0.0
    %489 = vmatprep.mubr.f32.mxu0 0.0
    %490 = vmatmul.mubr.f32.gmra.mrb[0].mxu0 0.0
    %v491 = vpop.f32.mrb[0].mxu0
    %v492 = vadd.f32 %v350, %v491
    %v493 = vpop.f32.mrb[0].mxu0
    %494 = vdwg.mxu0
    %v495 = vadd.f32 %v264, %v421
    %v496 = vxor.u32 %v495, 2147483648
    %v497 = vmul.f32 %v496, 1.442695
    %v498 = vpow.pop %v497
    %v499 = vadd.f32 %v498, 1.0
    %v500 = vrcp.pop %v499
    %v501 = vmul.f32 1.0, %v500
    %v502 = vadd.f32 %v266, %v423
    %v503 = vxor.u32 %v502, 2147483648
    %v504 = vmul.f32 %v503, 1.442695
    %v505 = vpow.pop %v504
    %v506 = vadd.f32 %v505, 1.0
    %v507 = vrcp.pop %v506
    %v508 = vmul.f32 1.0, %v507
    %v509 = vmul.f32 %v501, %v492
    %v510 = vadd.f32 %v335, %v509
    %v511 = vtanh.pop %v510
    %v512 = vsub.f32 1.0, %v508
    %v513 = vmul.f32 %v512, %v511
    %v514 = vmul.f32 %v508, 0.0
    %v515 = vadd.f32 %v513, %v514
    %vm516 = vcmp.gt.s32.totalorder %v119, 0
    %v517 = vsel %vm516, 1, 0
    %518 = vset.pattern.permute.xlu0 0
    %519 = vperm.xlu0 %518, %v517
    %v520 = vpop.permute.xlu0 %519
    %vm521 = vcmp.eq.s32.totalorder %v520, 1
    %v522 = vsel %vm521, %v515, 0.0
    %s523 = scalar_lea.vmem [#allocation2], 2
    %v524 = vld [vmem:[%s523] sm:$0x3]
    %v526 = vsel %vm193, %v524, 0
    %528 = vmatprep.subr.mxu0 %v121
    %529 = vmatpush1.msra.mxu0 %v120
    %530 = vmatprep.subr.mxu0 %v124
    %531 = vmatpush1.msra.mxu0 %v123
    %532 = vmatprep.subr.mxu0 0.0
    %533 = vmatpush1.msra.mxu0 0.0
    %534 = vmatprep.subr.mxu0 0.0
    %535 = vmatpush1.msra.mxu0 0.0
    %536 = vmatprep.subr.mxu0 0.0
    %537 = vmatpush1.msra.mxu0 0.0
    %538 = vmatprep.subr.mxu0 0.0
    %539 = vmatpush1.msra.mxu0 0.0
    %540 = vmatprep.subr.mxu0 0.0
    %541 = vmatpush1.msra.mxu0 0.0
    %542 = vmatprep.subr.mxu0 0.0
    %543 = vmatpush1.msra.mxu0 0.0
    %544 = vmatprep.subr.mxu0 0.0
    %545 = vmatpush1.msra.mxu0 0.0
    %546 = vmatprep.subr.mxu0 0.0
    %547 = vmatpush1.msra.mxu0 0.0
    %548 = vmatprep.subr.mxu0 0.0
    %549 = vmatpush1.msra.mxu0 0.0
    %550 = vmatprep.subr.mxu0 0.0
    %551 = vmatpush1.msra.mxu0 0.0
    %552 = vmatprep.subr.mxu0 0.0
    %553 = vmatpush1.msra.mxu0 0.0
    %554 = vmatprep.subr.mxu0 0.0
    %555 = vmatpush1.msra.mxu0 0.0
    %556 = vmatprep.subr.mxu0 0.0
    %557 = vmatpush1.msra.mxu0 0.0
    %558 = vmatprep.subr.mxu0 0.0
    %559 = vmatpush1.msra.mxu0 0.0
    %560 = vmatprep.subr.mxu0 0.0
    %561 = vmatpush1.msra.mxu0 0.0
    %562 = vmatprep.subr.mxu0 0.0
    %563 = vmatpush1.msra.mxu0 0.0
    %564 = vmatprep.subr.mxu0 0.0
    %565 = vmatpush1.msra.mxu0 0.0
    %566 = vmatprep.subr.mxu0 0.0
    %567 = vmatpush1.msra.mxu0 0.0
    %568 = vmatprep.subr.mxu0 0.0
    %569 = vmatpush1.msra.mxu0 0.0
    %570 = vmatprep.subr.mxu0 0.0
    %571 = vmatpush1.msra.mxu0 0.0
    %572 = vmatprep.subr.mxu0 0.0
    %573 = vmatpush1.msra.mxu0 0.0
    %574 = vmatprep.subr.mxu0 0.0
    %575 = vmatpush1.msra.mxu0 0.0
    %576 = vmatprep.subr.mxu0 0.0
    %577 = vmatpush1.msra.mxu0 0.0
    %578 = vmatprep.subr.mxu0 0.0
    %579 = vmatpush1.msra.mxu0 0.0
    %580 = vmatprep.subr.mxu0 0.0
    %581 = vmatpush1.msra.mxu0 0.0
    %582 = vmatprep.subr.mxu0 0.0
    %583 = vmatpush1.msra.mxu0 0.0
    %584 = vmatprep.subr.mxu0 0.0
    %585 = vmatpush1.msra.mxu0 0.0
    %586 = vmatprep.subr.mxu0 0.0
    %587 = vmatpush1.msra.mxu0 0.0
    %588 = vmatprep.subr.mxu0 0.0
    %589 = vmatpush1.msra.mxu0 0.0
    %590 = vmatprep.subr.mxu0 0.0
    %591 = vmatpush1.msra.mxu0 0.0
    %592 = vmatprep.mubr.f32.mxu0 0.0
    %593 = vmatmul.mubr.f32.gmra.mrb[0].mxu0 %v526
    %v594 = vpop.f32.mrb[0].mxu0
    %v595 = vadd.f32 %v181, %v594
    %v596 = vpop.f32.mrb[0].mxu0
    %v597 = vadd.f32 %v185, %v596
    %598 = vdwg.mxu0
    %599 = vmatprep.subr.mxu0 0.0
    %600 = vmatpush1.msra.mxu0 %v122
    %601 = vmatprep.subr.mxu0 0.0
    %602 = vmatpush1.msra.mxu0 %v125
    %603 = vmatprep.subr.mxu0 0.0
    %604 = vmatpush1.msra.mxu0 0.0
    %605 = vmatprep.subr.mxu0 0.0
    %606 = vmatpush1.msra.mxu0 0.0
    %607 = vmatprep.subr.mxu0 0.0
    %608 = vmatpush1.msra.mxu0 0.0
    %609 = vmatprep.subr.mxu0 0.0
    %610 = vmatpush1.msra.mxu0 0.0
    %611 = vmatprep.subr.mxu0 0.0
    %612 = vmatpush1.msra.mxu0 0.0
    %613 = vmatprep.subr.mxu0 0.0
    %614 = vmatpush1.msra.mxu0 0.0
    %615 = vmatprep.subr.mxu0 0.0
    %616 = vmatpush1.msra.mxu0 0.0
    %617 = vmatprep.subr.mxu0 0.0
    %618 = vmatpush1.msra.mxu0 0.0
    %619 = vmatprep.subr.mxu0 0.0
    %620 = vmatpush1.msra.mxu0 0.0
    %621 = vmatprep.subr.mxu0 0.0
    %622 = vmatpush1.msra.mxu0 0.0
    %623 = vmatprep.subr.mxu0 0.0
    %624 = vmatpush1.msra.mxu0 0.0
    %625 = vmatprep.subr.mxu0 0.0
    %626 = vmatpush1.msra.mxu0 0.0
    %627 = vmatprep.subr.mxu0 0.0
    %628 = vmatpush1.msra.mxu0 0.0
    %629 = vmatprep.subr.mxu0 0.0
    %630 = vmatpush1.msra.mxu0 0.0
    %631 = vmatprep.subr.mxu0 0.0
    %632 = vmatpush1.msra.mxu0 0.0
    %633 = vmatprep.subr.mxu0 0.0
    %634 = vmatpush1.msra.mxu0 0.0
    %635 = vmatprep.subr.mxu0 0.0
    %636 = vmatpush1.msra.mxu0 0.0
    %637 = vmatprep.subr.mxu0 0.0
    %638 = vmatpush1.msra.mxu0 0.0
    %639 = vmatprep.subr.mxu0 0.0
    %640 = vmatpush1.msra.mxu0 0.0
    %641 = vmatprep.subr.mxu0 0.0
    %642 = vmatpush1.msra.mxu0 0.0
    %643 = vmatprep.subr.mxu0 0.0
    %644 = vmatpush1.msra.mxu0 0.0
    %645 = vmatprep.subr.mxu0 0.0
    %646 = vmatpush1.msra.mxu0 0.0
    %647 = vmatprep.subr.mxu0 0.0
    %648 = vmatpush1.msra.mxu0 0.0
    %649 = vmatprep.subr.mxu0 0.0
    %650 = vmatpush1.msra.mxu0 0.0
    %651 = vmatprep.subr.mxu0 0.0
    %652 = vmatpush1.msra.mxu0 0.0
    %653 = vmatprep.subr.mxu0 0.0
    %654 = vmatpush1.msra.mxu0 0.0
    %655 = vmatprep.subr.mxu0 0.0
    %656 = vmatpush1.msra.mxu0 0.0
    %657 = vmatprep.subr.mxu0 0.0
    %658 = vmatpush1.msra.mxu0 0.0
    %659 = vmatprep.subr.mxu0 0.0
    %660 = vmatpush1.msra.mxu0 0.0
    %661 = vmatprep.subr.mxu0 0.0
    %662 = vmatpush1.msra.mxu0 0.0
    %663 = vmatprep.mubr.f32.mxu0 0.0
    %664 = vmatmul.mubr.f32.gmra.mrb[0].mxu0 %v526
    %v665 = vpop.f32.mrb[0].mxu0
    %v666 = vadd.f32 %v189, %v665
    %v667 = vpop.f32.mrb[0].mxu0
    %668 = vdwg.mxu0
    %669 = vmatprep.subr.mxu0 %v127
    %670 = vmatpush1.msra.mxu0 %v126
    %671 = vmatprep.subr.mxu0 %v130
    %672 = vmatpush1.msra.mxu0 %v129
    %673 = vmatprep.subr.mxu0 %v133
    %674 = vmatpush1.msra.mxu0 %v132
    %675 = vmatprep.subr.mxu0 %v136
    %676 = vmatpush1.msra.mxu0 %v135
    %677 = vmatprep.subr.mxu0 %v139
    %678 = vmatpush1.msra.mxu0 %v138
    %679 = vmatprep.subr.mxu0 %v142
    %680 = vmatpush1.msra.mxu0 %v141
    %681 = vmatprep.subr.mxu0 %v145
    %682 = vmatpush1.msra.mxu0 %v144
    %683 = vmatprep.subr.mxu0 %v148
    %684 = vmatpush1.msra.mxu0 %v147
    %685 = vmatprep.subr.mxu0 %v151
    %686 = vmatpush1.msra.mxu0 %v150
    %687 = vmatprep.subr.mxu0 %v154
    %688 = vmatpush1.msra.mxu0 %v153
    %689 = vmatprep.subr.mxu0 %v157
    %690 = vmatpush1.msra.mxu0 %v156
    %691 = vmatprep.subr.mxu0 %v160
    %692 = vmatpush1.msra.mxu0 %v159
    %693 = vmatprep.subr.mxu0 %v163
    %694 = vmatpush1.msra.mxu0 %v162
    %695 = vmatprep.subr.mxu0 %v166
    %696 = vmatpush1.msra.mxu0 %v165
    %697 = vmatprep.subr.mxu0 %v169
    %698 = vmatpush1.msra.mxu0 %v168
    %699 = vmatprep.subr.mxu0 %v172
    %700 = vmatpush1.msra.mxu0 %v171
    %701 = vmatprep.subr.mxu0 0.0
    %702 = vmatpush1.msra.mxu0 0.0
    %703 = vmatprep.subr.mxu0 0.0
    %704 = vmatpush1.msra.mxu0 0.0
    %705 = vmatprep.subr.mxu0 0.0
    %706 = vmatpush1.msra.mxu0 0.0
    %707 = vmatprep.subr.mxu0 0.0
    %708 = vmatpush1.msra.mxu0 0.0
    %709 = vmatprep.subr.mxu0 0.0
    %710 = vmatpush1.msra.mxu0 0.0
    %711 = vmatprep.subr.mxu0 0.0
    %712 = vmatpush1.msra.mxu0 0.0
    %713 = vmatprep.subr.mxu0 0.0
    %714 = vmatpush1.msra.mxu0 0.0
    %715 = vmatprep.subr.mxu0 0.0
    %716 = vmatpush1.msra.mxu0 0.0
    %717 = vmatprep.subr.mxu0 0.0
    %718 = vmatpush1.msra.mxu0 0.0
    %719 = vmatprep.subr.mxu0 0.0
    %720 = vmatpush1.msra.mxu0 0.0
    %721 = vmatprep.subr.mxu0 0.0
    %722 = vmatpush1.msra.mxu0 0.0
    %723 = vmatprep.subr.mxu0 0.0
    %724 = vmatpush1.msra.mxu0 0.0
    %725 = vmatprep.subr.mxu0 0.0
    %726 = vmatpush1.msra.mxu0 0.0
    %727 = vmatprep.subr.mxu0 0.0
    %728 = vmatpush1.msra.mxu0 0.0
    %729 = vmatprep.subr.mxu0 0.0
    %730 = vmatpush1.msra.mxu0 0.0
    %731 = vmatprep.subr.mxu0 0.0
    %732 = vmatpush1.msra.mxu0 0.0
    %733 = vmatprep.mubr.f32.mxu0 0.0
    %734 = vmatmul.mubr.f32.gmra.mrb[0].mxu0 %v522
    %v735 = vpop.f32.mrb[0].mxu0
    %v736 = vadd.f32 %v342, %v735
    %v737 = vpop.f32.mrb[0].mxu0
    %v738 = vadd.f32 %v346, %v737
    %739 = vdwg.mxu0
    %740 = vmatprep.subr.mxu0 0.0
    %741 = vmatpush1.msra.mxu0 %v128
    %742 = vmatprep.subr.mxu0 0.0
    %743 = vmatpush1.msra.mxu0 %v131
    %744 = vmatprep.subr.mxu0 0.0
    %745 = vmatpush1.msra.mxu0 %v134
    %746 = vmatprep.subr.mxu0 0.0
    %747 = vmatpush1.msra.mxu0 %v137
    %748 = vmatprep.subr.mxu0 0.0
    %749 = vmatpush1.msra.mxu0 %v140
    %750 = vmatprep.subr.mxu0 0.0
    %751 = vmatpush1.msra.mxu0 %v143
    %752 = vmatprep.subr.mxu0 0.0
    %753 = vmatpush1.msra.mxu0 %v146
    %754 = vmatprep.subr.mxu0 0.0
    %755 = vmatpush1.msra.mxu0 %v149
    %756 = vmatprep.subr.mxu0 0.0
    %757 = vmatpush1.msra.mxu0 %v152
    %758 = vmatprep.subr.mxu0 0.0
    %759 = vmatpush1.msra.mxu0 %v155
    %760 = vmatprep.subr.mxu0 0.0
    %761 = vmatpush1.msra.mxu0 %v158
    %762 = vmatprep.subr.mxu0 0.0
    %763 = vmatpush1.msra.mxu0 %v161
    %764 = vmatprep.subr.mxu0 0.0
    %765 = vmatpush1.msra.mxu0 %v164
    %766 = vmatprep.subr.mxu0 0.0
    %767 = vmatpush1.msra.mxu0 %v167
    %768 = vmatprep.subr.mxu0 0.0
    %769 = vmatpush1.msra.mxu0 %v170
    %770 = vmatprep.subr.mxu0 0.0
    %771 = vmatpush1.msra.mxu0 %v173
    %772 = vmatprep.subr.mxu0 0.0
    %773 = vmatpush1.msra.mxu0 0.0
    %774 = vmatprep.subr.mxu0 0.0
    %775 = vmatpush1.msra.mxu0 0.0
    %776 = vmatprep.subr.mxu0 0.0
    %777 = vmatpush1.msra.mxu0 0.0
    %778 = vmatprep.subr.mxu0 0.0
    %779 = vmatpush1.msra.mxu0 0.0
    %780 = vmatprep.subr.mxu0 0.0
    %781 = vmatpush1.msra.mxu0 0.0
    %782 = vmatprep.subr.mxu0 0.0
    %783 = vmatpush1.msra.mxu0 0.0
    %784 = vmatprep.subr.mxu0 0.0
    %785 = vmatpush1.msra.mxu0 0.0
    %786 = vmatprep.subr.mxu0 0.0
    %787 = vmatpush1.msra.mxu0 0.0
    %788 = vmatprep.subr.mxu0 0.0
    %789 = vmatpush1.msra.mxu0 0.0
    %790 = vmatprep.subr.mxu0 0.0
    %791 = vmatpush1.msra.mxu0 0.0
    %792 = vmatprep.subr.mxu0 0.0
    %793 = vmatpush1.msra.mxu0 0.0
    %794 = vmatprep.subr.mxu0 0.0
    %795 = vmatpush1.msra.mxu0 0.0
    %796 = vmatprep.subr.mxu0 0.0
    %797 = vmatpush1.msra.mxu0 0.0
    %798 = vmatprep.subr.mxu0 0.0
    %799 = vmatpush1.msra.mxu0 0.0
    %800 = vmatprep.subr.mxu0 0.0
    %801 = vmatpush1.msra.mxu0 0.0
    %802 = vmatprep.subr.mxu0 0.0
    %803 = vmatpush1.msra.mxu0 0.0
    %804 = vmatprep.mubr.f32.mxu0 0.0
    %805 = vmatmul.mubr.f32.gmra.mrb[0].mxu0 %v522
    %v806 = vpop.f32.mrb[0].mxu0
    %v807 = vadd.f32 %v350, %v806
    %v808 = vpop.f32.mrb[0].mxu0
    %809 = vdwg.mxu0
    %v810 = vadd.f32 %v595, %v736
    %v811 = vxor.u32 %v810, 2147483648
    %v812 = vmul.f32 %v811, 1.442695
    %v813 = vpow.pop %v812
    %v814 = vadd.f32 %v813, 1.0
    %v815 = vrcp.pop %v814
    %v816 = vmul.f32 1.0, %v815
    %v817 = vadd.f32 %v597, %v738
    %v818 = vxor.u32 %v817, 2147483648
    %v819 = vmul.f32 %v818, 1.442695
    %v820 = vpow.pop %v819
    %v821 = vadd.f32 %v820, 1.0
    %v822 = vrcp.pop %v821
    %v823 = vmul.f32 1.0, %v822
    %v824 = vmul.f32 %v816, %v807
    %v825 = vadd.f32 %v666, %v824
    %v826 = vtanh.pop %v825
    %v827 = vsub.f32 1.0, %v823
    %v828 = vmul.f32 %v827, %v826
    %v829 = vmul.f32 %v823, %v522
    %v830 = vadd.f32 %v828, %v829
    %vm831 = vcmp.gt.s32.totalorder %v119, 1
    %v832 = vsel %vm831, 1, 0
    %833 = vset.pattern.permute.xlu0 0
    %834 = vperm.xlu0 %833, %v832
    %v835 = vpop.permute.xlu0 %834
    %vm836 = vcmp.eq.s32.totalorder %v835, 1
    %v837 = vsel %vm836, %v830, %v522
    %s838 = scalar_lea.vmem [#allocation2], 4
    %v839 = vld [vmem:[%s838] sm:$0x3]
    %v841 = vsel %vm193, %v839, 0
    %843 = vmatprep.subr.mxu0 %v121
    %844 = vmatpush1.msra.mxu0 %v120
    %845 = vmatprep.subr.mxu0 %v124
    %846 = vmatpush1.msra.mxu0 %v123
    %847 = vmatprep.subr.mxu0 0.0
    %848 = vmatpush1.msra.mxu0 0.0
    %849 = vmatprep.subr.mxu0 0.0
    %850 = vmatpush1.msra.mxu0 0.0
    %851 = vmatprep.subr.mxu0 0.0
    %852 = vmatpush1.msra.mxu0 0.0
    %853 = vmatprep.subr.mxu0 0.0
    %854 = vmatpush1.msra.mxu0 0.0
    %855 = vmatprep.subr.mxu0 0.0
    %856 = vmatpush1.msra.mxu0 0.0
    %857 = vmatprep.subr.mxu0 0.0
    %858 = vmatpush1.msra.mxu0 0.0
    %859 = vmatprep.subr.mxu0 0.0
    %860 = vmatpush1.msra.mxu0 0.0
    %861 = vmatprep.subr.mxu0 0.0
    %862 = vmatpush1.msra.mxu0 0.0
    %863 = vmatprep.subr.mxu0 0.0
    %864 = vmatpush1.msra.mxu0 0.0
    %865 = vmatprep.subr.mxu0 0.0
    %866 = vmatpush1.msra.mxu0 0.0
    %867 = vmatprep.subr.mxu0 0.0
    %868 = vmatpush1.msra.mxu0 0.0
    %869 = vmatprep.subr.mxu0 0.0
    %870 = vmatpush1.msra.mxu0 0.0
    %871 = vmatprep.subr.mxu0 0.0
    %872 = vmatpush1.msra.mxu0 0.0
    %873 = vmatprep.subr.mxu0 0.0
    %874 = vmatpush1.msra.mxu0 0.0
    %875 = vmatprep.subr.mxu0 0.0
    %876 = vmatpush1.msra.mxu0 0.0
    %877 = vmatprep.subr.mxu0 0.0
    %878 = vmatpush1.msra.mxu0 0.0
    %879 = vmatprep.subr.mxu0 0.0
    %880 = vmatpush1.msra.mxu0 0.0
    %881 = vmatprep.subr.mxu0 0.0
    %882 = vmatpush1.msra.mxu0 0.0
    %883 = vmatprep.subr.mxu0 0.0
    %884 = vmatpush1.msra.mxu0 0.0
    %885 = vmatprep.subr.mxu0 0.0
    %886 = vmatpush1.msra.mxu0 0.0
    %887 = vmatprep.subr.mxu0 0.0
    %888 = vmatpush1.msra.mxu0 0.0
    %889 = vmatprep.subr.mxu0 0.0
    %890 = vmatpush1.msra.mxu0 0.0
    %891 = vmatprep.subr.mxu0 0.0
    %892 = vmatpush1.msra.mxu0 0.0
    %893 = vmatprep.subr.mxu0 0.0
    %894 = vmatpush1.msra.mxu0 0.0
    %895 = vmatprep.subr.mxu0 0.0
    %896 = vmatpush1.msra.mxu0 0.0
    %897 = vmatprep.subr.mxu0 0.0
    %898 = vmatpush1.msra.mxu0 0.0
    %899 = vmatprep.subr.mxu0 0.0
    %900 = vmatpush1.msra.mxu0 0.0
    %901 = vmatprep.subr.mxu0 0.0
    %902 = vmatpush1.msra.mxu0 0.0
    %903 = vmatprep.subr.mxu0 0.0
    %904 = vmatpush1.msra.mxu0 0.0
    %905 = vmatprep.subr.mxu0 0.0
    %906 = vmatpush1.msra.mxu0 0.0
    %907 = vmatprep.mubr.f32.mxu0 0.0
    %908 = vmatmul.mubr.f32.gmra.mrb[0].mxu0 %v841
    %v909 = vpop.f32.mrb[0].mxu0
    %v910 = vadd.f32 %v181, %v909
    %v911 = vpop.f32.mrb[0].mxu0
    %v912 = vadd.f32 %v185, %v911
    %913 = vdwg.mxu0
    %914 = vmatprep.subr.mxu0 0.0
    %915 = vmatpush1.msra.mxu0 %v122
    %916 = vmatprep.subr.mxu0 0.0
    %917 = vmatpush1.msra.mxu0 %v125
    %918 = vmatprep.subr.mxu0 0.0
    %919 = vmatpush1.msra.mxu0 0.0
    %920 = vmatprep.subr.mxu0 0.0
    %921 = vmatpush1.msra.mxu0 0.0
    %922 = vmatprep.subr.mxu0 0.0
    %923 = vmatpush1.msra.mxu0 0.0
    %924 = vmatprep.subr.mxu0 0.0
    %925 = vmatpush1.msra.mxu0 0.0
    %926 = vmatprep.subr.mxu0 0.0
    %927 = vmatpush1.msra.mxu0 0.0
    %928 = vmatprep.subr.mxu0 0.0
    %929 = vmatpush1.msra.mxu0 0.0
    %930 = vmatprep.subr.mxu0 0.0
    %931 = vmatpush1.msra.mxu0 0.0
    %932 = vmatprep.subr.mxu0 0.0
    %933 = vmatpush1.msra.mxu0 0.0
    %934 = vmatprep.subr.mxu0 0.0
    %935 = vmatpush1.msra.mxu0 0.0
    %936 = vmatprep.subr.mxu0 0.0
    %937 = vmatpush1.msra.mxu0 0.0
    %938 = vmatprep.subr.mxu0 0.0
    %939 = vmatpush1.msra.mxu0 0.0
    %940 = vmatprep.subr.mxu0 0.0
    %941 = vmatpush1.msra.mxu0 0.0
    %942 = vmatprep.subr.mxu0 0.0
    %943 = vmatpush1.msra.mxu0 0.0
    %944 = vmatprep.subr.mxu0 0.0
    %945 = vmatpush1.msra.mxu0 0.0
    %946 = vmatprep.subr.mxu0 0.0
    %947 = vmatpush1.msra.mxu0 0.0
    %948 = vmatprep.subr.mxu0 0.0
    %949 = vmatpush1.msra.mxu0 0.0
    %950 = vmatprep.subr.mxu0 0.0
    %951 = vmatpush1.msra.mxu0 0.0
    %952 = vmatprep.subr.mxu0 0.0
    %953 = vmatpush1.msra.mxu0 0.0
    %954 = vmatprep.subr.mxu0 0.0
    %955 = vmatpush1.msra.mxu0 0.0
    %956 = vmatprep.subr.mxu0 0.0
    %957 = vmatpush1.msra.mxu0 0.0
    %958 = vmatprep.subr.mxu0 0.0
    %959 = vmatpush1.msra.mxu0 0.0
    %960 = vmatprep.subr.mxu0 0.0
    %961 = vmatpush1.msra.mxu0 0.0
    %962 = vmatprep.subr.mxu0 0.0
    %963 = vmatpush1.msra.mxu0 0.0
    %964 = vmatprep.subr.mxu0 0.0
    %965 = vmatpush1.msra.mxu0 0.0
    %966 = vmatprep.subr.mxu0 0.0
    %967 = vmatpush1.msra.mxu0 0.0
    %968 = vmatprep.subr.mxu0 0.0
    %969 = vmatpush1.msra.mxu0 0.0
    %970 = vmatprep.subr.mxu0 0.0
    %971 = vmatpush1.msra.mxu0 0.0
    %972 = vmatprep.subr.mxu0 0.0
    %973 = vmatpush1.msra.mxu0 0.0
    %974 = vmatprep.subr.mxu0 0.0
    %975 = vmatpush1.msra.mxu0 0.0
    %976 = vmatprep.subr.mxu0 0.0
    %977 = vmatpush1.msra.mxu0 0.0
    %978 = vmatprep.mubr.f32.mxu0 0.0
    %979 = vmatmul.mubr.f32.gmra.mrb[0].mxu0 %v841
    %v980 = vpop.f32.mrb[0].mxu0
    %v981 = vadd.f32 %v189, %v980
    %v982 = vpop.f32.mrb[0].mxu0
    %983 = vdwg.mxu0
    %984 = vmatprep.subr.mxu0 %v127
    %985 = vmatpush1.msra.mxu0 %v126
    %986 = vmatprep.subr.mxu0 %v130
    %987 = vmatpush1.msra.mxu0 %v129
    %988 = vmatprep.subr.mxu0 %v133
    %989 = vmatpush1.msra.mxu0 %v132
    %990 = vmatprep.subr.mxu0 %v136
    %991 = vmatpush1.msra.mxu0 %v135
    %992 = vmatprep.subr.mxu0 %v139
    %993 = vmatpush1.msra.mxu0 %v138
    %994 = vmatprep.subr.mxu0 %v142
    %995 = vmatpush1.msra.mxu0 %v141
    %996 = vmatprep.subr.mxu0 %v145
    %997 = vmatpush1.msra.mxu0 %v144
    %998 = vmatprep.subr.mxu0 %v148
    %999 = vmatpush1.msra.mxu0 %v147
    %1000 = vmatprep.subr.mxu0 %v151
    %1001 = vmatpush1.msra.mxu0 %v150
    %1002 = vmatprep.subr.mxu0 %v154
    %1003 = vmatpush1.msra.mxu0 %v153
    %1004 = vmatprep.subr.mxu0 %v157
    %1005 = vmatpush1.msra.mxu0 %v156
    %1006 = vmatprep.subr.mxu0 %v160
    %1007 = vmatpush1.msra.mxu0 %v159
    %1008 = vmatprep.subr.mxu0 %v163
    %1009 = vmatpush1.msra.mxu0 %v162
    %1010 = vmatprep.subr.mxu0 %v166
    %1011 = vmatpush1.msra.mxu0 %v165
    %1012 = vmatprep.subr.mxu0 %v169
    %1013 = vmatpush1.msra.mxu0 %v168
    %1014 = vmatprep.subr.mxu0 %v172
    %1015 = vmatpush1.msra.mxu0 %v171
    %1016 = vmatprep.subr.mxu0 0.0
    %1017 = vmatpush1.msra.mxu0 0.0
    %1018 = vmatprep.subr.mxu0 0.0
    %1019 = vmatpush1.msra.mxu0 0.0
    %1020 = vmatprep.subr.mxu0 0.0
    %1021 = vmatpush1.msra.mxu0 0.0
    %1022 = vmatprep.subr.mxu0 0.0
    %1023 = vmatpush1.msra.mxu0 0.0
    %1024 = vmatprep.subr.mxu0 0.0
    %1025 = vmatpush1.msra.mxu0 0.0
    %1026 = vmatprep.subr.mxu0 0.0
    %1027 = vmatpush1.msra.mxu0 0.0
    %1028 = vmatprep.subr.mxu0 0.0
    %1029 = vmatpush1.msra.mxu0 0.0
    %1030 = vmatprep.subr.mxu0 0.0
    %1031 = vmatpush1.msra.mxu0 0.0
    %1032 = vmatprep.subr.mxu0 0.0
    %1033 = vmatpush1.msra.mxu0 0.0
    %1034 = vmatprep.subr.mxu0 0.0
    %1035 = vmatpush1.msra.mxu0 0.0
    %1036 = vmatprep.subr.mxu0 0.0
    %1037 = vmatpush1.msra.mxu0 0.0
    %1038 = vmatprep.subr.mxu0 0.0
    %1039 = vmatpush1.msra.mxu0 0.0
    %1040 = vmatprep.subr.mxu0 0.0
    %1041 = vmatpush1.msra.mxu0 0.0
    %1042 = vmatprep.subr.mxu0 0.0
    %1043 = vmatpush1.msra.mxu0 0.0
    %1044 = vmatprep.subr.mxu0 0.0
    %1045 = vmatpush1.msra.mxu0 0.0
    %1046 = vmatprep.subr.mxu0 0.0
    %1047 = vmatpush1.msra.mxu0 0.0
    %1048 = vmatprep.mubr.f32.mxu0 0.0
    %1049 = vmatmul.mubr.f32.gmra.mrb[0].mxu0 %v837
    %v1050 = vpop.f32.mrb[0].mxu0
    %v1051 = vadd.f32 %v342, %v1050
    %v1052 = vpop.f32.mrb[0].mxu0
    %v1053 = vadd.f32 %v346, %v1052
    %1054 = vdwg.mxu0
    %1055 = vmatprep.subr.mxu0 0.0
    %1056 = vmatpush1.msra.mxu0 %v128
    %1057 = vmatprep.subr.mxu0 0.0
    %1058 = vmatpush1.msra.mxu0 %v131
    %1059 = vmatprep.subr.mxu0 0.0
    %1060 = vmatpush1.msra.mxu0 %v134
    %1061 = vmatprep.subr.mxu0 0.0
    %1062 = vmatpush1.msra.mxu0 %v137
    %1063 = vmatprep.subr.mxu0 0.0
    %1064 = vmatpush1.msra.mxu0 %v140
    %1065 = vmatprep.subr.mxu0 0.0
    %1066 = vmatpush1.msra.mxu0 %v143
    %1067 = vmatprep.subr.mxu0 0.0
    %1068 = vmatpush1.msra.mxu0 %v146
    %1069 = vmatprep.subr.mxu0 0.0
    %1070 = vmatpush1.msra.mxu0 %v149
    %1071 = vmatprep.subr.mxu0 0.0
    %1072 = vmatpush1.msra.mxu0 %v152
    %1073 = vmatprep.subr.mxu0 0.0
    %1074 = vmatpush1.msra.mxu0 %v155
    %1075 = vmatprep.subr.mxu0 0.0
    %1076 = vmatpush1.msra.mxu0 %v158
    %1077 = vmatprep.subr.mxu0 0.0
    %1078 = vmatpush1.msra.mxu0 %v161
    %1079 = vmatprep.subr.mxu0 0.0
    %1080 = vmatpush1.msra.mxu0 %v164
    %1081 = vmatprep.subr.mxu0 0.0
    %1082 = vmatpush1.msra.mxu0 %v167
    %1083 = vmatprep.subr.mxu0 0.0
    %1084 = vmatpush1.msra.mxu0 %v170
    %1085 = vmatprep.subr.mxu0 0.0
    %1086 = vmatpush1.msra.mxu0 %v173
    %1087 = vmatprep.subr.mxu0 0.0
    %1088 = vmatpush1.msra.mxu0 0.0
    %1089 = vmatprep.subr.mxu0 0.0
    %1090 = vmatpush1.msra.mxu0 0.0
    %1091 = vmatprep.subr.mxu0 0.0
    %1092 = vmatpush1.msra.mxu0 0.0
    %1093 = vmatprep.subr.mxu0 0.0
    %1094 = vmatpush1.msra.mxu0 0.0
    %1095 = vmatprep.subr.mxu0 0.0
    %1096 = vmatpush1.msra.mxu0 0.0
    %1097 = vmatprep.subr.mxu0 0.0
    %1098 = vmatpush1.msra.mxu0 0.0
    %1099 = vmatprep.subr.mxu0 0.0
    %1100 = vmatpush1.msra.mxu0 0.0
    %1101 = vmatprep.subr.mxu0 0.0
    %1102 = vmatpush1.msra.mxu0 0.0
    %1103 = vmatprep.subr.mxu0 0.0
    %1104 = vmatpush1.msra.mxu0 0.0
    %1105 = vmatprep.subr.mxu0 0.0
    %1106 = vmatpush1.msra.mxu0 0.0
    %1107 = vmatprep.subr.mxu0 0.0
    %1108 = vmatpush1.msra.mxu0 0.0
    %1109 = vmatprep.subr.mxu0 0.0
    %1110 = vmatpush1.msra.mxu0 0.0
    %1111 = vmatprep.subr.mxu0 0.0
    %1112 = vmatpush1.msra.mxu0 0.0
    %1113 = vmatprep.subr.mxu0 0.0
    %1114 = vmatpush1.msra.mxu0 0.0
    %1115 = vmatprep.subr.mxu0 0.0
    %1116 = vmatpush1.msra.mxu0 0.0
    %1117 = vmatprep.subr.mxu0 0.0
    %1118 = vmatpush1.msra.mxu0 0.0
    %1119 = vmatprep.mubr.f32.mxu0 0.0
    %1120 = vmatmul.mubr.f32.gmra.mrb[0].mxu0 %v837
    %v1121 = vpop.f32.mrb[0].mxu0
    %v1122 = vadd.f32 %v350, %v1121
    %v1123 = vpop.f32.mrb[0].mxu0
    %1124 = vdwg.mxu0
    %v1125 = vadd.f32 %v910, %v1051
    %v1126 = vxor.u32 %v1125, 2147483648
    %v1127 = vmul.f32 %v1126, 1.442695
    %v1128 = vpow.pop %v1127
    %v1129 = vadd.f32 %v1128, 1.0
    %v1130 = vrcp.pop %v1129
    %v1131 = vmul.f32 1.0, %v1130
    %v1132 = vadd.f32 %v912, %v1053
    %v1133 = vxor.u32 %v1132, 2147483648
    %v1134 = vmul.f32 %v1133, 1.442695
    %v1135 = vpow.pop %v1134
    %v1136 = vadd.f32 %v1135, 1.0
    %v1137 = vrcp.pop %v1136
    %v1138 = vmul.f32 1.0, %v1137
    %v1139 = vmul.f32 %v1131, %v1122
    %v1140 = vadd.f32 %v981, %v1139
    %v1141 = vtanh.pop %v1140
    %v1142 = vsub.f32 1.0, %v1138
    %v1143 = vmul.f32 %v1142, %v1141
    %v1144 = vmul.f32 %v1138, %v837
    %v1145 = vadd.f32 %v1143, %v1144
    %vm1146 = vcmp.gt.s32.totalorder %v119, 2
    %v1147 = vsel %vm1146, 1, 0
    %1148 = vset.pattern.permute.xlu0 0
    %1149 = vperm.xlu0 %1148, %v1147
    %v1150 = vpop.permute.xlu0 %1149
    %vm1151 = vcmp.eq.s32.totalorder %v1150, 1
    %v1152 = vsel %vm1151, %v1145, %v837
    %s1153 = scalar_lea.vmem [#allocation2], 6
    %v1154 = vld [vmem:[%s1153] sm:$0x3]
    %v1156 = vsel %vm193, %v1154, 0
    %1158 = vmatprep.subr.mxu0 %v121
    %1159 = vmatpush1.msra.mxu0 %v120
    %1160 = vmatprep.subr.mxu0 %v124
    %1161 = vmatpush1.msra.mxu0 %v123
    %1162 = vmatprep.subr.mxu0 0.0
    %1163 = vmatpush1.msra.mxu0 0.0
    %1164 = vmatprep.subr.mxu0 0.0
    %1165 = vmatpush1.msra.mxu0 0.0
    %1166 = vmatprep.subr.mxu0 0.0
    %1167 = vmatpush1.msra.mxu0 0.0
    %1168 = vmatprep.subr.mxu0 0.0
    %1169 = vmatpush1.msra.mxu0 0.0
    %1170 = vmatprep.subr.mxu0 0.0
    %1171 = vmatpush1.msra.mxu0 0.0
    %1172 = vmatprep.subr.mxu0 0.0
    %1173 = vmatpush1.msra.mxu0 0.0
    %1174 = vmatprep.subr.mxu0 0.0
    %1175 = vmatpush1.msra.mxu0 0.0
    %1176 = vmatprep.subr.mxu0 0.0
    %1177 = vmatpush1.msra.mxu0 0.0
    %1178 = vmatprep.subr.mxu0 0.0
    %1179 = vmatpush1.msra.mxu0 0.0
    %1180 = vmatprep.subr.mxu0 0.0
    %1181 = vmatpush1.msra.mxu0 0.0
    %1182 = vmatprep.subr.mxu0 0.0
    %1183 = vmatpush1.msra.mxu0 0.0
    %1184 = vmatprep.subr.mxu0 0.0
    %1185 = vmatpush1.msra.mxu0 0.0
    %1186 = vmatprep.subr.mxu0 0.0
    %1187 = vmatpush1.msra.mxu0 0.0
    %1188 = vmatprep.subr.mxu0 0.0
    %1189 = vmatpush1.msra.mxu0 0.0
    %1190 = vmatprep.subr.mxu0 0.0
    %1191 = vmatpush1.msra.mxu0 0.0
    %1192 = vmatprep.subr.mxu0 0.0
    %1193 = vmatpush1.msra.mxu0 0.0
    %1194 = vmatprep.subr.mxu0 0.0
    %1195 = vmatpush1.msra.mxu0 0.0
    %1196 = vmatprep.subr.mxu0 0.0
    %1197 = vmatpush1.msra.mxu0 0.0
    %1198 = vmatprep.subr.mxu0 0.0
    %1199 = vmatpush1.msra.mxu0 0.0
    %1200 = vmatprep.subr.mxu0 0.0
    %1201 = vmatpush1.msra.mxu0 0.0
    %1202 = vmatprep.subr.mxu0 0.0
    %1203 = vmatpush1.msra.mxu0 0.0
    %1204 = vmatprep.subr.mxu0 0.0
    %1205 = vmatpush1.msra.mxu0 0.0
    %1206 = vmatprep.subr.mxu0 0.0
    %1207 = vmatpush1.msra.mxu0 0.0
    %1208 = vmatprep.subr.mxu0 0.0
    %1209 = vmatpush1.msra.mxu0 0.0
    %1210 = vmatprep.subr.mxu0 0.0
    %1211 = vmatpush1.msra.mxu0 0.0
    %1212 = vmatprep.subr.mxu0 0.0
    %1213 = vmatpush1.msra.mxu0 0.0
    %1214 = vmatprep.subr.mxu0 0.0
    %1215 = vmatpush1.msra.mxu0 0.0
    %1216 = vmatprep.subr.mxu0 0.0
    %1217 = vmatpush1.msra.mxu0 0.0
    %1218 = vmatprep.subr.mxu0 0.0
    %1219 = vmatpush1.msra.mxu0 0.0
    %1220 = vmatprep.subr.mxu0 0.0
    %1221 = vmatpush1.msra.mxu0 0.0
    %1222 = vmatprep.mubr.f32.mxu0 0.0
    %1223 = vmatmul.mubr.f32.gmra.mrb[0].mxu0 %v1156
    %v1224 = vpop.f32.mrb[0].mxu0
    %v1225 = vadd.f32 %v181, %v1224
    %v1226 = vpop.f32.mrb[0].mxu0
    %v1227 = vadd.f32 %v185, %v1226
    %1228 = vdwg.mxu0
    %1229 = vmatprep.subr.mxu0 0.0
    %1230 = vmatpush1.msra.mxu0 %v122
    %1231 = vmatprep.subr.mxu0 0.0
    %1232 = vmatpush1.msra.mxu0 %v125
    %1233 = vmatprep.subr.mxu0 0.0
    %1234 = vmatpush1.msra.mxu0 0.0
    %1235 = vmatprep.subr.mxu0 0.0
    %1236 = vmatpush1.msra.mxu0 0.0
    %1237 = vmatprep.subr.mxu0 0.0
    %1238 = vmatpush1.msra.mxu0 0.0
    %1239 = vmatprep.subr.mxu0 0.0
    %1240 = vmatpush1.msra.mxu0 0.0
    %1241 = vmatprep.subr.mxu0 0.0
    %1242 = vmatpush1.msra.mxu0 0.0
    %1243 = vmatprep.subr.mxu0 0.0
    %1244 = vmatpush1.msra.mxu0 0.0
    %1245 = vmatprep.subr.mxu0 0.0
    %1246 = vmatpush1.msra.mxu0 0.0
    %1247 = vmatprep.subr.mxu0 0.0
    %1248 = vmatpush1.msra.mxu0 0.0
    %1249 = vmatprep.subr.mxu0 0.0
    %1250 = vmatpush1.msra.mxu0 0.0
    %1251 = vmatprep.subr.mxu0 0.0
    %1252 = vmatpush1.msra.mxu0 0.0
    %1253 = vmatprep.subr.mxu0 0.0
    %1254 = vmatpush1.msra.mxu0 0.0
    %1255 = vmatprep.subr.mxu0 0.0
    %1256 = vmatpush1.msra.mxu0 0.0
    %1257 = vmatprep.subr.mxu0 0.0
    %1258 = vmatpush1.msra.mxu0 0.0
    %1259 = vmatprep.subr.mxu0 0.0
    %1260 = vmatpush1.msra.mxu0 0.0
    %1261 = vmatprep.subr.mxu0 0.0
    %1262 = vmatpush1.msra.mxu0 0.0
    %1263 = vmatprep.subr.mxu0 0.0
    %1264 = vmatpush1.msra.mxu0 0.0
    %1265 = vmatprep.subr.mxu0 0.0
    %1266 = vmatpush1.msra.mxu0 0.0
    %1267 = vmatprep.subr.mxu0 0.0
    %1268 = vmatpush1.msra.mxu0 0.0
    %1269 = vmatprep.subr.mxu0 0.0
    %1270 = vmatpush1.msra.mxu0 0.0
    %1271 = vmatprep.subr.mxu0 0.0
    %1272 = vmatpush1.msra.mxu0 0.0
    %1273 = vmatprep.subr.mxu0 0.0
    %1274 = vmatpush1.msra.mxu0 0.0
    %1275 = vmatprep.subr.mxu0 0.0
    %1276 = vmatpush1.msra.mxu0 0.0
    %1277 = vmatprep.subr.mxu0 0.0
    %1278 = vmatpush1.msra.mxu0 0.0
    %1279 = vmatprep.subr.mxu0 0.0
    %1280 = vmatpush1.msra.mxu0 0.0
    %1281 = vmatprep.subr.mxu0 0.0
    %1282 = vmatpush1.msra.mxu0 0.0
    %1283 = vmatprep.subr.mxu0 0.0
    %1284 = vmatpush1.msra.mxu0 0.0
    %1285 = vmatprep.subr.mxu0 0.0
    %1286 = vmatpush1.msra.mxu0 0.0
    %1287 = vmatprep.subr.mxu0 0.0
    %1288 = vmatpush1.msra.mxu0 0.0
    %1289 = vmatprep.subr.mxu0 0.0
    %1290 = vmatpush1.msra.mxu0 0.0
    %1291 = vmatprep.subr.mxu0 0.0
    %1292 = vmatpush1.msra.mxu0 0.0
    %1293 = vmatprep.mubr.f32.mxu0 0.0
    %1294 = vmatmul.mubr.f32.gmra.mrb[0].mxu0 %v1156
    %v1295 = vpop.f32.mrb[0].mxu0
    %v1296 = vadd.f32 %v189, %v1295
    %v1297 = vpop.f32.mrb[0].mxu0
    %1298 = vdwg.mxu0
    %1299 = vmatprep.subr.mxu0 %v127
    %1300 = vmatpush1.msra.mxu0 %v126
    %1301 = vmatprep.subr.mxu0 %v130
    %1302 = vmatpush1.msra.mxu0 %v129
    %1303 = vmatprep.subr.mxu0 %v133
    %1304 = vmatpush1.msra.mxu0 %v132
    %1305 = vmatprep.subr.mxu0 %v136
    %1306 = vmatpush1.msra.mxu0 %v135
    %1307 = vmatprep.subr.mxu0 %v139
    %1308 = vmatpush1.msra.mxu0 %v138
    %1309 = vmatprep.subr.mxu0 %v142
    %1310 = vmatpush1.msra.mxu0 %v141
    %1311 = vmatprep.subr.mxu0 %v145
    %1312 = vmatpush1.msra.mxu0 %v144
    %1313 = vmatprep.subr.mxu0 %v148
    %1314 = vmatpush1.msra.mxu0 %v147
    %1315 = vmatprep.subr.mxu0 %v151
    %1316 = vmatpush1.msra.mxu0 %v150
    %1317 = vmatprep.subr.mxu0 %v154
    %1318 = vmatpush1.msra.mxu0 %v153
    %1319 = vmatprep.subr.mxu0 %v157
    %1320 = vmatpush1.msra.mxu0 %v156
    %1321 = vmatprep.subr.mxu0 %v160
    %1322 = vmatpush1.msra.mxu0 %v159
    %1323 = vmatprep.subr.mxu0 %v163
    %1324 = vmatpush1.msra.mxu0 %v162
    %1325 = vmatprep.subr.mxu0 %v166
    %1326 = vmatpush1.msra.mxu0 %v165
    %1327 = vmatprep.subr.mxu0 %v169
    %1328 = vmatpush1.msra.mxu0 %v168
    %1329 = vmatprep.subr.mxu0 %v172
    %1330 = vmatpush1.msra.mxu0 %v171
    %1331 = vmatprep.subr.mxu0 0.0
    %1332 = vmatpush1.msra.mxu0 0.0
    %1333 = vmatprep.subr.mxu0 0.0
    %1334 = vmatpush1.msra.mxu0 0.0
    %1335 = vmatprep.subr.mxu0 0.0
    %1336 = vmatpush1.msra.mxu0 0.0
    %1337 = vmatprep.subr.mxu0 0.0
    %1338 = vmatpush1.msra.mxu0 0.0
    %1339 = vmatprep.subr.mxu0 0.0
    %1340 = vmatpush1.msra.mxu0 0.0
    %1341 = vmatprep.subr.mxu0 0.0
    %1342 = vmatpush1.msra.mxu0 0.0
    %1343 = vmatprep.subr.mxu0 0.0
    %1344 = vmatpush1.msra.mxu0 0.0
    %1345 = vmatprep.subr.mxu0 0.0
    %1346 = vmatpush1.msra.mxu0 0.0
    %1347 = vmatprep.subr.mxu0 0.0
    %1348 = vmatpush1.msra.mxu0 0.0
    %1349 = vmatprep.subr.mxu0 0.0
    %1350 = vmatpush1.msra.mxu0 0.0
    %1351 = vmatprep.subr.mxu0 0.0
    %1352 = vmatpush1.msra.mxu0 0.0
    %1353 = vmatprep.subr.mxu0 0.0
    %1354 = vmatpush1.msra.mxu0 0.0
    %1355 = vmatprep.subr.mxu0 0.0
    %1356 = vmatpush1.msra.mxu0 0.0
    %1357 = vmatprep.subr.mxu0 0.0
    %1358 = vmatpush1.msra.mxu0 0.0
    %1359 = vmatprep.subr.mxu0 0.0
    %1360 = vmatpush1.msra.mxu0 0.0
    %1361 = vmatprep.subr.mxu0 0.0
    %1362 = vmatpush1.msra.mxu0 0.0
    %1363 = vmatprep.mubr.f32.mxu0 0.0
    %1364 = vmatmul.mubr.f32.gmra.mrb[0].mxu0 %v1152
    %v1365 = vpop.f32.mrb[0].mxu0
    %v1366 = vadd.f32 %v342, %v1365
    %v1367 = vpop.f32.mrb[0].mxu0
    %v1368 = vadd.f32 %v346, %v1367
    %1369 = vdwg.mxu0
    %1370 = vmatprep.subr.mxu0 0.0
    %1371 = vmatpush1.msra.mxu0 %v128
    %1372 = vmatprep.subr.mxu0 0.0
    %1373 = vmatpush1.msra.mxu0 %v131
    %1374 = vmatprep.subr.mxu0 0.0
    %1375 = vmatpush1.msra.mxu0 %v134
    %1376 = vmatprep.subr.mxu0 0.0
    %1377 = vmatpush1.msra.mxu0 %v137
    %1378 = vmatprep.subr.mxu0 0.0
    %1379 = vmatpush1.msra.mxu0 %v140
    %1380 = vmatprep.subr.mxu0 0.0
    %1381 = vmatpush1.msra.mxu0 %v143
    %1382 = vmatprep.subr.mxu0 0.0
    %1383 = vmatpush1.msra.mxu0 %v146
    %1384 = vmatprep.subr.mxu0 0.0
    %1385 = vmatpush1.msra.mxu0 %v149
    %1386 = vmatprep.subr.mxu0 0.0
    %1387 = vmatpush1.msra.mxu0 %v152
    %1388 = vmatprep.subr.mxu0 0.0
    %1389 = vmatpush1.msra.mxu0 %v155
    %1390 = vmatprep.subr.mxu0 0.0
    %1391 = vmatpush1.msra.mxu0 %v158
    %1392 = vmatprep.subr.mxu0 0.0
    %1393 = vmatpush1.msra.mxu0 %v161
    %1394 = vmatprep.subr.mxu0 0.0
    %1395 = vmatpush1.msra.mxu0 %v164
    %1396 = vmatprep.subr.mxu0 0.0
    %1397 = vmatpush1.msra.mxu0 %v167
    %1398 = vmatprep.subr.mxu0 0.0
    %1399 = vmatpush1.msra.mxu0 %v170
    %1400 = vmatprep.subr.mxu0 0.0
    %1401 = vmatpush1.msra.mxu0 %v173
    %1402 = vmatprep.subr.mxu0 0.0
    %1403 = vmatpush1.msra.mxu0 0.0
    %1404 = vmatprep.subr.mxu0 0.0
    %1405 = vmatpush1.msra.mxu0 0.0
    %1406 = vmatprep.subr.mxu0 0.0
    %1407 = vmatpush1.msra.mxu0 0.0
    %1408 = vmatprep.subr.mxu0 0.0
    %1409 = vmatpush1.msra.mxu0 0.0
    %1410 = vmatprep.subr.mxu0 0.0
    %1411 = vmatpush1.msra.mxu0 0.0
    %1412 = vmatprep.subr.mxu0 0.0
    %1413 = vmatpush1.msra.mxu0 0.0
    %1414 = vmatprep.subr.mxu0 0.0
    %1415 = vmatpush1.msra.mxu0 0.0
    %1416 = vmatprep.subr.mxu0 0.0
    %1417 = vmatpush1.msra.mxu0 0.0
    %1418 = vmatprep.subr.mxu0 0.0
    %1419 = vmatpush1.msra.mxu0 0.0
    %1420 = vmatprep.subr.mxu0 0.0
    %1421 = vmatpush1.msra.mxu0 0.0
    %1422 = vmatprep.subr.mxu0 0.0
    %1423 = vmatpush1.msra.mxu0 0.0
    %1424 = vmatprep.subr.mxu0 0.0
    %1425 = vmatpush1.msra.mxu0 0.0
    %1426 = vmatprep.subr.mxu0 0.0
    %1427 = vmatpush1.msra.mxu0 0.0
    %1428 = vmatprep.subr.mxu0 0.0
    %1429 = vmatpush1.msra.mxu0 0.0
    %1430 = vmatprep.subr.mxu0 0.0
    %1431 = vmatpush1.msra.mxu0 0.0
    %1432 = vmatprep.subr.mxu0 0.0
    %1433 = vmatpush1.msra.mxu0 0.0
    %1434 = vmatprep.mubr.f32.mxu0 0.0
    %1435 = vmatmul.mubr.f32.gmra.mrb[0].mxu0 %v1152
    %v1436 = vpop.f32.mrb[0].mxu0
    %v1437 = vadd.f32 %v350, %v1436
    %v1438 = vpop.f32.mrb[0].mxu0
    %1439 = vdwg.mxu0
    %v1440 = vadd.f32 %v1225, %v1366
    %v1441 = vxor.u32 %v1440, 2147483648
    %v1442 = vmul.f32 %v1441, 1.442695
    %v1443 = vpow.pop %v1442
    %v1444 = vadd.f32 %v1443, 1.0
    %v1445 = vrcp.pop %v1444
    %v1446 = vmul.f32 1.0, %v1445
    %v1447 = vadd.f32 %v1227, %v1368
    %v1448 = vxor.u32 %v1447, 2147483648
    %v1449 = vmul.f32 %v1448, 1.442695
    %v1450 = vpow.pop %v1449
    %v1451 = vadd.f32 %v1450, 1.0
    %v1452 = vrcp.pop %v1451
    %v1453 = vmul.f32 1.0, %v1452
    %v1454 = vmul.f32 %v1446, %v1437
    %v1455 = vadd.f32 %v1296, %v1454
    %v1456 = vtanh.pop %v1455
    %v1457 = vsub.f32 1.0, %v1453
    %v1458 = vmul.f32 %v1457, %v1456
    %v1459 = vmul.f32 %v1453, %v1152
    %v1460 = vadd.f32 %v1458, %v1459
    %vm1461 = vcmp.gt.s32.totalorder %v119, 3
    %v1462 = vsel %vm1461, 1, 0
    %1463 = vset.pattern.permute.xlu0 0
    %1464 = vperm.xlu0 %1463, %v1462
    %v1465 = vpop.permute.xlu0 %1464
    %vm1466 = vcmp.eq.s32.totalorder %v1465, 1
    %v1467 = vsel %vm1466, %v1460, %v1152
    %s1468 = scalar_lea.vmem [#allocation2], 8
    %v1469 = vld [vmem:[%s1468] sm:$0x3]
    %v1471 = vsel %vm193, %v1469, 0
    %1473 = vmatprep.subr.mxu0 %v121
    %1474 = vmatpush1.msra.mxu0 %v120
    %1475 = vmatprep.subr.mxu0 %v124
    %1476 = vmatpush1.msra.mxu0 %v123
    %1477 = vmatprep.subr.mxu0 0.0
    %1478 = vmatpush1.msra.mxu0 0.0
    %1479 = vmatprep.subr.mxu0 0.0
    %1480 = vmatpush1.msra.mxu0 0.0
    %1481 = vmatprep.subr.mxu0 0.0
    %1482 = vmatpush1.msra.mxu0 0.0
    %1483 = vmatprep.subr.mxu0 0.0
    %1484 = vmatpush1.msra.mxu0 0.0
    %1485 = vmatprep.subr.mxu0 0.0
    %1486 = vmatpush1.msra.mxu0 0.0
    %1487 = vmatprep.subr.mxu0 0.0
    %1488 = vmatpush1.msra.mxu0 0.0
    %1489 = vmatprep.subr.mxu0 0.0
    %1490 = vmatpush1.msra.mxu0 0.0
    %1491 = vmatprep.subr.mxu0 0.0
    %1492 = vmatpush1.msra.mxu0 0.0
    %1493 = vmatprep.subr.mxu0 0.0
    %1494 = vmatpush1.msra.mxu0 0.0
    %1495 = vmatprep.subr.mxu0 0.0
    %1496 = vmatpush1.msra.mxu0 0.0
    %1497 = vmatprep.subr.mxu0 0.0
    %1498 = vmatpush1.msra.mxu0 0.0
    %1499 = vmatprep.subr.mxu0 0.0
    %1500 = vmatpush1.msra.mxu0 0.0
    %1501 = vmatprep.subr.mxu0 0.0
    %1502 = vmatpush1.msra.mxu0 0.0
    %1503 = vmatprep.subr.mxu0 0.0
    %1504 = vmatpush1.msra.mxu0 0.0
    %1505 = vmatprep.subr.mxu0 0.0
    %1506 = vmatpush1.msra.mxu0 0.0
    %1507 = vmatprep.subr.mxu0 0.0
    %1508 = vmatpush1.msra.mxu0 0.0
    %1509 = vmatprep.subr.mxu0 0.0
    %1510 = vmatpush1.msra.mxu0 0.0
    %1511 = vmatprep.subr.mxu0 0.0
    %1512 = vmatpush1.msra.mxu0 0.0
    %1513 = vmatprep.subr.mxu0 0.0
    %1514 = vmatpush1.msra.mxu0 0.0
    %1515 = vmatprep.subr.mxu0 0.0
    %1516 = vmatpush1.msra.mxu0 0.0
    %1517 = vmatprep.subr.mxu0 0.0
    %1518 = vmatpush1.msra.mxu0 0.0
    %1519 = vmatprep.subr.mxu0 0.0
    %1520 = vmatpush1.msra.mxu0 0.0
    %1521 = vmatprep.subr.mxu0 0.0
    %1522 = vmatpush1.msra.mxu0 0.0
    %1523 = vmatprep.subr.mxu0 0.0
    %1524 = vmatpush1.msra.mxu0 0.0
    %1525 = vmatprep.subr.mxu0 0.0
    %1526 = vmatpush1.msra.mxu0 0.0
    %1527 = vmatprep.subr.mxu0 0.0
    %1528 = vmatpush1.msra.mxu0 0.0
    %1529 = vmatprep.subr.mxu0 0.0
    %1530 = vmatpush1.msra.mxu0 0.0
    %1531 = vmatprep.subr.mxu0 0.0
    %1532 = vmatpush1.msra.mxu0 0.0
    %1533 = vmatprep.subr.mxu0 0.0
    %1534 = vmatpush1.msra.mxu0 0.0
    %1535 = vmatprep.subr.mxu0 0.0
    %1536 = vmatpush1.msra.mxu0 0.0
    %1537 = vmatprep.mubr.f32.mxu0 0.0
    %1538 = vmatmul.mubr.f32.gmra.mrb[0].mxu0 %v1471
    %v1539 = vpop.f32.mrb[0].mxu0
    %v1540 = vadd.f32 %v181, %v1539
    %v1541 = vpop.f32.mrb[0].mxu0
    %v1542 = vadd.f32 %v185, %v1541
    %1543 = vdwg.mxu0
    %1544 = vmatprep.subr.mxu0 0.0
    %1545 = vmatpush1.msra.mxu0 %v122
    %1546 = vmatprep.subr.mxu0 0.0
    %1547 = vmatpush1.msra.mxu0 %v125
    %1548 = vmatprep.subr.mxu0 0.0
    %1549 = vmatpush1.msra.mxu0 0.0
    %1550 = vmatprep.subr.mxu0 0.0
    %1551 = vmatpush1.msra.mxu0 0.0
    %1552 = vmatprep.subr.mxu0 0.0
    %1553 = vmatpush1.msra.mxu0 0.0
    %1554 = vmatprep.subr.mxu0 0.0
    %1555 = vmatpush1.msra.mxu0 0.0
    %1556 = vmatprep.subr.mxu0 0.0
    %1557 = vmatpush1.msra.mxu0 0.0
    %1558 = vmatprep.subr.mxu0 0.0
    %1559 = vmatpush1.msra.mxu0 0.0
    %1560 = vmatprep.subr.mxu0 0.0
    %1561 = vmatpush1.msra.mxu0 0.0
    %1562 = vmatprep.subr.mxu0 0.0
    %1563 = vmatpush1.msra.mxu0 0.0
    %1564 = vmatprep.subr.mxu0 0.0
    %1565 = vmatpush1.msra.mxu0 0.0
    %1566 = vmatprep.subr.mxu0 0.0
    %1567 = vmatpush1.msra.mxu0 0.0
    %1568 = vmatprep.subr.mxu0 0.0
    %1569 = vmatpush1.msra.mxu0 0.0
    %1570 = vmatprep.subr.mxu0 0.0
    %1571 = vmatpush1.msra.mxu0 0.0
    %1572 = vmatprep.subr.mxu0 0.0
    %1573 = vmatpush1.msra.mxu0 0.0
    %1574 = vmatprep.subr.mxu0 0.0
    %1575 = vmatpush1.msra.mxu0 0.0
    %1576 = vmatprep.subr.mxu0 0.0
    %1577 = vmatpush1.msra.mxu0 0.0
    %1578 = vmatprep.subr.mxu0 0.0
    %1579 = vmatpush1.msra.mxu0 0.0
    %1580 = vmatprep.subr.mxu0 0.0
    %1581 = vmatpush1.msra.mxu0 0.0
    %1582 = vmatprep.subr.mxu0 0.0
    %1583 = vmatpush1.msra.mxu0 0.0
    %1584 = vmatprep.subr.mxu0 0.0
    %1585 = vmatpush1.msra.mxu0 0.0
    %1586 = vmatprep.subr.mxu0 0.0
    %1587 = vmatpush1.msra.mxu0 0.0
    %1588 = vmatprep.subr.mxu0 0.0
    %1589 = vmatpush1.msra.mxu0 0.0
    %1590 = vmatprep.subr.mxu0 0.0
    %1591 = vmatpush1.msra.mxu0 0.0
    %1592 = vmatprep.subr.mxu0 0.0
    %1593 = vmatpush1.msra.mxu0 0.0
    %1594 = vmatprep.subr.mxu0 0.0
    %1595 = vmatpush1.msra.mxu0 0.0
    %1596 = vmatprep.subr.mxu0 0.0
    %1597 = vmatpush1.msra.mxu0 0.0
    %1598 = vmatprep.subr.mxu0 0.0
    %1599 = vmatpush1.msra.mxu0 0.0
    %1600 = vmatprep.subr.mxu0 0.0
    %1601 = vmatpush1.msra.mxu0 0.0
    %1602 = vmatprep.subr.mxu0 0.0
    %1603 = vmatpush1.msra.mxu0 0.0
    %1604 = vmatprep.subr.mxu0 0.0
    %1605 = vmatpush1.msra.mxu0 0.0
    %1606 = vmatprep.subr.mxu0 0.0
    %1607 = vmatpush1.msra.mxu0 0.0
    %1608 = vmatprep.mubr.f32.mxu0 0.0
    %1609 = vmatmul.mubr.f32.gmra.mrb[0].mxu0 %v1471
    %v1610 = vpop.f32.mrb[0].mxu0
    %v1611 = vadd.f32 %v189, %v1610
    %v1612 = vpop.f32.mrb[0].mxu0
    %1613 = vdwg.mxu0
    %1614 = vmatprep.subr.mxu0 %v127
    %1615 = vmatpush1.msra.mxu0 %v126
    %1616 = vmatprep.subr.mxu0 %v130
    %1617 = vmatpush1.msra.mxu0 %v129
    %1618 = vmatprep.subr.mxu0 %v133
    %1619 = vmatpush1.msra.mxu0 %v132
    %1620 = vmatprep.subr.mxu0 %v136
    %1621 = vmatpush1.msra.mxu0 %v135
    %1622 = vmatprep.subr.mxu0 %v139
    %1623 = vmatpush1.msra.mxu0 %v138
    %1624 = vmatprep.subr.mxu0 %v142
    %1625 = vmatpush1.msra.mxu0 %v141
    %1626 = vmatprep.subr.mxu0 %v145
    %1627 = vmatpush1.msra.mxu0 %v144
    %1628 = vmatprep.subr.mxu0 %v148
    %1629 = vmatpush1.msra.mxu0 %v147
    %1630 = vmatprep.subr.mxu0 %v151
    %1631 = vmatpush1.msra.mxu0 %v150
    %1632 = vmatprep.subr.mxu0 %v154
    %1633 = vmatpush1.msra.mxu0 %v153
    %1634 = vmatprep.subr.mxu0 %v157
    %1635 = vmatpush1.msra.mxu0 %v156
    %1636 = vmatprep.subr.mxu0 %v160
    %1637 = vmatpush1.msra.mxu0 %v159
    %1638 = vmatprep.subr.mxu0 %v163
    %1639 = vmatpush1.msra.mxu0 %v162
    %1640 = vmatprep.subr.mxu0 %v166
    %1641 = vmatpush1.msra.mxu0 %v165
    %1642 = vmatprep.subr.mxu0 %v169
    %1643 = vmatpush1.msra.mxu0 %v168
    %1644 = vmatprep.subr.mxu0 %v172
    %1645 = vmatpush1.msra.mxu0 %v171
    %1646 = vmatprep.subr.mxu0 0.0
    %1647 = vmatpush1.msra.mxu0 0.0
    %1648 = vmatprep.subr.mxu0 0.0
    %1649 = vmatpush1.msra.mxu0 0.0
    %1650 = vmatprep.subr.mxu0 0.0
    %1651 = vmatpush1.msra.mxu0 0.0
    %1652 = vmatprep.subr.mxu0 0.0
    %1653 = vmatpush1.msra.mxu0 0.0
    %1654 = vmatprep.subr.mxu0 0.0
    %1655 = vmatpush1.msra.mxu0 0.0
    %1656 = vmatprep.subr.mxu0 0.0
    %1657 = vmatpush1.msra.mxu0 0.0
    %1658 = vmatprep.subr.mxu0 0.0
    %1659 = vmatpush1.msra.mxu0 0.0
    %1660 = vmatprep.subr.mxu0 0.0
    %1661 = vmatpush1.msra.mxu0 0.0
    %1662 = vmatprep.subr.mxu0 0.0
    %1663 = vmatpush1.msra.mxu0 0.0
    %1664 = vmatprep.subr.mxu0 0.0
    %1665 = vmatpush1.msra.mxu0 0.0
    %1666 = vmatprep.subr.mxu0 0.0
    %1667 = vmatpush1.msra.mxu0 0.0
    %1668 = vmatprep.subr.mxu0 0.0
    %1669 = vmatpush1.msra.mxu0 0.0
    %1670 = vmatprep.subr.mxu0 0.0
    %1671 = vmatpush1.msra.mxu0 0.0
    %1672 = vmatprep.subr.mxu0 0.0
    %1673 = vmatpush1.msra.mxu0 0.0
    %1674 = vmatprep.subr.mxu0 0.0
    %1675 = vmatpush1.msra.mxu0 0.0
    %1676 = vmatprep.subr.mxu0 0.0
    %1677 = vmatpush1.msra.mxu0 0.0
    %1678 = vmatprep.mubr.f32.mxu0 0.0
    %1679 = vmatmul.mubr.f32.gmra.mrb[0].mxu0 %v1467
    %v1680 = vpop.f32.mrb[0].mxu0
    %v1681 = vadd.f32 %v342, %v1680
    %v1682 = vpop.f32.mrb[0].mxu0
    %v1683 = vadd.f32 %v346, %v1682
    %1684 = vdwg.mxu0
    %1685 = vmatprep.subr.mxu0 0.0
    %1686 = vmatpush1.msra.mxu0 %v128
    %1687 = vmatprep.subr.mxu0 0.0
    %1688 = vmatpush1.msra.mxu0 %v131
    %1689 = vmatprep.subr.mxu0 0.0
    %1690 = vmatpush1.msra.mxu0 %v134
    %1691 = vmatprep.subr.mxu0 0.0
    %1692 = vmatpush1.msra.mxu0 %v137
    %1693 = vmatprep.subr.mxu0 0.0
    %1694 = vmatpush1.msra.mxu0 %v140
    %1695 = vmatprep.subr.mxu0 0.0
    %1696 = vmatpush1.msra.mxu0 %v143
    %1697 = vmatprep.subr.mxu0 0.0
    %1698 = vmatpush1.msra.mxu0 %v146
    %1699 = vmatprep.subr.mxu0 0.0
    %1700 = vmatpush1.msra.mxu0 %v149
    %1701 = vmatprep.subr.mxu0 0.0
    %1702 = vmatpush1.msra.mxu0 %v152
    %1703 = vmatprep.subr.mxu0 0.0
    %1704 = vmatpush1.msra.mxu0 %v155
    %1705 = vmatprep.subr.mxu0 0.0
    %1706 = vmatpush1.msra.mxu0 %v158
    %1707 = vmatprep.subr.mxu0 0.0
    %1708 = vmatpush1.msra.mxu0 %v161
    %1709 = vmatprep.subr.mxu0 0.0
    %1710 = vmatpush1.msra.mxu0 %v164
    %1711 = vmatprep.subr.mxu0 0.0
    %1712 = vmatpush1.msra.mxu0 %v167
    %1713 = vmatprep.subr.mxu0 0.0
    %1714 = vmatpush1.msra.mxu0 %v170
    %1715 = vmatprep.subr.mxu0 0.0
    %1716 = vmatpush1.msra.mxu0 %v173
    %1717 = vmatprep.subr.mxu0 0.0
    %1718 = vmatpush1.msra.mxu0 0.0
    %1719 = vmatprep.subr.mxu0 0.0
    %1720 = vmatpush1.msra.mxu0 0.0
    %1721 = vmatprep.subr.mxu0 0.0
    %1722 = vmatpush1.msra.mxu0 0.0
    %1723 = vmatprep.subr.mxu0 0.0
    %1724 = vmatpush1.msra.mxu0 0.0
    %1725 = vmatprep.subr.mxu0 0.0
    %1726 = vmatpush1.msra.mxu0 0.0
    %1727 = vmatprep.subr.mxu0 0.0
    %1728 = vmatpush1.msra.mxu0 0.0
    %1729 = vmatprep.subr.mxu0 0.0
    %1730 = vmatpush1.msra.mxu0 0.0
    %1731 = vmatprep.subr.mxu0 0.0
    %1732 = vmatpush1.msra.mxu0 0.0
    %1733 = vmatprep.subr.mxu0 0.0
    %1734 = vmatpush1.msra.mxu0 0.0
    %1735 = vmatprep.subr.mxu0 0.0
    %1736 = vmatpush1.msra.mxu0 0.0
    %1737 = vmatprep.subr.mxu0 0.0
    %1738 = vmatpush1.msra.mxu0 0.0
    %1739 = vmatprep.subr.mxu0 0.0
    %1740 = vmatpush1.msra.mxu0 0.0
    %1741 = vmatprep.subr.mxu0 0.0
    %1742 = vmatpush1.msra.mxu0 0.0
    %1743 = vmatprep.subr.mxu0 0.0
    %1744 = vmatpush1.msra.mxu0 0.0
    %1745 = vmatprep.subr.mxu0 0.0
    %1746 = vmatpush1.msra.mxu0 0.0
    %1747 = vmatprep.subr.mxu0 0.0
    %1748 = vmatpush1.msra.mxu0 0.0
    %1749 = vmatprep.mubr.f32.mxu0 0.0
    %1750 = vmatmul.mubr.f32.gmra.mrb[0].mxu0 %v1467
    %v1751 = vpop.f32.mrb[0].mxu0
    %v1752 = vadd.f32 %v350, %v1751
    %v1753 = vpop.f32.mrb[0].mxu0
    %1754 = vdwg.mxu0
    %v1755 = vadd.f32 %v1540, %v1681
    %v1756 = vxor.u32 %v1755, 2147483648
    %v1757 = vmul.f32 %v1756, 1.442695
    %v1758 = vpow.pop %v1757
    %v1759 = vadd.f32 %v1758, 1.0
    %v1760 = vrcp.pop %v1759
    %v1761 = vmul.f32 1.0, %v1760
    %v1762 = vadd.f32 %v1542, %v1683
    %v1763 = vxor.u32 %v1762, 2147483648
    %v1764 = vmul.f32 %v1763, 1.442695
    %v1765 = vpow.pop %v1764
    %v1766 = vadd.f32 %v1765, 1.0
    %v1767 = vrcp.pop %v1766
    %v1768 = vmul.f32 1.0, %v1767
    %v1769 = vmul.f32 %v1761, %v1752
    %v1770 = vadd.f32 %v1611, %v1769
    %v1771 = vtanh.pop %v1770
    %v1772 = vsub.f32 1.0, %v1768
    %v1773 = vmul.f32 %v1772, %v1771
    %v1774 = vmul.f32 %v1768, %v1467
    %v1775 = vadd.f32 %v1773, %v1774
    %vm1776 = vcmp.gt.s32.totalorder %v119, 4
    %v1777 = vsel %vm1776, 1, 0
    %1778 = vset.pattern.permute.xlu0 0
    %1779 = vperm.xlu0 %1778, %v1777
    %v1780 = vpop.permute.xlu0 %1779
    %vm1781 = vcmp.eq.s32.totalorder %v1780, 1
    %v1782 = vsel %vm1781, %v1775, %v1467
    %s1783 = scalar_lea.vmem [#allocation2], 10
    %v1784 = vld [vmem:[%s1783] sm:$0x3]
    %v1786 = vsel %vm193, %v1784, 0
    %1788 = vmatprep.subr.mxu0 %v121
    %1789 = vmatpush1.msra.mxu0 %v120
    %1790 = vmatprep.subr.mxu0 %v124
    %1791 = vmatpush1.msra.mxu0 %v123
    %1792 = vmatprep.subr.mxu0 0.0
    %1793 = vmatpush1.msra.mxu0 0.0
    %1794 = vmatprep.subr.mxu0 0.0
    %1795 = vmatpush1.msra.mxu0 0.0
    %1796 = vmatprep.subr.mxu0 0.0
    %1797 = vmatpush1.msra.mxu0 0.0
    %1798 = vmatprep.subr.mxu0 0.0
    %1799 = vmatpush1.msra.mxu0 0.0
    %1800 = vmatprep.subr.mxu0 0.0
    %1801 = vmatpush1.msra.mxu0 0.0
    %1802 = vmatprep.subr.mxu0 0.0
    %1803 = vmatpush1.msra.mxu0 0.0
    %1804 = vmatprep.subr.mxu0 0.0
    %1805 = vmatpush1.msra.mxu0 0.0
    %1806 = vmatprep.subr.mxu0 0.0
    %1807 = vmatpush1.msra.mxu0 0.0
    %1808 = vmatprep.subr.mxu0 0.0
    %1809 = vmatpush1.msra.mxu0 0.0
    %1810 = vmatprep.subr.mxu0 0.0
    %1811 = vmatpush1.msra.mxu0 0.0
    %1812 = vmatprep.subr.mxu0 0.0
    %1813 = vmatpush1.msra.mxu0 0.0
    %1814 = vmatprep.subr.mxu0 0.0
    %1815 = vmatpush1.msra.mxu0 0.0
    %1816 = vmatprep.subr.mxu0 0.0
    %1817 = vmatpush1.msra.mxu0 0.0
    %1818 = vmatprep.subr.mxu0 0.0
    %1819 = vmatpush1.msra.mxu0 0.0
    %1820 = vmatprep.subr.mxu0 0.0
    %1821 = vmatpush1.msra.mxu0 0.0
    %1822 = vmatprep.subr.mxu0 0.0
    %1823 = vmatpush1.msra.mxu0 0.0
    %1824 = vmatprep.subr.mxu0 0.0
    %1825 = vmatpush1.msra.mxu0 0.0
    %1826 = vmatprep.subr.mxu0 0.0
    %1827 = vmatpush1.msra.mxu0 0.0
    %1828 = vmatprep.subr.mxu0 0.0
    %1829 = vmatpush1.msra.mxu0 0.0
    %1830 = vmatprep.subr.mxu0 0.0
    %1831 = vmatpush1.msra.mxu0 0.0
    %1832 = vmatprep.subr.mxu0 0.0
    %1833 = vmatpush1.msra.mxu0 0.0
    %1834 = vmatprep.subr.mxu0 0.0
    %1835 = vmatpush1.msra.mxu0 0.0
    %1836 = vmatprep.subr.mxu0 0.0
    %1837 = vmatpush1.msra.mxu0 0.0
    %1838 = vmatprep.subr.mxu0 0.0
    %1839 = vmatpush1.msra.mxu0 0.0
    %1840 = vmatprep.subr.mxu0 0.0
    %1841 = vmatpush1.msra.mxu0 0.0
    %1842 = vmatprep.subr.mxu0 0.0
    %1843 = vmatpush1.msra.mxu0 0.0
    %1844 = vmatprep.subr.mxu0 0.0
    %1845 = vmatpush1.msra.mxu0 0.0
    %1846 = vmatprep.subr.mxu0 0.0
    %1847 = vmatpush1.msra.mxu0 0.0
    %1848 = vmatprep.subr.mxu0 0.0
    %1849 = vmatpush1.msra.mxu0 0.0
    %1850 = vmatprep.subr.mxu0 0.0
    %1851 = vmatpush1.msra.mxu0 0.0
    %1852 = vmatprep.mubr.f32.mxu0 0.0
    %1853 = vmatmul.mubr.f32.gmra.mrb[0].mxu0 %v1786
    %v1854 = vpop.f32.mrb[0].mxu0
    %v1855 = vadd.f32 %v181, %v1854
    %v1856 = vpop.f32.mrb[0].mxu0
    %v1857 = vadd.f32 %v185, %v1856
    %1858 = vdwg.mxu0
    %1859 = vmatprep.subr.mxu0 0.0
    %1860 = vmatpush1.msra.mxu0 %v122
    %1861 = vmatprep.subr.mxu0 0.0
    %1862 = vmatpush1.msra.mxu0 %v125
    %1863 = vmatprep.subr.mxu0 0.0
    %1864 = vmatpush1.msra.mxu0 0.0
    %1865 = vmatprep.subr.mxu0 0.0
    %1866 = vmatpush1.msra.mxu0 0.0
    %1867 = vmatprep.subr.mxu0 0.0
    %1868 = vmatpush1.msra.mxu0 0.0
    %1869 = vmatprep.subr.mxu0 0.0
    %1870 = vmatpush1.msra.mxu0 0.0
    %1871 = vmatprep.subr.mxu0 0.0
    %1872 = vmatpush1.msra.mxu0 0.0
    %1873 = vmatprep.subr.mxu0 0.0
    %1874 = vmatpush1.msra.mxu0 0.0
    %1875 = vmatprep.subr.mxu0 0.0
    %1876 = vmatpush1.msra.mxu0 0.0
    %1877 = vmatprep.subr.mxu0 0.0
    %1878 = vmatpush1.msra.mxu0 0.0
    %1879 = vmatprep.subr.mxu0 0.0
    %1880 = vmatpush1.msra.mxu0 0.0
    %1881 = vmatprep.subr.mxu0 0.0
    %1882 = vmatpush1.msra.mxu0 0.0
    %1883 = vmatprep.subr.mxu0 0.0
    %1884 = vmatpush1.msra.mxu0 0.0
    %1885 = vmatprep.subr.mxu0 0.0
    %1886 = vmatpush1.msra.mxu0 0.0
    %1887 = vmatprep.subr.mxu0 0.0
    %1888 = vmatpush1.msra.mxu0 0.0
    %1889 = vmatprep.subr.mxu0 0.0
    %1890 = vmatpush1.msra.mxu0 0.0
    %1891 = vmatprep.subr.mxu0 0.0
    %1892 = vmatpush1.msra.mxu0 0.0
    %1893 = vmatprep.subr.mxu0 0.0
    %1894 = vmatpush1.msra.mxu0 0.0
    %1895 = vmatprep.subr.mxu0 0.0
    %1896 = vmatpush1.msra.mxu0 0.0
    %1897 = vmatprep.subr.mxu0 0.0
    %1898 = vmatpush1.msra.mxu0 0.0
    %1899 = vmatprep.subr.mxu0 0.0
    %1900 = vmatpush1.msra.mxu0 0.0
    %1901 = vmatprep.subr.mxu0 0.0
    %1902 = vmatpush1.msra.mxu0 0.0
    %1903 = vmatprep.subr.mxu0 0.0
    %1904 = vmatpush1.msra.mxu0 0.0
    %1905 = vmatprep.subr.mxu0 0.0
    %1906 = vmatpush1.msra.mxu0 0.0
    %1907 = vmatprep.subr.mxu0 0.0
    %1908 = vmatpush1.msra.mxu0 0.0
    %1909 = vmatprep.subr.mxu0 0.0
    %1910 = vmatpush1.msra.mxu0 0.0
    %1911 = vmatprep.subr.mxu0 0.0
    %1912 = vmatpush1.msra.mxu0 0.0
    %1913 = vmatprep.subr.mxu0 0.0
    %1914 = vmatpush1.msra.mxu0 0.0
    %1915 = vmatprep.subr.mxu0 0.0
    %1916 = vmatpush1.msra.mxu0 0.0
    %1917 = vmatprep.subr.mxu0 0.0
    %1918 = vmatpush1.msra.mxu0 0.0
    %1919 = vmatprep.subr.mxu0 0.0
    %1920 = vmatpush1.msra.mxu0 0.0
    %1921 = vmatprep.subr.mxu0 0.0
    %1922 = vmatpush1.msra.mxu0 0.0
    %1923 = vmatprep.mubr.f32.mxu0 0.0
    %1924 = vmatmul.mubr.f32.gmra.mrb[0].mxu0 %v1786
    %v1925 = vpop.f32.mrb[0].mxu0
    %v1926 = vadd.f32 %v189, %v1925
    %v1927 = vpop.f32.mrb[0].mxu0
    %1928 = vdwg.mxu0
    %1929 = vmatprep.subr.mxu0 %v127
    %1930 = vmatpush1.msra.mxu0 %v126
    %1931 = vmatprep.subr.mxu0 %v130
    %1932 = vmatpush1.msra.mxu0 %v129
    %1933 = vmatprep.subr.mxu0 %v133
    %1934 = vmatpush1.msra.mxu0 %v132
    %1935 = vmatprep.subr.mxu0 %v136
    %1936 = vmatpush1.msra.mxu0 %v135
    %1937 = vmatprep.subr.mxu0 %v139
    %1938 = vmatpush1.msra.mxu0 %v138
    %1939 = vmatprep.subr.mxu0 %v142
    %1940 = vmatpush1.msra.mxu0 %v141
    %1941 = vmatprep.subr.mxu0 %v145
    %1942 = vmatpush1.msra.mxu0 %v144
    %1943 = vmatprep.subr.mxu0 %v148
    %1944 = vmatpush1.msra.mxu0 %v147
    %1945 = vmatprep.subr.mxu0 %v151
    %1946 = vmatpush1.msra.mxu0 %v150
    %1947 = vmatprep.subr.mxu0 %v154
    %1948 = vmatpush1.msra.mxu0 %v153
    %1949 = vmatprep.subr.mxu0 %v157
    %1950 = vmatpush1.msra.mxu0 %v156
    %1951 = vmatprep.subr.mxu0 %v160
    %1952 = vmatpush1.msra.mxu0 %v159
    %1953 = vmatprep.subr.mxu0 %v163
    %1954 = vmatpush1.msra.mxu0 %v162
    %1955 = vmatprep.subr.mxu0 %v166
    %1956 = vmatpush1.msra.mxu0 %v165
    %1957 = vmatprep.subr.mxu0 %v169
    %1958 = vmatpush1.msra.mxu0 %v168
    %1959 = vmatprep.subr.mxu0 %v172
    %1960 = vmatpush1.msra.mxu0 %v171
    %1961 = vmatprep.subr.mxu0 0.0
    %1962 = vmatpush1.msra.mxu0 0.0
    %1963 = vmatprep.subr.mxu0 0.0
    %1964 = vmatpush1.msra.mxu0 0.0
    %1965 = vmatprep.subr.mxu0 0.0
    %1966 = vmatpush1.msra.mxu0 0.0
    %1967 = vmatprep.subr.mxu0 0.0
    %1968 = vmatpush1.msra.mxu0 0.0
    %1969 = vmatprep.subr.mxu0 0.0
    %1970 = vmatpush1.msra.mxu0 0.0
    %1971 = vmatprep.subr.mxu0 0.0
    %1972 = vmatpush1.msra.mxu0 0.0
    %1973 = vmatprep.subr.mxu0 0.0
    %1974 = vmatpush1.msra.mxu0 0.0
    %1975 = vmatprep.subr.mxu0 0.0
    %1976 = vmatpush1.msra.mxu0 0.0
    %1977 = vmatprep.subr.mxu0 0.0
    %1978 = vmatpush1.msra.mxu0 0.0
    %1979 = vmatprep.subr.mxu0 0.0
    %1980 = vmatpush1.msra.mxu0 0.0
    %1981 = vmatprep.subr.mxu0 0.0
    %1982 = vmatpush1.msra.mxu0 0.0
    %1983 = vmatprep.subr.mxu0 0.0
    %1984 = vmatpush1.msra.mxu0 0.0
    %1985 = vmatprep.subr.mxu0 0.0
    %1986 = vmatpush1.msra.mxu0 0.0
    %1987 = vmatprep.subr.mxu0 0.0
    %1988 = vmatpush1.msra.mxu0 0.0
    %1989 = vmatprep.subr.mxu0 0.0
    %1990 = vmatpush1.msra.mxu0 0.0
    %1991 = vmatprep.subr.mxu0 0.0
    %1992 = vmatpush1.msra.mxu0 0.0
    %1993 = vmatprep.mubr.f32.mxu0 0.0
    %1994 = vmatmul.mubr.f32.gmra.mrb[0].mxu0 %v1782
    %v1995 = vpop.f32.mrb[0].mxu0
    %v1996 = vadd.f32 %v342, %v1995
    %v1997 = vpop.f32.mrb[0].mxu0
    %v1998 = vadd.f32 %v346, %v1997
    %1999 = vdwg.mxu0
    %2000 = vmatprep.subr.mxu0 0.0
    %2001 = vmatpush1.msra.mxu0 %v128
    %2002 = vmatprep.subr.mxu0 0.0
    %2003 = vmatpush1.msra.mxu0 %v131
    %2004 = vmatprep.subr.mxu0 0.0
    %2005 = vmatpush1.msra.mxu0 %v134
    %2006 = vmatprep.subr.mxu0 0.0
    %2007 = vmatpush1.msra.mxu0 %v137
    %2008 = vmatprep.subr.mxu0 0.0
    %2009 = vmatpush1.msra.mxu0 %v140
    %2010 = vmatprep.subr.mxu0 0.0
    %2011 = vmatpush1.msra.mxu0 %v143
    %2012 = vmatprep.subr.mxu0 0.0
    %2013 = vmatpush1.msra.mxu0 %v146
    %2014 = vmatprep.subr.mxu0 0.0
    %2015 = vmatpush1.msra.mxu0 %v149
    %2016 = vmatprep.subr.mxu0 0.0
    %2017 = vmatpush1.msra.mxu0 %v152
    %2018 = vmatprep.subr.mxu0 0.0
    %2019 = vmatpush1.msra.mxu0 %v155
    %2020 = vmatprep.subr.mxu0 0.0
    %2021 = vmatpush1.msra.mxu0 %v158
    %2022 = vmatprep.subr.mxu0 0.0
    %2023 = vmatpush1.msra.mxu0 %v161
    %2024 = vmatprep.subr.mxu0 0.0
    %2025 = vmatpush1.msra.mxu0 %v164
    %2026 = vmatprep.subr.mxu0 0.0
    %2027 = vmatpush1.msra.mxu0 %v167
    %2028 = vmatprep.subr.mxu0 0.0
    %2029 = vmatpush1.msra.mxu0 %v170
    %2030 = vmatprep.subr.mxu0 0.0
    %2031 = vmatpush1.msra.mxu0 %v173
    %2032 = vmatprep.subr.mxu0 0.0
    %2033 = vmatpush1.msra.mxu0 0.0
    %2034 = vmatprep.subr.mxu0 0.0
    %2035 = vmatpush1.msra.mxu0 0.0
    %2036 = vmatprep.subr.mxu0 0.0
    %2037 = vmatpush1.msra.mxu0 0.0
    %2038 = vmatprep.subr.mxu0 0.0
    %2039 = vmatpush1.msra.mxu0 0.0
    %2040 = vmatprep.subr.mxu0 0.0
    %2041 = vmatpush1.msra.mxu0 0.0
    %2042 = vmatprep.subr.mxu0 0.0
    %2043 = vmatpush1.msra.mxu0 0.0
    %2044 = vmatprep.subr.mxu0 0.0
    %2045 = vmatpush1.msra.mxu0 0.0
    %2046 = vmatprep.subr.mxu0 0.0
    %2047 = vmatpush1.msra.mxu0 0.0
    %2048 = vmatprep.subr.mxu0 0.0
    %2049 = vmatpush1.msra.mxu0 0.0
    %2050 = vmatprep.subr.mxu0 0.0
    %2051 = vmatpush1.msra.mxu0 0.0
    %2052 = vmatprep.subr.mxu0 0.0
    %2053 = vmatpush1.msra.mxu0 0.0
    %2054 = vmatprep.subr.mxu0 0.0
    %2055 = vmatpush1.msra.mxu0 0.0
    %2056 = vmatprep.subr.mxu0 0.0
    %2057 = vmatpush1.msra.mxu0 0.0
    %2058 = vmatprep.subr.mxu0 0.0
    %2059 = vmatpush1.msra.mxu0 0.0
    %2060 = vmatprep.subr.mxu0 0.0
    %2061 = vmatpush1.msra.mxu0 0.0
    %2062 = vmatprep.subr.mxu0 0.0
    %2063 = vmatpush1.msra.mxu0 0.0
    %2064 = vmatprep.mubr.f32.mxu0 0.0
    %2065 = vmatmul.mubr.f32.gmra.mrb[0].mxu0 %v1782
    %v2066 = vpop.f32.mrb[0].mxu0
    %v2067 = vadd.f32 %v350, %v2066
    %v2068 = vpop.f32.mrb[0].mxu0
    %2069 = vdwg.mxu0
    %v2070 = vadd.f32 %v1855, %v1996
    %v2071 = vxor.u32 %v2070, 2147483648
    %v2072 = vmul.f32 %v2071, 1.442695
    %v2073 = vpow.pop %v2072
    %v2074 = vadd.f32 %v2073, 1.0
    %v2075 = vrcp.pop %v2074
    %v2076 = vmul.f32 1.0, %v2075
    %v2077 = vadd.f32 %v1857, %v1998
    %v2078 = vxor.u32 %v2077, 2147483648
    %v2079 = vmul.f32 %v2078, 1.442695
    %v2080 = vpow.pop %v2079
    %v2081 = vadd.f32 %v2080, 1.0
    %v2082 = vrcp.pop %v2081
    %v2083 = vmul.f32 1.0, %v2082
    %v2084 = vmul.f32 %v2076, %v2067
    %v2085 = vadd.f32 %v1926, %v2084
    %v2086 = vtanh.pop %v2085
    %v2087 = vsub.f32 1.0, %v2083
    %v2088 = vmul.f32 %v2087, %v2086
    %v2089 = vmul.f32 %v2083, %v1782
    %v2090 = vadd.f32 %v2088, %v2089
    %vm2091 = vcmp.gt.s32.totalorder %v119, 5
    %v2092 = vsel %vm2091, 1, 0
    %2093 = vset.pattern.permute.xlu0 0
    %2094 = vperm.xlu0 %2093, %v2092
    %v2095 = vpop.permute.xlu0 %2094
    %vm2096 = vcmp.eq.s32.totalorder %v2095, 1
    %v2097 = vsel %vm2096, %v2090, %v1782
    %s2098 = scalar_lea.vmem [#allocation2], 12
    %v2099 = vld [vmem:[%s2098] sm:$0x3]
    %v2101 = vsel %vm193, %v2099, 0
    %2103 = vmatprep.subr.mxu0 %v121
    %2104 = vmatpush1.msra.mxu0 %v120
    %2105 = vmatprep.subr.mxu0 %v124
    %2106 = vmatpush1.msra.mxu0 %v123
    %2107 = vmatprep.subr.mxu0 0.0
    %2108 = vmatpush1.msra.mxu0 0.0
    %2109 = vmatprep.subr.mxu0 0.0
    %2110 = vmatpush1.msra.mxu0 0.0
    %2111 = vmatprep.subr.mxu0 0.0
    %2112 = vmatpush1.msra.mxu0 0.0
    %2113 = vmatprep.subr.mxu0 0.0
    %2114 = vmatpush1.msra.mxu0 0.0
    %2115 = vmatprep.subr.mxu0 0.0
    %2116 = vmatpush1.msra.mxu0 0.0
    %2117 = vmatprep.subr.mxu0 0.0
    %2118 = vmatpush1.msra.mxu0 0.0
    %2119 = vmatprep.subr.mxu0 0.0
    %2120 = vmatpush1.msra.mxu0 0.0
    %2121 = vmatprep.subr.mxu0 0.0
    %2122 = vmatpush1.msra.mxu0 0.0
    %2123 = vmatprep.subr.mxu0 0.0
    %2124 = vmatpush1.msra.mxu0 0.0
    %2125 = vmatprep.subr.mxu0 0.0
    %2126 = vmatpush1.msra.mxu0 0.0
    %2127 = vmatprep.subr.mxu0 0.0
    %2128 = vmatpush1.msra.mxu0 0.0
    %2129 = vmatprep.subr.mxu0 0.0
    %2130 = vmatpush1.msra.mxu0 0.0
    %2131 = vmatprep.subr.mxu0 0.0
    %2132 = vmatpush1.msra.mxu0 0.0
    %2133 = vmatprep.subr.mxu0 0.0
    %2134 = vmatpush1.msra.mxu0 0.0
    %2135 = vmatprep.subr.mxu0 0.0
    %2136 = vmatpush1.msra.mxu0 0.0
    %2137 = vmatprep.subr.mxu0 0.0
    %2138 = vmatpush1.msra.mxu0 0.0
    %2139 = vmatprep.subr.mxu0 0.0
    %2140 = vmatpush1.msra.mxu0 0.0
    %2141 = vmatprep.subr.mxu0 0.0
    %2142 = vmatpush1.msra.mxu0 0.0
    %2143 = vmatprep.subr.mxu0 0.0
    %2144 = vmatpush1.msra.mxu0 0.0
    %2145 = vmatprep.subr.mxu0 0.0
    %2146 = vmatpush1.msra.mxu0 0.0
    %2147 = vmatprep.subr.mxu0 0.0
    %2148 = vmatpush1.msra.mxu0 0.0
    %2149 = vmatprep.subr.mxu0 0.0
    %2150 = vmatpush1.msra.mxu0 0.0
    %2151 = vmatprep.subr.mxu0 0.0
    %2152 = vmatpush1.msra.mxu0 0.0
    %2153 = vmatprep.subr.mxu0 0.0
    %2154 = vmatpush1.msra.mxu0 0.0
    %2155 = vmatprep.subr.mxu0 0.0
    %2156 = vmatpush1.msra.mxu0 0.0
    %2157 = vmatprep.subr.mxu0 0.0
    %2158 = vmatpush1.msra.mxu0 0.0
    %2159 = vmatprep.subr.mxu0 0.0
    %2160 = vmatpush1.msra.mxu0 0.0
    %2161 = vmatprep.subr.mxu0 0.0
    %2162 = vmatpush1.msra.mxu0 0.0
    %2163 = vmatprep.subr.mxu0 0.0
    %2164 = vmatpush1.msra.mxu0 0.0
    %2165 = vmatprep.subr.mxu0 0.0
    %2166 = vmatpush1.msra.mxu0 0.0
    %2167 = vmatprep.mubr.f32.mxu0 0.0
    %2168 = vmatmul.mubr.f32.gmra.mrb[0].mxu0 %v2101
    %v2169 = vpop.f32.mrb[0].mxu0
    %v2170 = vadd.f32 %v181, %v2169
    %v2171 = vpop.f32.mrb[0].mxu0
    %v2172 = vadd.f32 %v185, %v2171
    %2173 = vdwg.mxu0
    %2174 = vmatprep.subr.mxu0 0.0
    %2175 = vmatpush1.msra.mxu0 %v122
    %2176 = vmatprep.subr.mxu0 0.0
    %2177 = vmatpush1.msra.mxu0 %v125
    %2178 = vmatprep.subr.mxu0 0.0
    %2179 = vmatpush1.msra.mxu0 0.0
    %2180 = vmatprep.subr.mxu0 0.0
    %2181 = vmatpush1.msra.mxu0 0.0
    %2182 = vmatprep.subr.mxu0 0.0
    %2183 = vmatpush1.msra.mxu0 0.0
    %2184 = vmatprep.subr.mxu0 0.0
    %2185 = vmatpush1.msra.mxu0 0.0
    %2186 = vmatprep.subr.mxu0 0.0
    %2187 = vmatpush1.msra.mxu0 0.0
    %2188 = vmatprep.subr.mxu0 0.0
    %2189 = vmatpush1.msra.mxu0 0.0
    %2190 = vmatprep.subr.mxu0 0.0
    %2191 = vmatpush1.msra.mxu0 0.0
    %2192 = vmatprep.subr.mxu0 0.0
    %2193 = vmatpush1.msra.mxu0 0.0
    %2194 = vmatprep.subr.mxu0 0.0
    %2195 = vmatpush1.msra.mxu0 0.0
    %2196 = vmatprep.subr.mxu0 0.0
    %2197 = vmatpush1.msra.mxu0 0.0
    %2198 = vmatprep.subr.mxu0 0.0
    %2199 = vmatpush1.msra.mxu0 0.0
    %2200 = vmatprep.subr.mxu0 0.0
    %2201 = vmatpush1.msra.mxu0 0.0
    %2202 = vmatprep.subr.mxu0 0.0
    %2203 = vmatpush1.msra.mxu0 0.0
    %2204 = vmatprep.subr.mxu0 0.0
    %2205 = vmatpush1.msra.mxu0 0.0
    %2206 = vmatprep.subr.mxu0 0.0
    %2207 = vmatpush1.msra.mxu0 0.0
    %2208 = vmatprep.subr.mxu0 0.0
    %2209 = vmatpush1.msra.mxu0 0.0
    %2210 = vmatprep.subr.mxu0 0.0
    %2211 = vmatpush1.msra.mxu0 0.0
    %2212 = vmatprep.subr.mxu0 0.0
    %2213 = vmatpush1.msra.mxu0 0.0
    %2214 = vmatprep.subr.mxu0 0.0
    %2215 = vmatpush1.msra.mxu0 0.0
    %2216 = vmatprep.subr.mxu0 0.0
    %2217 = vmatpush1.msra.mxu0 0.0
    %2218 = vmatprep.subr.mxu0 0.0
    %2219 = vmatpush1.msra.mxu0 0.0
    %2220 = vmatprep.subr.mxu0 0.0
    %2221 = vmatpush1.msra.mxu0 0.0
    %2222 = vmatprep.subr.mxu0 0.0
    %2223 = vmatpush1.msra.mxu0 0.0
    %2224 = vmatprep.subr.mxu0 0.0
    %2225 = vmatpush1.msra.mxu0 0.0
    %2226 = vmatprep.subr.mxu0 0.0
    %2227 = vmatpush1.msra.mxu0 0.0
    %2228 = vmatprep.subr.mxu0 0.0
    %2229 = vmatpush1.msra.mxu0 0.0
    %2230 = vmatprep.subr.mxu0 0.0
    %2231 = vmatpush1.msra.mxu0 0.0
    %2232 = vmatprep.subr.mxu0 0.0
    %2233 = vmatpush1.msra.mxu0 0.0
    %2234 = vmatprep.subr.mxu0 0.0
    %2235 = vmatpush1.msra.mxu0 0.0
    %2236 = vmatprep.subr.mxu0 0.0
    %2237 = vmatpush1.msra.mxu0 0.0
    %2238 = vmatprep.mubr.f32.mxu0 0.0
    %2239 = vmatmul.mubr.f32.gmra.mrb[0].mxu0 %v2101
    %v2240 = vpop.f32.mrb[0].mxu0
    %v2241 = vadd.f32 %v189, %v2240
    %v2242 = vpop.f32.mrb[0].mxu0
    %2243 = vdwg.mxu0
    %2244 = vmatprep.subr.mxu0 %v127
    %2245 = vmatpush1.msra.mxu0 %v126
    %2246 = vmatprep.subr.mxu0 %v130
    %2247 = vmatpush1.msra.mxu0 %v129
    %2248 = vmatprep.subr.mxu0 %v133
    %2249 = vmatpush1.msra.mxu0 %v132
    %2250 = vmatprep.subr.mxu0 %v136
    %2251 = vmatpush1.msra.mxu0 %v135
    %2252 = vmatprep.subr.mxu0 %v139
    %2253 = vmatpush1.msra.mxu0 %v138
    %2254 = vmatprep.subr.mxu0 %v142
    %2255 = vmatpush1.msra.mxu0 %v141
    %2256 = vmatprep.subr.mxu0 %v145
    %2257 = vmatpush1.msra.mxu0 %v144
    %2258 = vmatprep.subr.mxu0 %v148
    %2259 = vmatpush1.msra.mxu0 %v147
    %2260 = vmatprep.subr.mxu0 %v151
    %2261 = vmatpush1.msra.mxu0 %v150
    %2262 = vmatprep.subr.mxu0 %v154
    %2263 = vmatpush1.msra.mxu0 %v153
    %2264 = vmatprep.subr.mxu0 %v157
    %2265 = vmatpush1.msra.mxu0 %v156
    %2266 = vmatprep.subr.mxu0 %v160
    %2267 = vmatpush1.msra.mxu0 %v159
    %2268 = vmatprep.subr.mxu0 %v163
    %2269 = vmatpush1.msra.mxu0 %v162
    %2270 = vmatprep.subr.mxu0 %v166
    %2271 = vmatpush1.msra.mxu0 %v165
    %2272 = vmatprep.subr.mxu0 %v169
    %2273 = vmatpush1.msra.mxu0 %v168
    %2274 = vmatprep.subr.mxu0 %v172
    %2275 = vmatpush1.msra.mxu0 %v171
    %2276 = vmatprep.subr.mxu0 0.0
    %2277 = vmatpush1.msra.mxu0 0.0
    %2278 = vmatprep.subr.mxu0 0.0
    %2279 = vmatpush1.msra.mxu0 0.0
    %2280 = vmatprep.subr.mxu0 0.0
    %2281 = vmatpush1.msra.mxu0 0.0
    %2282 = vmatprep.subr.mxu0 0.0
    %2283 = vmatpush1.msra.mxu0 0.0
    %2284 = vmatprep.subr.mxu0 0.0
    %2285 = vmatpush1.msra.mxu0 0.0
    %2286 = vmatprep.subr.mxu0 0.0
    %2287 = vmatpush1.msra.mxu0 0.0
    %2288 = vmatprep.subr.mxu0 0.0
    %2289 = vmatpush1.msra.mxu0 0.0
    %2290 = vmatprep.subr.mxu0 0.0
    %2291 = vmatpush1.msra.mxu0 0.0
    %2292 = vmatprep.subr.mxu0 0.0
    %2293 = vmatpush1.msra.mxu0 0.0
    %2294 = vmatprep.subr.mxu0 0.0
    %2295 = vmatpush1.msra.mxu0 0.0
    %2296 = vmatprep.subr.mxu0 0.0
    %2297 = vmatpush1.msra.mxu0 0.0
    %2298 = vmatprep.subr.mxu0 0.0
    %2299 = vmatpush1.msra.mxu0 0.0
    %2300 = vmatprep.subr.mxu0 0.0
    %2301 = vmatpush1.msra.mxu0 0.0
    %2302 = vmatprep.subr.mxu0 0.0
    %2303 = vmatpush1.msra.mxu0 0.0
    %2304 = vmatprep.subr.mxu0 0.0
    %2305 = vmatpush1.msra.mxu0 0.0
    %2306 = vmatprep.subr.mxu0 0.0
    %2307 = vmatpush1.msra.mxu0 0.0
    %2308 = vmatprep.mubr.f32.mxu0 0.0
    %2309 = vmatmul.mubr.f32.gmra.mrb[0].mxu0 %v2097
    %v2310 = vpop.f32.mrb[0].mxu0
    %v2311 = vadd.f32 %v342, %v2310
    %v2312 = vpop.f32.mrb[0].mxu0
    %v2313 = vadd.f32 %v346, %v2312
    %2314 = vdwg.mxu0
    %2315 = vmatprep.subr.mxu0 0.0
    %2316 = vmatpush1.msra.mxu0 %v128
    %2317 = vmatprep.subr.mxu0 0.0
    %2318 = vmatpush1.msra.mxu0 %v131
    %2319 = vmatprep.subr.mxu0 0.0
    %2320 = vmatpush1.msra.mxu0 %v134
    %2321 = vmatprep.subr.mxu0 0.0
    %2322 = vmatpush1.msra.mxu0 %v137
    %2323 = vmatprep.subr.mxu0 0.0
    %2324 = vmatpush1.msra.mxu0 %v140
    %2325 = vmatprep.subr.mxu0 0.0
    %2326 = vmatpush1.msra.mxu0 %v143
    %2327 = vmatprep.subr.mxu0 0.0
    %2328 = vmatpush1.msra.mxu0 %v146
    %2329 = vmatprep.subr.mxu0 0.0
    %2330 = vmatpush1.msra.mxu0 %v149
    %2331 = vmatprep.subr.mxu0 0.0
    %2332 = vmatpush1.msra.mxu0 %v152
    %2333 = vmatprep.subr.mxu0 0.0
    %2334 = vmatpush1.msra.mxu0 %v155
    %2335 = vmatprep.subr.mxu0 0.0
    %2336 = vmatpush1.msra.mxu0 %v158
    %2337 = vmatprep.subr.mxu0 0.0
    %2338 = vmatpush1.msra.mxu0 %v161
    %2339 = vmatprep.subr.mxu0 0.0
    %2340 = vmatpush1.msra.mxu0 %v164
    %2341 = vmatprep.subr.mxu0 0.0
    %2342 = vmatpush1.msra.mxu0 %v167
    %2343 = vmatprep.subr.mxu0 0.0
    %2344 = vmatpush1.msra.mxu0 %v170
    %2345 = vmatprep.subr.mxu0 0.0
    %2346 = vmatpush1.msra.mxu0 %v173
    %2347 = vmatprep.subr.mxu0 0.0
    %2348 = vmatpush1.msra.mxu0 0.0
    %2349 = vmatprep.subr.mxu0 0.0
    %2350 = vmatpush1.msra.mxu0 0.0
    %2351 = vmatprep.subr.mxu0 0.0
    %2352 = vmatpush1.msra.mxu0 0.0
    %2353 = vmatprep.subr.mxu0 0.0
    %2354 = vmatpush1.msra.mxu0 0.0
    %2355 = vmatprep.subr.mxu0 0.0
    %2356 = vmatpush1.msra.mxu0 0.0
    %2357 = vmatprep.subr.mxu0 0.0
    %2358 = vmatpush1.msra.mxu0 0.0
    %2359 = vmatprep.subr.mxu0 0.0
    %2360 = vmatpush1.msra.mxu0 0.0
    %2361 = vmatprep.subr.mxu0 0.0
    %2362 = vmatpush1.msra.mxu0 0.0
    %2363 = vmatprep.subr.mxu0 0.0
    %2364 = vmatpush1.msra.mxu0 0.0
    %2365 = vmatprep.subr.mxu0 0.0
    %2366 = vmatpush1.msra.mxu0 0.0
    %2367 = vmatprep.subr.mxu0 0.0
    %2368 = vmatpush1.msra.mxu0 0.0
    %2369 = vmatprep.subr.mxu0 0.0
    %2370 = vmatpush1.msra.mxu0 0.0
    %2371 = vmatprep.subr.mxu0 0.0
    %2372 = vmatpush1.msra.mxu0 0.0
    %2373 = vmatprep.subr.mxu0 0.0
    %2374 = vmatpush1.msra.mxu0 0.0
    %2375 = vmatprep.subr.mxu0 0.0
    %2376 = vmatpush1.msra.mxu0 0.0
    %2377 = vmatprep.subr.mxu0 0.0
    %2378 = vmatpush1.msra.mxu0 0.0
    %2379 = vmatprep.mubr.f32.mxu0 0.0
    %2380 = vmatmul.mubr.f32.gmra.mrb[0].mxu0 %v2097
    %v2381 = vpop.f32.mrb[0].mxu0
    %v2382 = vadd.f32 %v350, %v2381
    %v2383 = vpop.f32.mrb[0].mxu0
    %2384 = vdwg.mxu0
    %v2385 = vadd.f32 %v2170, %v2311
    %v2386 = vxor.u32 %v2385, 2147483648
    %v2387 = vmul.f32 %v2386, 1.442695
    %v2388 = vpow.pop %v2387
    %v2389 = vadd.f32 %v2388, 1.0
    %v2390 = vrcp.pop %v2389
    %v2391 = vmul.f32 1.0, %v2390
    %v2392 = vadd.f32 %v2172, %v2313
    %v2393 = vxor.u32 %v2392, 2147483648
    %v2394 = vmul.f32 %v2393, 1.442695
    %v2395 = vpow.pop %v2394
    %v2396 = vadd.f32 %v2395, 1.0
    %v2397 = vrcp.pop %v2396
    %v2398 = vmul.f32 1.0, %v2397
    %v2399 = vmul.f32 %v2391, %v2382
    %v2400 = vadd.f32 %v2241, %v2399
    %v2401 = vtanh.pop %v2400
    %v2402 = vsub.f32 1.0, %v2398
    %v2403 = vmul.f32 %v2402, %v2401
    %v2404 = vmul.f32 %v2398, %v2097
    %v2405 = vadd.f32 %v2403, %v2404
    %vm2406 = vcmp.gt.s32.totalorder %v119, 6
    %v2407 = vsel %vm2406, 1, 0
    %2408 = vset.pattern.permute.xlu0 0
    %2409 = vperm.xlu0 %2408, %v2407
    %v2410 = vpop.permute.xlu0 %2409
    %vm2411 = vcmp.eq.s32.totalorder %v2410, 1
    %v2412 = vsel %vm2411, %v2405, %v2097
    %s2413 = scalar_lea.vmem [#allocation2], 14
    %v2414 = vld [vmem:[%s2413] sm:$0x3]
    %v2416 = vsel %vm193, %v2414, 0
    %2418 = vmatprep.subr.mxu0 %v121
    %2419 = vmatpush1.msra.mxu0 %v120
    %2420 = vmatprep.subr.mxu0 %v124
    %2421 = vmatpush1.msra.mxu0 %v123
    %2422 = vmatprep.subr.mxu0 0.0
    %2423 = vmatpush1.msra.mxu0 0.0
    %2424 = vmatprep.subr.mxu0 0.0
    %2425 = vmatpush1.msra.mxu0 0.0
    %2426 = vmatprep.subr.mxu0 0.0
    %2427 = vmatpush1.msra.mxu0 0.0
    %2428 = vmatprep.subr.mxu0 0.0
    %2429 = vmatpush1.msra.mxu0 0.0
    %2430 = vmatprep.subr.mxu0 0.0
    %2431 = vmatpush1.msra.mxu0 0.0
    %2432 = vmatprep.subr.mxu0 0.0
    %2433 = vmatpush1.msra.mxu0 0.0
    %2434 = vmatprep.subr.mxu0 0.0
    %2435 = vmatpush1.msra.mxu0 0.0
    %2436 = vmatprep.subr.mxu0 0.0
    %2437 = vmatpush1.msra.mxu0 0.0
    %2438 = vmatprep.subr.mxu0 0.0
    %2439 = vmatpush1.msra.mxu0 0.0
    %2440 = vmatprep.subr.mxu0 0.0
    %2441 = vmatpush1.msra.mxu0 0.0
    %2442 = vmatprep.subr.mxu0 0.0
    %2443 = vmatpush1.msra.mxu0 0.0
    %2444 = vmatprep.subr.mxu0 0.0
    %2445 = vmatpush1.msra.mxu0 0.0
    %2446 = vmatprep.subr.mxu0 0.0
    %2447 = vmatpush1.msra.mxu0 0.0
    %2448 = vmatprep.subr.mxu0 0.0
    %2449 = vmatpush1.msra.mxu0 0.0
    %2450 = vmatprep.subr.mxu0 0.0
    %2451 = vmatpush1.msra.mxu0 0.0
    %2452 = vmatprep.subr.mxu0 0.0
    %2453 = vmatpush1.msra.mxu0 0.0
    %2454 = vmatprep.subr.mxu0 0.0
    %2455 = vmatpush1.msra.mxu0 0.0
    %2456 = vmatprep.subr.mxu0 0.0
    %2457 = vmatpush1.msra.mxu0 0.0
    %2458 = vmatprep.subr.mxu0 0.0
    %2459 = vmatpush1.msra.mxu0 0.0
    %2460 = vmatprep.subr.mxu0 0.0
    %2461 = vmatpush1.msra.mxu0 0.0
    %2462 = vmatprep.subr.mxu0 0.0
    %2463 = vmatpush1.msra.mxu0 0.0
    %2464 = vmatprep.subr.mxu0 0.0
    %2465 = vmatpush1.msra.mxu0 0.0
    %2466 = vmatprep.subr.mxu0 0.0
    %2467 = vmatpush1.msra.mxu0 0.0
    %2468 = vmatprep.subr.mxu0 0.0
    %2469 = vmatpush1.msra.mxu0 0.0
    %2470 = vmatprep.subr.mxu0 0.0
    %2471 = vmatpush1.msra.mxu0 0.0
    %2472 = vmatprep.subr.mxu0 0.0
    %2473 = vmatpush1.msra.mxu0 0.0
    %2474 = vmatprep.subr.mxu0 0.0
    %2475 = vmatpush1.msra.mxu0 0.0
    %2476 = vmatprep.subr.mxu0 0.0
    %2477 = vmatpush1.msra.mxu0 0.0
    %2478 = vmatprep.subr.mxu0 0.0
    %2479 = vmatpush1.msra.mxu0 0.0
    %2480 = vmatprep.subr.mxu0 0.0
    %2481 = vmatpush1.msra.mxu0 0.0
    %2482 = vmatprep.mubr.f32.mxu0 0.0
    %2483 = vmatmul.mubr.f32.gmra.mrb[0].mxu0 %v2416
    %v2484 = vpop.f32.mrb[0].mxu0
    %v2485 = vadd.f32 %v181, %v2484
    %v2486 = vpop.f32.mrb[0].mxu0
    %v2487 = vadd.f32 %v185, %v2486
    %2488 = vdwg.mxu0
    %2489 = vmatprep.subr.mxu0 0.0
    %2490 = vmatpush1.msra.mxu0 %v122
    %2491 = vmatprep.subr.mxu0 0.0
    %2492 = vmatpush1.msra.mxu0 %v125
    %2493 = vmatprep.subr.mxu0 0.0
    %2494 = vmatpush1.msra.mxu0 0.0
    %2495 = vmatprep.subr.mxu0 0.0
    %2496 = vmatpush1.msra.mxu0 0.0
    %2497 = vmatprep.subr.mxu0 0.0
    %2498 = vmatpush1.msra.mxu0 0.0
    %2499 = vmatprep.subr.mxu0 0.0
    %2500 = vmatpush1.msra.mxu0 0.0
    %2501 = vmatprep.subr.mxu0 0.0
    %2502 = vmatpush1.msra.mxu0 0.0
    %2503 = vmatprep.subr.mxu0 0.0
    %2504 = vmatpush1.msra.mxu0 0.0
    %2505 = vmatprep.subr.mxu0 0.0
    %2506 = vmatpush1.msra.mxu0 0.0
    %2507 = vmatprep.subr.mxu0 0.0
    %2508 = vmatpush1.msra.mxu0 0.0
    %2509 = vmatprep.subr.mxu0 0.0
    %2510 = vmatpush1.msra.mxu0 0.0
    %2511 = vmatprep.subr.mxu0 0.0
    %2512 = vmatpush1.msra.mxu0 0.0
    %2513 = vmatprep.subr.mxu0 0.0
    %2514 = vmatpush1.msra.mxu0 0.0
    %2515 = vmatprep.subr.mxu0 0.0
    %2516 = vmatpush1.msra.mxu0 0.0
    %2517 = vmatprep.subr.mxu0 0.0
    %2518 = vmatpush1.msra.mxu0 0.0
    %2519 = vmatprep.subr.mxu0 0.0
    %2520 = vmatpush1.msra.mxu0 0.0
    %2521 = vmatprep.subr.mxu0 0.0
    %2522 = vmatpush1.msra.mxu0 0.0
    %2523 = vmatprep.subr.mxu0 0.0
    %2524 = vmatpush1.msra.mxu0 0.0
    %2525 = vmatprep.subr.mxu0 0.0
    %2526 = vmatpush1.msra.mxu0 0.0
    %2527 = vmatprep.subr.mxu0 0.0
    %2528 = vmatpush1.msra.mxu0 0.0
    %2529 = vmatprep.subr.mxu0 0.0
    %2530 = vmatpush1.msra.mxu0 0.0
    %2531 = vmatprep.subr.mxu0 0.0
    %2532 = vmatpush1.msra.mxu0 0.0
    %2533 = vmatprep.subr.mxu0 0.0
    %2534 = vmatpush1.msra.mxu0 0.0
    %2535 = vmatprep.subr.mxu0 0.0
    %2536 = vmatpush1.msra.mxu0 0.0
    %2537 = vmatprep.subr.mxu0 0.0
    %2538 = vmatpush1.msra.mxu0 0.0
    %2539 = vmatprep.subr.mxu0 0.0
    %2540 = vmatpush1.msra.mxu0 0.0
    %2541 = vmatprep.subr.mxu0 0.0
    %2542 = vmatpush1.msra.mxu0 0.0
    %2543 = vmatprep.subr.mxu0 0.0
    %2544 = vmatpush1.msra.mxu0 0.0
    %2545 = vmatprep.subr.mxu0 0.0
    %2546 = vmatpush1.msra.mxu0 0.0
    %2547 = vmatprep.subr.mxu0 0.0
    %2548 = vmatpush1.msra.mxu0 0.0
    %2549 = vmatprep.subr.mxu0 0.0
    %2550 = vmatpush1.msra.mxu0 0.0
    %2551 = vmatprep.subr.mxu0 0.0
    %2552 = vmatpush1.msra.mxu0 0.0
    %2553 = vmatprep.mubr.f32.mxu0 0.0
    %2554 = vmatmul.mubr.f32.gmra.mrb[0].mxu0 %v2416
    %v2555 = vpop.f32.mrb[0].mxu0
    %v2556 = vadd.f32 %v189, %v2555
    %v2557 = vpop.f32.mrb[0].mxu0
    %2558 = vdwg.mxu0
    %2559 = vmatprep.subr.mxu0 %v127
    %2560 = vmatpush1.msra.mxu0 %v126
    %2561 = vmatprep.subr.mxu0 %v130
    %2562 = vmatpush1.msra.mxu0 %v129
    %2563 = vmatprep.subr.mxu0 %v133
    %2564 = vmatpush1.msra.mxu0 %v132
    %2565 = vmatprep.subr.mxu0 %v136
    %2566 = vmatpush1.msra.mxu0 %v135
    %2567 = vmatprep.subr.mxu0 %v139
    %2568 = vmatpush1.msra.mxu0 %v138
    %2569 = vmatprep.subr.mxu0 %v142
    %2570 = vmatpush1.msra.mxu0 %v141
    %2571 = vmatprep.subr.mxu0 %v145
    %2572 = vmatpush1.msra.mxu0 %v144
    %2573 = vmatprep.subr.mxu0 %v148
    %2574 = vmatpush1.msra.mxu0 %v147
    %2575 = vmatprep.subr.mxu0 %v151
    %2576 = vmatpush1.msra.mxu0 %v150
    %2577 = vmatprep.subr.mxu0 %v154
    %2578 = vmatpush1.msra.mxu0 %v153
    %2579 = vmatprep.subr.mxu0 %v157
    %2580 = vmatpush1.msra.mxu0 %v156
    %2581 = vmatprep.subr.mxu0 %v160
    %2582 = vmatpush1.msra.mxu0 %v159
    %2583 = vmatprep.subr.mxu0 %v163
    %2584 = vmatpush1.msra.mxu0 %v162
    %2585 = vmatprep.subr.mxu0 %v166
    %2586 = vmatpush1.msra.mxu0 %v165
    %2587 = vmatprep.subr.mxu0 %v169
    %2588 = vmatpush1.msra.mxu0 %v168
    %2589 = vmatprep.subr.mxu0 %v172
    %2590 = vmatpush1.msra.mxu0 %v171
    %2591 = vmatprep.subr.mxu0 0.0
    %2592 = vmatpush1.msra.mxu0 0.0
    %2593 = vmatprep.subr.mxu0 0.0
    %2594 = vmatpush1.msra.mxu0 0.0
    %2595 = vmatprep.subr.mxu0 0.0
    %2596 = vmatpush1.msra.mxu0 0.0
    %2597 = vmatprep.subr.mxu0 0.0
    %2598 = vmatpush1.msra.mxu0 0.0
    %2599 = vmatprep.subr.mxu0 0.0
    %2600 = vmatpush1.msra.mxu0 0.0
    %2601 = vmatprep.subr.mxu0 0.0
    %2602 = vmatpush1.msra.mxu0 0.0
    %2603 = vmatprep.subr.mxu0 0.0
    %2604 = vmatpush1.msra.mxu0 0.0
    %2605 = vmatprep.subr.mxu0 0.0
    %2606 = vmatpush1.msra.mxu0 0.0
    %2607 = vmatprep.subr.mxu0 0.0
    %2608 = vmatpush1.msra.mxu0 0.0
    %2609 = vmatprep.subr.mxu0 0.0
    %2610 = vmatpush1.msra.mxu0 0.0
    %2611 = vmatprep.subr.mxu0 0.0
    %2612 = vmatpush1.msra.mxu0 0.0
    %2613 = vmatprep.subr.mxu0 0.0
    %2614 = vmatpush1.msra.mxu0 0.0
    %2615 = vmatprep.subr.mxu0 0.0
    %2616 = vmatpush1.msra.mxu0 0.0
    %2617 = vmatprep.subr.mxu0 0.0
    %2618 = vmatpush1.msra.mxu0 0.0
    %2619 = vmatprep.subr.mxu0 0.0
    %2620 = vmatpush1.msra.mxu0 0.0
    %2621 = vmatprep.subr.mxu0 0.0
    %2622 = vmatpush1.msra.mxu0 0.0
    %2623 = vmatprep.mubr.f32.mxu0 0.0
    %2624 = vmatmul.mubr.f32.gmra.mrb[0].mxu0 %v2412
    %v2625 = vpop.f32.mrb[0].mxu0
    %v2626 = vadd.f32 %v342, %v2625
    %v2627 = vpop.f32.mrb[0].mxu0
    %v2628 = vadd.f32 %v346, %v2627
    %2629 = vdwg.mxu0
    %2630 = vmatprep.subr.mxu0 0.0
    %2631 = vmatpush1.msra.mxu0 %v128
    %2632 = vmatprep.subr.mxu0 0.0
    %2633 = vmatpush1.msra.mxu0 %v131
    %2634 = vmatprep.subr.mxu0 0.0
    %2635 = vmatpush1.msra.mxu0 %v134
    %2636 = vmatprep.subr.mxu0 0.0
    %2637 = vmatpush1.msra.mxu0 %v137
    %2638 = vmatprep.subr.mxu0 0.0
    %2639 = vmatpush1.msra.mxu0 %v140
    %2640 = vmatprep.subr.mxu0 0.0
    %2641 = vmatpush1.msra.mxu0 %v143
    %2642 = vmatprep.subr.mxu0 0.0
    %2643 = vmatpush1.msra.mxu0 %v146
    %2644 = vmatprep.subr.mxu0 0.0
    %2645 = vmatpush1.msra.mxu0 %v149
    %2646 = vmatprep.subr.mxu0 0.0
    %2647 = vmatpush1.msra.mxu0 %v152
    %2648 = vmatprep.subr.mxu0 0.0
    %2649 = vmatpush1.msra.mxu0 %v155
    %2650 = vmatprep.subr.mxu0 0.0
    %2651 = vmatpush1.msra.mxu0 %v158
    %2652 = vmatprep.subr.mxu0 0.0
    %2653 = vmatpush1.msra.mxu0 %v161
    %2654 = vmatprep.subr.mxu0 0.0
    %2655 = vmatpush1.msra.mxu0 %v164
    %2656 = vmatprep.subr.mxu0 0.0
    %2657 = vmatpush1.msra.mxu0 %v167
    %2658 = vmatprep.subr.mxu0 0.0
    %2659 = vmatpush1.msra.mxu0 %v170
    %2660 = vmatprep.subr.mxu0 0.0
    %2661 = vmatpush1.msra.mxu0 %v173
    %2662 = vmatprep.subr.mxu0 0.0
    %2663 = vmatpush1.msra.mxu0 0.0
    %2664 = vmatprep.subr.mxu0 0.0
    %2665 = vmatpush1.msra.mxu0 0.0
    %2666 = vmatprep.subr.mxu0 0.0
    %2667 = vmatpush1.msra.mxu0 0.0
    %2668 = vmatprep.subr.mxu0 0.0
    %2669 = vmatpush1.msra.mxu0 0.0
    %2670 = vmatprep.subr.mxu0 0.0
    %2671 = vmatpush1.msra.mxu0 0.0
    %2672 = vmatprep.subr.mxu0 0.0
    %2673 = vmatpush1.msra.mxu0 0.0
    %2674 = vmatprep.subr.mxu0 0.0
    %2675 = vmatpush1.msra.mxu0 0.0
    %2676 = vmatprep.subr.mxu0 0.0
    %2677 = vmatpush1.msra.mxu0 0.0
    %2678 = vmatprep.subr.mxu0 0.0
    %2679 = vmatpush1.msra.mxu0 0.0
    %2680 = vmatprep.subr.mxu0 0.0
    %2681 = vmatpush1.msra.mxu0 0.0
    %2682 = vmatprep.subr.mxu0 0.0
    %2683 = vmatpush1.msra.mxu0 0.0
    %2684 = vmatprep.subr.mxu0 0.0
    %2685 = vmatpush1.msra.mxu0 0.0
    %2686 = vmatprep.subr.mxu0 0.0
    %2687 = vmatpush1.msra.mxu0 0.0
    %2688 = vmatprep.subr.mxu0 0.0
    %2689 = vmatpush1.msra.mxu0 0.0
    %2690 = vmatprep.subr.mxu0 0.0
    %2691 = vmatpush1.msra.mxu0 0.0
    %2692 = vmatprep.subr.mxu0 0.0
    %2693 = vmatpush1.msra.mxu0 0.0
    %2694 = vmatprep.mubr.f32.mxu0 0.0
    %2695 = vmatmul.mubr.f32.gmra.mrb[0].mxu0 %v2412
    %v2696 = vpop.f32.mrb[0].mxu0
    %v2697 = vadd.f32 %v350, %v2696
    %v2698 = vpop.f32.mrb[0].mxu0
    %2699 = vdwg.mxu0
    %v2700 = vadd.f32 %v2485, %v2626
    %v2701 = vxor.u32 %v2700, 2147483648
    %v2702 = vmul.f32 %v2701, 1.442695
    %v2703 = vpow.pop %v2702
    %v2704 = vadd.f32 %v2703, 1.0
    %v2705 = vrcp.pop %v2704
    %v2706 = vmul.f32 1.0, %v2705
    %v2707 = vadd.f32 %v2487, %v2628
    %v2708 = vxor.u32 %v2707, 2147483648
    %v2709 = vmul.f32 %v2708, 1.442695
    %v2710 = vpow.pop %v2709
    %v2711 = vadd.f32 %v2710, 1.0
    %v2712 = vrcp.pop %v2711
    %v2713 = vmul.f32 1.0, %v2712
    %v2714 = vmul.f32 %v2706, %v2697
    %v2715 = vadd.f32 %v2556, %v2714
    %v2716 = vtanh.pop %v2715
    %v2717 = vsub.f32 1.0, %v2713
    %v2718 = vmul.f32 %v2717, %v2716
    %v2719 = vmul.f32 %v2713, %v2412
    %v2720 = vadd.f32 %v2718, %v2719
    %vm2721 = vcmp.gt.s32.totalorder %v119, 7
    %v2722 = vsel %vm2721, 1, 0
    %2723 = vset.pattern.permute.xlu0 0
    %2724 = vperm.xlu0 %2723, %v2722
    %v2725 = vpop.permute.xlu0 %2724
    %vm2726 = vcmp.eq.s32.totalorder %v2725, 1
    %v2727 = vsel %vm2726, %v2720, %v2412
    %v2728 = vld [vmem:[#allocation5] sm:$0x3]
    %v2729 = vld [vmem:[#allocation10] sm:$0xff]
    %v2730 = vld [vmem:[#allocation10 + $0x8] sm:$0xff]
    %v2731 = vld [vmem:[#allocation10 + $0x10] sm:$0xff]
    %v2732 = vld [vmem:[#allocation10 + $0x18] sm:$0xff]
    %v2733 = vld [vmem:[#allocation10 + $0x20] sm:$0xff]
    %v2734 = vld [vmem:[#allocation10 + $0x28] sm:$0xff]
    %v2735 = vld [vmem:[#allocation11] sm:$0xff]
    %v2736 = vld [vmem:[#allocation11 + $0x8] sm:$0xff]
    %v2737 = vld [vmem:[#allocation11 + $0x10] sm:$0xff]
    %v2738 = vld [vmem:[#allocation11 + $0x18] sm:$0xff]
    %v2739 = vld [vmem:[#allocation11 + $0x20] sm:$0xff]
    %v2740 = vld [vmem:[#allocation11 + $0x28] sm:$0xff]
    %v2741 = vld [vmem:[#allocation11 + $0x30] sm:$0xff]
    %v2742 = vld [vmem:[#allocation11 + $0x38] sm:$0xff]
    %v2743 = vld [vmem:[#allocation11 + $0x40] sm:$0xff]
    %v2744 = vld [vmem:[#allocation11 + $0x48] sm:$0xff]
    %v2745 = vld [vmem:[#allocation11 + $0x50] sm:$0xff]
    %v2746 = vld [vmem:[#allocation11 + $0x58] sm:$0xff]
    %v2747 = vld [vmem:[#allocation11 + $0x60] sm:$0xff]
    %v2748 = vld [vmem:[#allocation11 + $0x68] sm:$0xff]
    %v2749 = vld [vmem:[#allocation11 + $0x70] sm:$0xff]
    %v2750 = vld [vmem:[#allocation11 + $0x78] sm:$0xff]
    %v2751 = vld [vmem:[#allocation11 + $0x80] sm:$0xff]
    %v2752 = vld [vmem:[#allocation11 + $0x88] sm:$0xff]
    %v2753 = vld [vmem:[#allocation11 + $0x90] sm:$0xff]
    %v2754 = vld [vmem:[#allocation11 + $0x98] sm:$0xff]
    %v2755 = vld [vmem:[#allocation11 + $0xa0] sm:$0xff]
    %v2756 = vld [vmem:[#allocation11 + $0xa8] sm:$0xff]
    %v2757 = vld [vmem:[#allocation11 + $0xb0] sm:$0xff]
    %v2758 = vld [vmem:[#allocation11 + $0xb8] sm:$0xff]
    %v2759 = vld [vmem:[#allocation11 + $0xc0] sm:$0xff]
    %v2760 = vld [vmem:[#allocation11 + $0xc8] sm:$0xff]
    %v2761 = vld [vmem:[#allocation11 + $0xd0] sm:$0xff]
    %v2762 = vld [vmem:[#allocation11 + $0xd8] sm:$0xff]
    %v2763 = vld [vmem:[#allocation11 + $0xe0] sm:$0xff]
    %v2764 = vld [vmem:[#allocation11 + $0xe8] sm:$0xff]
    %v2765 = vld [vmem:[#allocation11 + $0xf0] sm:$0xff]
    %v2766 = vld [vmem:[#allocation11 + $0xf8] sm:$0xff]
    %v2767 = vld [vmem:[#allocation11 + $0x100] sm:$0xff]
    %v2768 = vld [vmem:[#allocation11 + $0x108] sm:$0xff]
    %v2769 = vld [vmem:[#allocation11 + $0x110] sm:$0xff]
    %v2770 = vld [vmem:[#allocation11 + $0x118] sm:$0xff]
    %v2771 = vld [vmem:[#allocation11 + $0x120] sm:$0xff]
    %v2772 = vld [vmem:[#allocation11 + $0x128] sm:$0xff]
    %v2773 = vld [vmem:[#allocation11 + $0x130] sm:$0xff]
    %v2774 = vld [vmem:[#allocation11 + $0x138] sm:$0xff]
    %v2775 = vld [vmem:[#allocation11 + $0x140] sm:$0xff]
    %v2776 = vld [vmem:[#allocation11 + $0x148] sm:$0xff]
    %v2777 = vld [vmem:[#allocation11 + $0x150] sm:$0xff]
    %v2778 = vld [vmem:[#allocation11 + $0x158] sm:$0xff]
    %v2779 = vld [vmem:[#allocation11 + $0x160] sm:$0xff]
    %v2780 = vld [vmem:[#allocation11 + $0x168] sm:$0xff]
    %v2781 = vld [vmem:[#allocation11 + $0x170] sm:$0xff]
    %v2782 = vld [vmem:[#allocation11 + $0x178] sm:$0xff]
    %v2783 = vld [vmem:[%s9] sm:$0x7]
    %v2784 = vld [vmem:[%s10] sm:$0x7]
    %v2786 = vlaneseq
    %v2787 = vshrl.u32 %v2786, 7
    %v2788 = vsub.s32 0, %v2787
    %v2789 = vrot.slane %v2783, %v2788
    %v2790 = vlaneseq
    %v2791 = vshrl.u32 %v2790, 7
    %v2792 = vsub.s32 1, %v2791
    %v2793 = vrot.slane %v2783, %v2792
    %v2794 = vlaneseq
    %v2795 = vshrl.u32 %v2794, 7
    %v2796 = vsub.s32 2, %v2795
    %v2797 = vrot.slane %v2783, %v2796
    %v2802 = vsel %vm193, %v2728, 0
    %2804 = vmatprep.subr.mxu0 %v2730
    %2805 = vmatpush1.msra.mxu0 %v2729
    %2806 = vmatprep.subr.mxu0 %v2733
    %2807 = vmatpush1.msra.mxu0 %v2732
    %2808 = vmatprep.subr.mxu0 0.0
    %2809 = vmatpush1.msra.mxu0 0.0
    %2810 = vmatprep.subr.mxu0 0.0
    %2811 = vmatpush1.msra.mxu0 0.0
    %2812 = vmatprep.subr.mxu0 0.0
    %2813 = vmatpush1.msra.mxu0 0.0
    %2814 = vmatprep.subr.mxu0 0.0
    %2815 = vmatpush1.msra.mxu0 0.0
    %2816 = vmatprep.subr.mxu0 0.0
    %2817 = vmatpush1.msra.mxu0 0.0
    %2818 = vmatprep.subr.mxu0 0.0
    %2819 = vmatpush1.msra.mxu0 0.0
    %2820 = vmatprep.subr.mxu0 0.0
    %2821 = vmatpush1.msra.mxu0 0.0
    %2822 = vmatprep.subr.mxu0 0.0
    %2823 = vmatpush1.msra.mxu0 0.0
    %2824 = vmatprep.subr.mxu0 0.0
    %2825 = vmatpush1.msra.mxu0 0.0
    %2826 = vmatprep.subr.mxu0 0.0
    %2827 = vmatpush1.msra.mxu0 0.0
    %2828 = vmatprep.subr.mxu0 0.0
    %2829 = vmatpush1.msra.mxu0 0.0
    %2830 = vmatprep.subr.mxu0 0.0
    %2831 = vmatpush1.msra.mxu0 0.0
    %2832 = vmatprep.subr.mxu0 0.0
    %2833 = vmatpush1.msra.mxu0 0.0
    %2834 = vmatprep.subr.mxu0 0.0
    %2835 = vmatpush1.msra.mxu0 0.0
    %2836 = vmatprep.subr.mxu0 0.0
    %2837 = vmatpush1.msra.mxu0 0.0
    %2838 = vmatprep.subr.mxu0 0.0
    %2839 = vmatpush1.msra.mxu0 0.0
    %2840 = vmatprep.subr.mxu0 0.0
    %2841 = vmatpush1.msra.mxu0 0.0
    %2842 = vmatprep.subr.mxu0 0.0
    %2843 = vmatpush1.msra.mxu0 0.0
    %2844 = vmatprep.subr.mxu0 0.0
    %2845 = vmatpush1.msra.mxu0 0.0
    %2846 = vmatprep.subr.mxu0 0.0
    %2847 = vmatpush1.msra.mxu0 0.0
    %2848 = vmatprep.subr.mxu0 0.0
    %2849 = vmatpush1.msra.mxu0 0.0
    %2850 = vmatprep.subr.mxu0 0.0
    %2851 = vmatpush1.msra.mxu0 0.0
    %2852 = vmatprep.subr.mxu0 0.0
    %2853 = vmatpush1.msra.mxu0 0.0
    %2854 = vmatprep.subr.mxu0 0.0
    %2855 = vmatpush1.msra.mxu0 0.0
    %2856 = vmatprep.subr.mxu0 0.0
    %2857 = vmatpush1.msra.mxu0 0.0
    %2858 = vmatprep.subr.mxu0 0.0
    %2859 = vmatpush1.msra.mxu0 0.0
    %2860 = vmatprep.subr.mxu0 0.0
    %2861 = vmatpush1.msra.mxu0 0.0
    %2862 = vmatprep.subr.mxu0 0.0
    %2863 = vmatpush1.msra.mxu0 0.0
    %2864 = vmatprep.subr.mxu0 0.0
    %2865 = vmatpush1.msra.mxu0 0.0
    %2866 = vmatprep.subr.mxu0 0.0
    %2867 = vmatpush1.msra.mxu0 0.0
    %2868 = vmatprep.mubr.f32.mxu0 0.0
    %2869 = vmatmul.mubr.f32.gmra.mrb[0].mxu0 %v2802
    %v2870 = vpop.f32.mrb[0].mxu0
    %v2871 = vadd.f32 %v2789, %v2870
    %v2872 = vpop.f32.mrb[0].mxu0
    %v2873 = vadd.f32 %v2793, %v2872
    %2874 = vdwg.mxu0
    %2875 = vmatprep.subr.mxu0 0.0
    %2876 = vmatpush1.msra.mxu0 %v2731
    %2877 = vmatprep.subr.mxu0 0.0
    %2878 = vmatpush1.msra.mxu0 %v2734
    %2879 = vmatprep.subr.mxu0 0.0
    %2880 = vmatpush1.msra.mxu0 0.0
    %2881 = vmatprep.subr.mxu0 0.0
    %2882 = vmatpush1.msra.mxu0 0.0
    %2883 = vmatprep.subr.mxu0 0.0
    %2884 = vmatpush1.msra.mxu0 0.0
    %2885 = vmatprep.subr.mxu0 0.0
    %2886 = vmatpush1.msra.mxu0 0.0
    %2887 = vmatprep.subr.mxu0 0.0
    %2888 = vmatpush1.msra.mxu0 0.0
    %2889 = vmatprep.subr.mxu0 0.0
    %2890 = vmatpush1.msra.mxu0 0.0
    %2891 = vmatprep.subr.mxu0 0.0
    %2892 = vmatpush1.msra.mxu0 0.0
    %2893 = vmatprep.subr.mxu0 0.0
    %2894 = vmatpush1.msra.mxu0 0.0
    %2895 = vmatprep.subr.mxu0 0.0
    %2896 = vmatpush1.msra.mxu0 0.0
    %2897 = vmatprep.subr.mxu0 0.0
    %2898 = vmatpush1.msra.mxu0 0.0
    %2899 = vmatprep.subr.mxu0 0.0
    %2900 = vmatpush1.msra.mxu0 0.0
    %2901 = vmatprep.subr.mxu0 0.0
    %2902 = vmatpush1.msra.mxu0 0.0
    %2903 = vmatprep.subr.mxu0 0.0
    %2904 = vmatpush1.msra.mxu0 0.0
    %2905 = vmatprep.subr.mxu0 0.0
    %2906 = vmatpush1.msra.mxu0 0.0
    %2907 = vmatprep.subr.mxu0 0.0
    %2908 = vmatpush1.msra.mxu0 0.0
    %2909 = vmatprep.subr.mxu0 0.0
    %2910 = vmatpush1.msra.mxu0 0.0
    %2911 = vmatprep.subr.mxu0 0.0
    %2912 = vmatpush1.msra.mxu0 0.0
    %2913 = vmatprep.subr.mxu0 0.0
    %2914 = vmatpush1.msra.mxu0 0.0
    %2915 = vmatprep.subr.mxu0 0.0
    %2916 = vmatpush1.msra.mxu0 0.0
    %2917 = vmatprep.subr.mxu0 0.0
    %2918 = vmatpush1.msra.mxu0 0.0
    %2919 = vmatprep.subr.mxu0 0.0
    %2920 = vmatpush1.msra.mxu0 0.0
    %2921 = vmatprep.subr.mxu0 0.0
    %2922 = vmatpush1.msra.mxu0 0.0
    %2923 = vmatprep.subr.mxu0 0.0
    %2924 = vmatpush1.msra.mxu0 0.0
    %2925 = vmatprep.subr.mxu0 0.0
    %2926 = vmatpush1.msra.mxu0 0.0
    %2927 = vmatprep.subr.mxu0 0.0
    %2928 = vmatpush1.msra.mxu0 0.0
    %2929 = vmatprep.subr.mxu0 0.0
    %2930 = vmatpush1.msra.mxu0 0.0
    %2931 = vmatprep.subr.mxu0 0.0
    %2932 = vmatpush1.msra.mxu0 0.0
    %2933 = vmatprep.subr.mxu0 0.0
    %2934 = vmatpush1.msra.mxu0 0.0
    %2935 = vmatprep.subr.mxu0 0.0
    %2936 = vmatpush1.msra.mxu0 0.0
    %2937 = vmatprep.subr.mxu0 0.0
    %2938 = vmatpush1.msra.mxu0 0.0
    %2939 = vmatprep.mubr.f32.mxu0 0.0
    %2940 = vmatmul.mubr.f32.gmra.mrb[0].mxu0 %v2802
    %v2941 = vpop.f32.mrb[0].mxu0
    %v2942 = vadd.f32 %v2797, %v2941
    %v2943 = vpop.f32.mrb[0].mxu0
    %2944 = vdwg.mxu0
    %v2946 = vlaneseq
    %v2947 = vshrl.u32 %v2946, 7
    %v2948 = vsub.s32 0, %v2947
    %v2949 = vrot.slane %v2784, %v2948
    %v2950 = vlaneseq
    %v2951 = vshrl.u32 %v2950, 7
    %v2952 = vsub.s32 1, %v2951
    %v2953 = vrot.slane %v2784, %v2952
    %v2954 = vlaneseq
    %v2955 = vshrl.u32 %v2954, 7
    %v2956 = vsub.s32 2, %v2955
    %v2957 = vrot.slane %v2784, %v2956
    %2961 = vmatprep.subr.mxu0 %v2736
    %2962 = vmatpush1.msra.mxu0 %v2735
    %2963 = vmatprep.subr.mxu0 %v2739
    %2964 = vmatpush1.msra.mxu0 %v2738
    %2965 = vmatprep.subr.mxu0 %v2742
    %2966 = vmatpush1.msra.mxu0 %v2741
    %2967 = vmatprep.subr.mxu0 %v2745
    %2968 = vmatpush1.msra.mxu0 %v2744
    %2969 = vmatprep.subr.mxu0 %v2748
    %2970 = vmatpush1.msra.mxu0 %v2747
    %2971 = vmatprep.subr.mxu0 %v2751
    %2972 = vmatpush1.msra.mxu0 %v2750
    %2973 = vmatprep.subr.mxu0 %v2754
    %2974 = vmatpush1.msra.mxu0 %v2753
    %2975 = vmatprep.subr.mxu0 %v2757
    %2976 = vmatpush1.msra.mxu0 %v2756
    %2977 = vmatprep.subr.mxu0 %v2760
    %2978 = vmatpush1.msra.mxu0 %v2759
    %2979 = vmatprep.subr.mxu0 %v2763
    %2980 = vmatpush1.msra.mxu0 %v2762
    %2981 = vmatprep.subr.mxu0 %v2766
    %2982 = vmatpush1.msra.mxu0 %v2765
    %2983 = vmatprep.subr.mxu0 %v2769
    %2984 = vmatpush1.msra.mxu0 %v2768
    %2985 = vmatprep.subr.mxu0 %v2772
    %2986 = vmatpush1.msra.mxu0 %v2771
    %2987 = vmatprep.subr.mxu0 %v2775
    %2988 = vmatpush1.msra.mxu0 %v2774
    %2989 = vmatprep.subr.mxu0 %v2778
    %2990 = vmatpush1.msra.mxu0 %v2777
    %2991 = vmatprep.subr.mxu0 %v2781
    %2992 = vmatpush1.msra.mxu0 %v2780
    %2993 = vmatprep.subr.mxu0 0.0
    %2994 = vmatpush1.msra.mxu0 0.0
    %2995 = vmatprep.subr.mxu0 0.0
    %2996 = vmatpush1.msra.mxu0 0.0
    %2997 = vmatprep.subr.mxu0 0.0
    %2998 = vmatpush1.msra.mxu0 0.0
    %2999 = vmatprep.subr.mxu0 0.0
    %3000 = vmatpush1.msra.mxu0 0.0
    %3001 = vmatprep.subr.mxu0 0.0
    %3002 = vmatpush1.msra.mxu0 0.0
    %3003 = vmatprep.subr.mxu0 0.0
    %3004 = vmatpush1.msra.mxu0 0.0
    %3005 = vmatprep.subr.mxu0 0.0
    %3006 = vmatpush1.msra.mxu0 0.0
    %3007 = vmatprep.subr.mxu0 0.0
    %3008 = vmatpush1.msra.mxu0 0.0
    %3009 = vmatprep.subr.mxu0 0.0
    %3010 = vmatpush1.msra.mxu0 0.0
    %3011 = vmatprep.subr.mxu0 0.0
    %3012 = vmatpush1.msra.mxu0 0.0
    %3013 = vmatprep.subr.mxu0 0.0
    %3014 = vmatpush1.msra.mxu0 0.0
    %3015 = vmatprep.subr.mxu0 0.0
    %3016 = vmatpush1.msra.mxu0 0.0
    %3017 = vmatprep.subr.mxu0 0.0
    %3018 = vmatpush1.msra.mxu0 0.0
    %3019 = vmatprep.subr.mxu0 0.0
    %3020 = vmatpush1.msra.mxu0 0.0
    %3021 = vmatprep.subr.mxu0 0.0
    %3022 = vmatpush1.msra.mxu0 0.0
    %3023 = vmatprep.subr.mxu0 0.0
    %3024 = vmatpush1.msra.mxu0 0.0
    %3025 = vmatprep.mubr.f32.mxu0 0.0
    %3026 = vmatmul.mubr.f32.gmra.mrb[0].mxu0 0.0
    %v3027 = vpop.f32.mrb[0].mxu0
    %v3028 = vadd.f32 %v2949, %v3027
    %v3029 = vpop.f32.mrb[0].mxu0
    %v3030 = vadd.f32 %v2953, %v3029
    %3031 = vdwg.mxu0
    %3032 = vmatprep.subr.mxu0 0.0
    %3033 = vmatpush1.msra.mxu0 %v2737
    %3034 = vmatprep.subr.mxu0 0.0
    %3035 = vmatpush1.msra.mxu0 %v2740
    %3036 = vmatprep.subr.mxu0 0.0
    %3037 = vmatpush1.msra.mxu0 %v2743
    %3038 = vmatprep.subr.mxu0 0.0
    %3039 = vmatpush1.msra.mxu0 %v2746
    %3040 = vmatprep.subr.mxu0 0.0
    %3041 = vmatpush1.msra.mxu0 %v2749
    %3042 = vmatprep.subr.mxu0 0.0
    %3043 = vmatpush1.msra.mxu0 %v2752
    %3044 = vmatprep.subr.mxu0 0.0
    %3045 = vmatpush1.msra.mxu0 %v2755
    %3046 = vmatprep.subr.mxu0 0.0
    %3047 = vmatpush1.msra.mxu0 %v2758
    %3048 = vmatprep.subr.mxu0 0.0
    %3049 = vmatpush1.msra.mxu0 %v2761
    %3050 = vmatprep.subr.mxu0 0.0
    %3051 = vmatpush1.msra.mxu0 %v2764
    %3052 = vmatprep.subr.mxu0 0.0
    %3053 = vmatpush1.msra.mxu0 %v2767
    %3054 = vmatprep.subr.mxu0 0.0
    %3055 = vmatpush1.msra.mxu0 %v2770
    %3056 = vmatprep.subr.mxu0 0.0
    %3057 = vmatpush1.msra.mxu0 %v2773
    %3058 = vmatprep.subr.mxu0 0.0
    %3059 = vmatpush1.msra.mxu0 %v2776
    %3060 = vmatprep.subr.mxu0 0.0
    %3061 = vmatpush1.msra.mxu0 %v2779
    %3062 = vmatprep.subr.mxu0 0.0
    %3063 = vmatpush1.msra.mxu0 %v2782
    %3064 = vmatprep.subr.mxu0 0.0
    %3065 = vmatpush1.msra.mxu0 0.0
    %3066 = vmatprep.subr.mxu0 0.0
    %3067 = vmatpush1.msra.mxu0 0.0
    %3068 = vmatprep.subr.mxu0 0.0
    %3069 = vmatpush1.msra.mxu0 0.0
    %3070 = vmatprep.subr.mxu0 0.0
    %3071 = vmatpush1.msra.mxu0 0.0
    %3072 = vmatprep.subr.mxu0 0.0
    %3073 = vmatpush1.msra.mxu0 0.0
    %3074 = vmatprep.subr.mxu0 0.0
    %3075 = vmatpush1.msra.mxu0 0.0
    %3076 = vmatprep.subr.mxu0 0.0
    %3077 = vmatpush1.msra.mxu0 0.0
    %3078 = vmatprep.subr.mxu0 0.0
    %3079 = vmatpush1.msra.mxu0 0.0
    %3080 = vmatprep.subr.mxu0 0.0
    %3081 = vmatpush1.msra.mxu0 0.0
    %3082 = vmatprep.subr.mxu0 0.0
    %3083 = vmatpush1.msra.mxu0 0.0
    %3084 = vmatprep.subr.mxu0 0.0
    %3085 = vmatpush1.msra.mxu0 0.0
    %3086 = vmatprep.subr.mxu0 0.0
    %3087 = vmatpush1.msra.mxu0 0.0
    %3088 = vmatprep.subr.mxu0 0.0
    %3089 = vmatpush1.msra.mxu0 0.0
    %3090 = vmatprep.subr.mxu0 0.0
    %3091 = vmatpush1.msra.mxu0 0.0
    %3092 = vmatprep.subr.mxu0 0.0
    %3093 = vmatpush1.msra.mxu0 0.0
    %3094 = vmatprep.subr.mxu0 0.0
    %3095 = vmatpush1.msra.mxu0 0.0
    %3096 = vmatprep.mubr.f32.mxu0 0.0
    %3097 = vmatmul.mubr.f32.gmra.mrb[0].mxu0 0.0
    %v3098 = vpop.f32.mrb[0].mxu0
    %v3099 = vadd.f32 %v2957, %v3098
    %v3100 = vpop.f32.mrb[0].mxu0
    %3101 = vdwg.mxu0
    %v3102 = vadd.f32 %v2871, %v3028
    %v3103 = vxor.u32 %v3102, 2147483648
    %v3104 = vmul.f32 %v3103, 1.442695
    %v3105 = vpow.pop %v3104
    %v3106 = vadd.f32 %v3105, 1.0
    %v3107 = vrcp.pop %v3106
    %v3108 = vmul.f32 1.0, %v3107
    %v3109 = vadd.f32 %v2873, %v3030
    %v3110 = vxor.u32 %v3109, 2147483648
    %v3111 = vmul.f32 %v3110, 1.442695
    %v3112 = vpow.pop %v3111
    %v3113 = vadd.f32 %v3112, 1.0
    %v3114 = vrcp.pop %v3113
    %v3115 = vmul.f32 1.0, %v3114
    %v3116 = vmul.f32 %v3108, %v3099
    %v3117 = vadd.f32 %v2942, %v3116
    %v3118 = vtanh.pop %v3117
    %v3119 = vsub.f32 1.0, %v3115
    %v3120 = vmul.f32 %v3119, %v3118
    %v3121 = vmul.f32 %v3115, 0.0
    %v3122 = vadd.f32 %v3120, %v3121
    %3123 = vst [vmem:[#allocation13] sm:$0x3] %v2727
    %3124 = vst [vmem:[#allocation13 + $0x2] sm:$0x3] %v3122
    // Predicated region
    $region70: #{tpu_custom_call.1} parent=1 // pred_check
      _
    $region71: #{tpu_custom_call.1} parent=1 // pred_check_branch
      %3126 = sbr.rel (0) target = $region73
    $region72: #{tpu_custom_call.1} parent=1 // pred_region
      %s3128 = ssub.s32 64, 64
      %3129 = vsyncadd [#allocation4], %s3128
      %s3131 = sshll.u32 [#allocation13], 4
      %s3132 = int_to_ptr.vmem [resolvable:$true] %s3131
      %3134 = dma.vmem_to_hbm [thread:$0]  %s3132, 64, %s11, [#allocation4]
    $region73: #{tpu_custom_call.1} parent=1 // pred_fallthru
      _
    // Predicated region
    $region74: #{tpu_custom_call.1} parent=1 // pred_check
      _
    $region75: #{tpu_custom_call.1} parent=1 // pred_check_branch
      %3136 = sbr.rel (0) target = $region77
    $region76: #{tpu_custom_call.1} parent=1 // pred_region
      %3137 = dma.done [#allocation4], 64
    $region77: #{tpu_custom_call.1} parent=1 // pred_fallthru
      _
    %3138 = vsyncpa [#allocation3], 1
    %3139 = vsyncpa [#allocation6], 1
    %3140 = vsyncpa [#allocation9], 1
    %3141 = vsyncpa [#allocation12], 1
    %3142 = vsyncpa [#allocation4], 1

</llo_original>
